<compile_context>
chip_gen: v7x
topology: tpu7x:2x2x1
jax: 0.10.0
libtpu: 0.0.40
codegen_flags: <defaults>
</compile_context>

<pallas_src>
import functools

import numpy as np
import jax
import jax.numpy as jnp
from jax.experimental import pallas as pl
from jax.experimental.pallas import tpu as pltpu

LANE = 128
NEG_INF = -1e30   # finite large-negative pad for softmax lanes (avoid inf-inf)


# ------------------------------ fused kernel ------------------------------- #

def _cifarnet_kernel(x_ref, r1_ref, cb1_ref, e1_ref, s1_ref,
                     r2_ref, cb2_ref, e2_ref, s2_ref,
                     w1h_ref, b1h_ref, w2h_ref, b2h_ref, w3h_ref, b3h_ref,
                     o_ref, p1_scr, p2_scr):
    f32 = jnp.float32

    # ---- conv1 (3->6, 5x5): 5 banded GEMMs over kernel rows kh ----
    # input image block is (1, 32, 96) with lanes = (w, c); rows (h+kh) are
    # read straight out of the VMEM block.
    c1 = jnp.dot(x_ref[0, pl.ds(0, 28), :], r1_ref[0], preferred_element_type=f32)
    for kh in range(1, 5):
        c1 = c1 + jnp.dot(x_ref[0, pl.ds(kh, 28), :], r1_ref[kh],
                          preferred_element_type=f32)
    c1 = c1 + cb1_ref[...]                                     # (28, 168) = (oh, (ow, oc))

    # ---- fused 2x2 max-pool (width via lane-selection GEMMs, height via
    # row-selection GEMMs); relu(max) == max(relu), bias shared per window ----
    aw = jnp.maximum(jnp.dot(c1, e1_ref[0], preferred_element_type=f32),
                     jnp.dot(c1, e1_ref[1], preferred_element_type=f32))   # (28, 84)
    p1 = jnp.maximum(jnp.dot(s1_ref[0], aw, preferred_element_type=f32),
                     jnp.dot(s1_ref[1], aw, preferred_element_type=f32))   # (14, 84)
    p1_scr[...] = jnp.maximum(p1, 0.0)                         # (h, (w, c)), c = 6

    # ---- conv2 (6->10, 5x5) + pool, same scheme ----
    c2 = jnp.dot(p1_scr[pl.ds(0, 10), :], r2_ref[0], preferred_element_type=f32)
    for kh in range(1, 5):
        c2 = c2 + jnp.dot(p1_scr[pl.ds(kh, 10), :], r2_ref[kh],
                          preferred_element_type=f32)
    c2 = c2 + cb2_ref[...]                                     # (10, 100)
    aw2 = jnp.maximum(jnp.dot(c2, e2_ref[0], preferred_element_type=f32),
                      jnp.dot(c2, e2_ref[1], preferred_element_type=f32))  # (10, 50)
    p2 = jnp.maximum(jnp.dot(s2_ref[0], aw2, preferred_element_type=f32),
                     jnp.dot(s2_ref[1], aw2, preferred_element_type=f32))  # (5, 50)
    p2_scr[...] = jnp.maximum(p2, 0.0)                         # (h, (w, c)), c = 10

    # ---- classifier head: fc1 contracts over (h, w, c) as 5 row-dots against
    # the (h, w, c)-permuted fc1 weight; fc2 / fc are 128-lane padded ----
    h1 = jnp.dot(p2_scr[pl.ds(0, 1), :], w1h_ref[0], preferred_element_type=f32)
    for hh in range(1, 5):
        h1 = h1 + jnp.dot(p2_scr[pl.ds(hh, 1), :], w1h_ref[hh],
                          preferred_element_type=f32)
    h1 = jnp.maximum(h1 + b1h_ref[...], 0.0)                   # (1, 128), pad lanes stay 0
    h2 = jnp.maximum(
        jnp.dot(h1, w2h_ref[...], preferred_element_type=f32) + b2h_ref[...], 0.0)
    logits = jnp.dot(h2, w3h_ref[...], preferred_element_type=f32) + b3h_ref[...]

    m = jnp.max(logits, axis=-1, keepdims=True)
    sh = logits - m
    lse = jnp.log(jnp.sum(jnp.exp(sh), axis=-1, keepdims=True))
    o_ref[0] = (sh - lse).astype(o_ref.dtype)


# --------------------------------- wrapper ---------------------------------- #

@functools.partial(jax.jit, static_argnums=(2,))
def cifarnet_forward(x, params, num_classes):
    """x: (B, 3, 32, 32) float32 NCHW -> (B, num_classes) log-probabilities."""
    B = x.shape[0]
    # (B, 3, 32, 32) -> (B, 32, 96) with lanes = (w, c); tiny one-time relayout.
    x2 = jnp.transpose(x, (0, 2, 3, 1)).reshape(B, 32, 96)

    flops_per_img = 2 * (5 * 28 * 96 * 168 + 2 * 28 * 168 * 84 + 2 * 14 * 28 * 84
                         + 5 * 10 * 84 * 100 + 2 * 10 * 100 * 50 + 2 * 5 * 10 * 50
                         + 5 * 50 * 128 + 128 * 128 + 128 * 128)
    weight_bytes = sum(int(np.prod(params[k].shape)) * 4 for k in params)
    cost = pl.CostEstimate(
        flops=int(B * flops_per_img),
        transcendentals=int(B * LANE),
        bytes_accessed=int(B * (32 * 96 + LANE) * 4 + weight_bytes))

    out = pl.pallas_call(
        _cifarnet_kernel,
        out_shape=jax.ShapeDtypeStruct((B, 1, LANE), jnp.float32),
        grid_spec=pltpu.PrefetchScalarGridSpec(
            num_scalar_prefetch=0,
            grid=(B,),
            in_specs=[
                pl.BlockSpec((1, 32, 96), lambda i: (i, 0, 0)),    # image (streamed)
                pl.BlockSpec((5, 96, 168), lambda i: (0, 0, 0)),   # conv1 band matrices
                pl.BlockSpec((1, 168), lambda i: (0, 0)),          # conv1 bias tile
                pl.BlockSpec((2, 168, 84), lambda i: (0, 0, 0)),   # conv1 w-pool select
                pl.BlockSpec((2, 14, 28), lambda i: (0, 0, 0)),    # conv1 h-pool select
                pl.BlockSpec((5, 84, 100), lambda i: (0, 0, 0)),   # conv2 band matrices
                pl.BlockSpec((1, 100), lambda i: (0, 0)),          # conv2 bias tile
                pl.BlockSpec((2, 100, 50), lambda i: (0, 0, 0)),   # conv2 w-pool select
                pl.BlockSpec((2, 5, 10), lambda i: (0, 0, 0)),     # conv2 h-pool select
                pl.BlockSpec((5, 50, LANE), lambda i: (0, 0, 0)),  # fc1 (permuted, padded)
                pl.BlockSpec((1, LANE), lambda i: (0, 0)),         # fc1 bias
                pl.BlockSpec((LANE, LANE), lambda i: (0, 0)),      # fc2
                pl.BlockSpec((1, LANE), lambda i: (0, 0)),         # fc2 bias
                pl.BlockSpec((LANE, LANE), lambda i: (0, 0)),      # fc
                pl.BlockSpec((1, LANE), lambda i: (0, 0)),         # fc bias (-1e30 pads)
            ],
            out_specs=pl.BlockSpec((1, 1, LANE), lambda i: (i, 0, 0)),
            scratch_shapes=[pltpu.VMEM((14, 84), jnp.float32),     # pooled conv1
                            pltpu.VMEM((5, 50), jnp.float32)],     # pooled conv2
        ),
        compiler_params=pltpu.CompilerParams(dimension_semantics=("parallel",)),
        cost_estimate=cost,
    )(x2, params["r1"], params["cb1"], params["e1"], params["s1"],
      params["r2"], params["cb2"], params["e2"], params["s2"],
      params["w1h"], params["b1h"], params["w2h"], params["b2h"],
      params["w3h"], params["b3h"])
    return out.reshape(B, LANE)[:, :num_classes]


# ------------------------- constant-matrix builders ------------------------- #

def _pad_to(a, shape, value=0.0):
    pads = [(0, t - s) for s, t in zip(a.shape, shape)]
    return np.pad(a, pads, constant_values=value)


def _conv_band(w, in_w, out_w):
    """w: (OC, IC, 5, 5) -> (5, in_w*IC, out_w*OC) banded-GEMM matrices.

    R[kh, w*IC + c, ow*OC + oc] = w[oc, c, kh, w - ow] for 0 <= w-ow < 5.
    """
    oc_n, ic_n, kh_n, kw_n = w.shape
    r = np.zeros((kh_n, in_w * ic_n, out_w * oc_n), np.float32)
    for kh in range(kh_n):
        for ow in range(out_w):
            for kw in range(kw_n):
                wc = ow + kw
                r[kh, wc * ic_n:(wc + 1) * ic_n,
                  ow * oc_n:(ow + 1) * oc_n] = w[:, :, kh, kw].T
    return r


def _wpool_sel(out_w, ch):
    """Lane-selection matrices for 2x2 pool along width: (2, 2*out_w*ch, out_w*ch)."""
    e = np.zeros((2, 2 * out_w * ch, out_w * ch), np.float32)
    for d in range(2):
        for pw in range(out_w):
            for c in range(ch):
                e[d, (2 * pw + d) * ch + c, pw * ch + c] = 1.0
    return e


def _hpool_sel(out_h):
    """Row-selection matrices for 2x2 pool along height: (2, out_h, 2*out_h)."""
    s = np.zeros((2, out_h, 2 * out_h), np.float32)
    for d in range(2):
        for ph in range(out_h):
            s[d, ph, 2 * ph + d] = 1.0
    return s


# ------------------------------- parameters --------------------------------- #

def _init_params(key, num_classes=10):
    conv2_oc = 10  # named `batch_size` in the PyTorch source (conv2 out-channels)
    ks = jax.random.split(key, 10)

    def uniform(k, shape, fan_in):
        bound = 1.0 / np.sqrt(fan_in)
        return jax.random.uniform(k, shape, jnp.float32, -bound, bound)

    # PyTorch-layout parameters (used by the pure-JAX reference).
    torch_p = dict(
        w1=uniform(ks[0], (6, 3, 5, 5), 3 * 25),
        b1=uniform(ks[1], (6,), 3 * 25),
        w2=uniform(ks[2], (conv2_oc, 6, 5, 5), 6 * 25),
        b2=uniform(ks[3], (conv2_oc,), 6 * 25),
        fc1w=uniform(ks[4], (120, conv2_oc * 25), conv2_oc * 25),
        fc1b=uniform(ks[5], (120,), conv2_oc * 25),
        fc2w=uniform(ks[6], (84, 120), 120),
        fc2b=uniform(ks[7], (84,), 120),
        fcw=uniform(ks[8], (num_classes, 84), 84),
        fcb=uniform(ks[9], (num_classes,), 84),
    )
    tp = {k: np.asarray(v) for k, v in torch_p.items()}

    # fc1 weight: PyTorch flatten order is (oc, h, w); the kernel's activation
    # layout is (h, (w, oc)), so permute accordingly and split the h axis.
    fc1_hwo = np.transpose(tp["fc1w"].reshape(120, conv2_oc, 5, 5),
                           (2, 3, 1, 0)).reshape(5, 5 * conv2_oc, 120)

    kernel_p = {
        "r1": _conv_band(tp["w1"], 32, 28),                    # (5, 96, 168)
        "cb1": np.tile(tp["b1"], 28).reshape(1, 168),
        "e1": _wpool_sel(14, 6),                               # (2, 168, 84)
        "s1": _hpool_sel(14),                                  # (2, 14, 28)
        "r2": _conv_band(tp["w2"], 14, 10),                    # (5, 84, 100)
        "cb2": np.tile(tp["b2"], 10).reshape(1, 100),
        "e2": _wpool_sel(5, conv2_oc),                         # (2, 100, 50)
        "s2": _hpool_sel(5),                                   # (2, 5, 10)
        "w1h": _pad_to(fc1_hwo, (5, 50, LANE)),
        "b1h": _pad_to(tp["fc1b"].reshape(1, -1), (1, LANE)),
        "w2h": _pad_to(tp["fc2w"].T, (LANE, LANE)),
        "b2h": _pad_to(tp["fc2b"].reshape(1, -1), (1, LANE)),
        "w3h": _pad_to(tp["fcw"].T, (LANE, LANE)),
        # padded class lanes get -1e30 bias so they vanish from max / logsumexp
        "b3h": _pad_to(tp["fcb"].reshape(1, -1), (1, LANE), value=NEG_INF),
    }
    kernel_p = {k: jnp.asarray(v) for k, v in kernel_p.items()}
    return kernel_p, torch_p


# --------------------------- pure-JAX reference ------------------------------ #

def _reference_forward(x, tp):
    dn = ("NCHW", "OIHW", "NCHW")
    y = jax.lax.conv_general_dilated(x, tp["w1"], (1, 1), "VALID", dimension_numbers=dn)
    y = jnp.maximum(y + tp["b1"][None, :, None, None], 0.0)
    y = jax.lax.reduce_window(y, -jnp.inf, jax.lax.max, (1, 1, 2, 2), (1, 1, 2, 2), "VALID")
    y = jax.lax.conv_general_dilated(y, tp["w2"], (1, 1), "VALID", dimension_numbers=dn)
    y = jnp.maximum(y + tp["b2"][None, :, None, None], 0.0)
    y = jax.lax.reduce_window(y, -jnp.inf, jax.lax.max, (1, 1, 2, 2), (1, 1, 2, 2), "VALID")
    f = y.reshape(y.shape[0], -1)
    h = jnp.maximum(f @ tp["fc1w"].T + tp["fc1b"], 0.0)
    h = jnp.maximum(h @ tp["fc2w"].T + tp["fc2b"], 0.0)
    logits = h @ tp["fcw"].T + tp["fcb"]
    return jax.nn.log_softmax(logits, axis=1)


# ----------------------------------- main ------------------------------------ #

if __name__ == "__main__":
    num_classes = 10
    batch = 2

    key = jax.random.PRNGKey(0)
    kx, kp = jax.random.split(key)
    params, torch_params = _init_params(kp, num_classes)
    x = jax.random.normal(kx, (batch, 3, 32, 32), jnp.float32)

    out = jax.block_until_ready(cifarnet_forward(x, params, num_classes))

    assert out.shape == (batch, num_classes)
    assert bool(jnp.all(jnp.isfinite(out)))

    # log_softmax rows should exponentiate-sum to ~1
    row_sums = jnp.sum(jnp.exp(out), axis=1)
    assert bool(jnp.allclose(row_sums, 1.0, atol=1e-4)), row_sums

    # match a pure-JAX/XLA reference of the same PyTorch forward
    ref = _reference_forward(x, torch_params)
    assert bool(jnp.allclose(out, ref, atol=5e-2, rtol=5e-2)), (out, ref)

    print("KERNEL_OK")
</pallas_src>

<mosaic_0001>
module attributes {stable_mosaic.version = 11 : i64} {
  func.func @_cifarnet_kernel(%arg0: i32, %arg1: memref<1x32x96xf32, #tpu.memory_space<vmem>>, %arg2: memref<5x96x168xf32, #tpu.memory_space<vmem>>, %arg3: memref<1x168xf32, #tpu.memory_space<vmem>>, %arg4: memref<2x168x84xf32, #tpu.memory_space<vmem>>, %arg5: memref<2x14x28xf32, #tpu.memory_space<vmem>>, %arg6: memref<5x84x100xf32, #tpu.memory_space<vmem>>, %arg7: memref<1x100xf32, #tpu.memory_space<vmem>>, %arg8: memref<2x100x50xf32, #tpu.memory_space<vmem>>, %arg9: memref<2x5x10xf32, #tpu.memory_space<vmem>>, %arg10: memref<5x50x128xf32, #tpu.memory_space<vmem>>, %arg11: memref<1x128xf32, #tpu.memory_space<vmem>>, %arg12: memref<128x128xf32, #tpu.memory_space<vmem>>, %arg13: memref<1x128xf32, #tpu.memory_space<vmem>>, %arg14: memref<128x128xf32, #tpu.memory_space<vmem>>, %arg15: memref<1x128xf32, #tpu.memory_space<vmem>>, %arg16: memref<1x1x128xf32, #tpu.memory_space<vmem>>, %arg17: memref<14x84xf32, #tpu.memory_space<vmem>>, %arg18: memref<5x50xf32, #tpu.memory_space<vmem>>) attributes {dimension_semantics = [#tpu.dimension_semantics<parallel>], iteration_bounds = array<i64: 2>, scalar_prefetch = 0 : i64, scratch_operands = 2 : i64, tpu.core_type = #tpu.core_type<tc>, window_params = [{transform_indices = @transform_0, window_bounds = array<i64: 1, 32, 96>}, {pipeline_mode = #tpu.pipeline_mode<synchronous>, transform_indices = @transform_1, window_bounds = array<i64: 5, 96, 168>}, {pipeline_mode = #tpu.pipeline_mode<synchronous>, transform_indices = @transform_2, window_bounds = array<i64: 1, 168>}, {pipeline_mode = #tpu.pipeline_mode<synchronous>, transform_indices = @transform_3, window_bounds = array<i64: 2, 168, 84>}, {pipeline_mode = #tpu.pipeline_mode<synchronous>, transform_indices = @transform_4, window_bounds = array<i64: 2, 14, 28>}, {pipeline_mode = #tpu.pipeline_mode<synchronous>, transform_indices = @transform_5, window_bounds = array<i64: 5, 84, 100>}, {pipeline_mode = #tpu.pipeline_mode<synchronous>, transform_indices = @transform_6, window_bounds = array<i64: 1, 100>}, {pipeline_mode = #tpu.pipeline_mode<synchronous>, transform_indices = @transform_7, window_bounds = array<i64: 2, 100, 50>}, {pipeline_mode = #tpu.pipeline_mode<synchronous>, transform_indices = @transform_8, window_bounds = array<i64: 2, 5, 10>}, {pipeline_mode = #tpu.pipeline_mode<synchronous>, transform_indices = @transform_9, window_bounds = array<i64: 5, 50, 128>}, {pipeline_mode = #tpu.pipeline_mode<synchronous>, transform_indices = @transform_10, window_bounds = array<i64: 1, 128>}, {pipeline_mode = #tpu.pipeline_mode<synchronous>, transform_indices = @transform_11, window_bounds = array<i64: 128, 128>}, {pipeline_mode = #tpu.pipeline_mode<synchronous>, transform_indices = @transform_12, window_bounds = array<i64: 1, 128>}, {pipeline_mode = #tpu.pipeline_mode<synchronous>, transform_indices = @transform_13, window_bounds = array<i64: 128, 128>}, {pipeline_mode = #tpu.pipeline_mode<synchronous>, transform_indices = @transform_14, window_bounds = array<i64: 1, 128>}, {transform_indices = @transform_15, window_bounds = array<i64: 1, 1, 128>}]} {
    %c0 = arith.constant 0 : index
    %c0_0 = arith.constant 0 : index
    %c0_1 = arith.constant 0 : index
    %0 = vector.load %arg1[%c0, %c0_0, %c0_1] : memref<1x32x96xf32, #tpu.memory_space<vmem>>, vector<1x28x96xf32>
    %1 = vector.shape_cast %0 : vector<1x28x96xf32> to vector<28x96xf32>
    %c0_2 = arith.constant 0 : index
    %c0_3 = arith.constant 0 : index
    %c0_4 = arith.constant 0 : index
    %2 = vector.load %arg2[%c0_2, %c0_3, %c0_4] : memref<5x96x168xf32, #tpu.memory_space<vmem>>, vector<1x96x168xf32>
    %3 = vector.shape_cast %2 : vector<1x96x168xf32> to vector<96x168xf32>
    %cst = arith.constant dense<0.000000e+00> : vector<28x168xf32>
    %4 = tpu.matmul %1, %3, %cst {dimension_numbers = #tpu.dot_dimension_numbers<[1], [0], [0], [1], [0, 0, 1, 1], [], []>} : vector<28x96xf32>, vector<96x168xf32>, vector<28x168xf32> -> vector<28x168xf32>
    %c0_5 = arith.constant 0 : index
    %c1 = arith.constant 1 : index
    %c0_6 = arith.constant 0 : index
    %5 = vector.load %arg1[%c0_5, %c1, %c0_6] : memref<1x32x96xf32, #tpu.memory_space<vmem>>, vector<1x28x96xf32>
    %6 = vector.shape_cast %5 : vector<1x28x96xf32> to vector<28x96xf32>
    %c1_7 = arith.constant 1 : index
    %c0_8 = arith.constant 0 : index
    %c0_9 = arith.constant 0 : index
    %7 = vector.load %arg2[%c1_7, %c0_8, %c0_9] : memref<5x96x168xf32, #tpu.memory_space<vmem>>, vector<1x96x168xf32>
    %8 = vector.shape_cast %7 : vector<1x96x168xf32> to vector<96x168xf32>
    %cst_10 = arith.constant dense<0.000000e+00> : vector<28x168xf32>
    %9 = tpu.matmul %6, %8, %cst_10 {dimension_numbers = #tpu.dot_dimension_numbers<[1], [0], [0], [1], [0, 0, 1, 1], [], []>} : vector<28x96xf32>, vector<96x168xf32>, vector<28x168xf32> -> vector<28x168xf32>
    %10 = arith.addf %4, %9 : vector<28x168xf32>
    %c0_11 = arith.constant 0 : index
    %c2 = arith.constant 2 : index
    %c0_12 = arith.constant 0 : index
    %11 = vector.load %arg1[%c0_11, %c2, %c0_12] : memref<1x32x96xf32, #tpu.memory_space<vmem>>, vector<1x28x96xf32>
    %12 = vector.shape_cast %11 : vector<1x28x96xf32> to vector<28x96xf32>
    %c2_13 = arith.constant 2 : index
    %c0_14 = arith.constant 0 : index
    %c0_15 = arith.constant 0 : index
    %13 = vector.load %arg2[%c2_13, %c0_14, %c0_15] : memref<5x96x168xf32, #tpu.memory_space<vmem>>, vector<1x96x168xf32>
    %14 = vector.shape_cast %13 : vector<1x96x168xf32> to vector<96x168xf32>
    %cst_16 = arith.constant dense<0.000000e+00> : vector<28x168xf32>
    %15 = tpu.matmul %12, %14, %cst_16 {dimension_numbers = #tpu.dot_dimension_numbers<[1], [0], [0], [1], [0, 0, 1, 1], [], []>} : vector<28x96xf32>, vector<96x168xf32>, vector<28x168xf32> -> vector<28x168xf32>
    %16 = arith.addf %10, %15 : vector<28x168xf32>
    %c0_17 = arith.constant 0 : index
    %c3 = arith.constant 3 : index
    %c0_18 = arith.constant 0 : index
    %17 = vector.load %arg1[%c0_17, %c3, %c0_18] : memref<1x32x96xf32, #tpu.memory_space<vmem>>, vector<1x28x96xf32>
    %18 = vector.shape_cast %17 : vector<1x28x96xf32> to vector<28x96xf32>
    %c3_19 = arith.constant 3 : index
    %c0_20 = arith.constant 0 : index
    %c0_21 = arith.constant 0 : index
    %19 = vector.load %arg2[%c3_19, %c0_20, %c0_21] : memref<5x96x168xf32, #tpu.memory_space<vmem>>, vector<1x96x168xf32>
    %20 = vector.shape_cast %19 : vector<1x96x168xf32> to vector<96x168xf32>
    %cst_22 = arith.constant dense<0.000000e+00> : vector<28x168xf32>
    %21 = tpu.matmul %18, %20, %cst_22 {dimension_numbers = #tpu.dot_dimension_numbers<[1], [0], [0], [1], [0, 0, 1, 1], [], []>} : vector<28x96xf32>, vector<96x168xf32>, vector<28x168xf32> -> vector<28x168xf32>
    %22 = arith.addf %16, %21 : vector<28x168xf32>
    %c0_23 = arith.constant 0 : index
    %c4 = arith.constant 4 : index
    %c0_24 = arith.constant 0 : index
    %23 = vector.load %arg1[%c0_23, %c4, %c0_24] : memref<1x32x96xf32, #tpu.memory_space<vmem>>, vector<1x28x96xf32>
    %24 = vector.shape_cast %23 : vector<1x28x96xf32> to vector<28x96xf32>
    %c4_25 = arith.constant 4 : index
    %c0_26 = arith.constant 0 : index
    %c0_27 = arith.constant 0 : index
    %25 = vector.load %arg2[%c4_25, %c0_26, %c0_27] : memref<5x96x168xf32, #tpu.memory_space<vmem>>, vector<1x96x168xf32>
    %26 = vector.shape_cast %25 : vector<1x96x168xf32> to vector<96x168xf32>
    %cst_28 = arith.constant dense<0.000000e+00> : vector<28x168xf32>
    %27 = tpu.matmul %24, %26, %cst_28 {dimension_numbers = #tpu.dot_dimension_numbers<[1], [0], [0], [1], [0, 0, 1, 1], [], []>} : vector<28x96xf32>, vector<96x168xf32>, vector<28x168xf32> -> vector<28x168xf32>
    %28 = arith.addf %22, %27 : vector<28x168xf32>
    %c0_29 = arith.constant 0 : index
    %c0_30 = arith.constant 0 : index
    %29 = vector.load %arg3[%c0_29, %c0_30] : memref<1x168xf32, #tpu.memory_space<vmem>>, vector<1x168xf32>
    %30 = vector.broadcast %29 : vector<1x168xf32> to vector<28x168xf32>
    %31 = arith.addf %28, %30 : vector<28x168xf32>
    %c0_31 = arith.constant 0 : index
    %c0_32 = arith.constant 0 : index
    %c0_33 = arith.constant 0 : index
    %32 = vector.load %arg4[%c0_31, %c0_32, %c0_33] : memref<2x168x84xf32, #tpu.memory_space<vmem>>, vector<1x168x84xf32>
    %33 = vector.shape_cast %32 : vector<1x168x84xf32> to vector<168x84xf32>
    %cst_34 = arith.constant dense<0.000000e+00> : vector<28x84xf32>
    %34 = tpu.matmul %31, %33, %cst_34 {dimension_numbers = #tpu.dot_dimension_numbers<[1], [0], [0], [1], [0, 0, 1, 1], [], []>} : vector<28x168xf32>, vector<168x84xf32>, vector<28x84xf32> -> vector<28x84xf32>
    %c1_35 = arith.constant 1 : index
    %c0_36 = arith.constant 0 : index
    %c0_37 = arith.constant 0 : index
    %35 = vector.load %arg4[%c1_35, %c0_36, %c0_37] : memref<2x168x84xf32, #tpu.memory_space<vmem>>, vector<1x168x84xf32>
    %36 = vector.shape_cast %35 : vector<1x168x84xf32> to vector<168x84xf32>
    %cst_38 = arith.constant dense<0.000000e+00> : vector<28x84xf32>
    %37 = tpu.matmul %31, %36, %cst_38 {dimension_numbers = #tpu.dot_dimension_numbers<[1], [0], [0], [1], [0, 0, 1, 1], [], []>} : vector<28x168xf32>, vector<168x84xf32>, vector<28x84xf32> -> vector<28x84xf32>
    %38 = arith.maximumf %34, %37 : vector<28x84xf32>
    %c0_39 = arith.constant 0 : index
    %c0_40 = arith.constant 0 : index
    %c0_41 = arith.constant 0 : index
    %39 = vector.load %arg5[%c0_39, %c0_40, %c0_41] : memref<2x14x28xf32, #tpu.memory_space<vmem>>, vector<1x14x28xf32>
    %40 = vector.shape_cast %39 : vector<1x14x28xf32> to vector<14x28xf32>
    %cst_42 = arith.constant dense<0.000000e+00> : vector<14x84xf32>
    %41 = tpu.matmul %40, %38, %cst_42 {dimension_numbers = #tpu.dot_dimension_numbers<[1], [0], [0], [1], [0, 0, 1, 1], [], []>} : vector<14x28xf32>, vector<28x84xf32>, vector<14x84xf32> -> vector<14x84xf32>
    %c1_43 = arith.constant 1 : index
    %c0_44 = arith.constant 0 : index
    %c0_45 = arith.constant 0 : index
    %42 = vector.load %arg5[%c1_43, %c0_44, %c0_45] : memref<2x14x28xf32, #tpu.memory_space<vmem>>, vector<1x14x28xf32>
    %43 = vector.shape_cast %42 : vector<1x14x28xf32> to vector<14x28xf32>
    %cst_46 = arith.constant dense<0.000000e+00> : vector<14x84xf32>
    %44 = tpu.matmul %43, %38, %cst_46 {dimension_numbers = #tpu.dot_dimension_numbers<[1], [0], [0], [1], [0, 0, 1, 1], [], []>} : vector<14x28xf32>, vector<28x84xf32>, vector<14x84xf32> -> vector<14x84xf32>
    %45 = arith.maximumf %41, %44 : vector<14x84xf32>
    %cst_47 = arith.constant 0.000000e+00 : f32
    %46 = vector.broadcast %cst_47 : f32 to vector<14x84xf32>
    %47 = arith.maximumf %45, %46 : vector<14x84xf32>
    %c0_48 = arith.constant 0 : index
    %c0_49 = arith.constant 0 : index
    %48 = vector.load %arg17[%c0_48, %c0_49] : memref<14x84xf32, #tpu.memory_space<vmem>>, vector<14x84xf32>
    tpu.vector_store %arg17[%c0_48, %c0_49], %47 {strides = array<i32>} : memref<14x84xf32, #tpu.memory_space<vmem>>, vector<14x84xf32>,
    %c0_50 = arith.constant 0 : index
    %c0_51 = arith.constant 0 : index
    %49 = vector.load %arg17[%c0_50, %c0_51] : memref<14x84xf32, #tpu.memory_space<vmem>>, vector<10x84xf32>
    %c0_52 = arith.constant 0 : index
    %c0_53 = arith.constant 0 : index
    %c0_54 = arith.constant 0 : index
    %50 = vector.load %arg6[%c0_52, %c0_53, %c0_54] : memref<5x84x100xf32, #tpu.memory_space<vmem>>, vector<1x84x100xf32>
    %51 = vector.shape_cast %50 : vector<1x84x100xf32> to vector<84x100xf32>
    %cst_55 = arith.constant dense<0.000000e+00> : vector<10x100xf32>
    %52 = tpu.matmul %49, %51, %cst_55 {dimension_numbers = #tpu.dot_dimension_numbers<[1], [0], [0], [1], [0, 0, 1, 1], [], []>} : vector<10x84xf32>, vector<84x100xf32>, vector<10x100xf32> -> vector<10x100xf32>
    %c1_56 = arith.constant 1 : index
    %c0_57 = arith.constant 0 : index
    %53 = vector.load %arg17[%c1_56, %c0_57] : memref<14x84xf32, #tpu.memory_space<vmem>>, vector<10x84xf32>
    %c1_58 = arith.constant 1 : index
    %c0_59 = arith.constant 0 : index
    %c0_60 = arith.constant 0 : index
    %54 = vector.load %arg6[%c1_58, %c0_59, %c0_60] : memref<5x84x100xf32, #tpu.memory_space<vmem>>, vector<1x84x100xf32>
    %55 = vector.shape_cast %54 : vector<1x84x100xf32> to vector<84x100xf32>
    %cst_61 = arith.constant dense<0.000000e+00> : vector<10x100xf32>
    %56 = tpu.matmul %53, %55, %cst_61 {dimension_numbers = #tpu.dot_dimension_numbers<[1], [0], [0], [1], [0, 0, 1, 1], [], []>} : vector<10x84xf32>, vector<84x100xf32>, vector<10x100xf32> -> vector<10x100xf32>
    %57 = arith.addf %52, %56 : vector<10x100xf32>
    %c2_62 = arith.constant 2 : index
    %c0_63 = arith.constant 0 : index
    %58 = vector.load %arg17[%c2_62, %c0_63] : memref<14x84xf32, #tpu.memory_space<vmem>>, vector<10x84xf32>
    %c2_64 = arith.constant 2 : index
    %c0_65 = arith.constant 0 : index
    %c0_66 = arith.constant 0 : index
    %59 = vector.load %arg6[%c2_64, %c0_65, %c0_66] : memref<5x84x100xf32, #tpu.memory_space<vmem>>, vector<1x84x100xf32>
    %60 = vector.shape_cast %59 : vector<1x84x100xf32> to vector<84x100xf32>
    %cst_67 = arith.constant dense<0.000000e+00> : vector<10x100xf32>
    %61 = tpu.matmul %58, %60, %cst_67 {dimension_numbers = #tpu.dot_dimension_numbers<[1], [0], [0], [1], [0, 0, 1, 1], [], []>} : vector<10x84xf32>, vector<84x100xf32>, vector<10x100xf32> -> vector<10x100xf32>
    %62 = arith.addf %57, %61 : vector<10x100xf32>
    %c3_68 = arith.constant 3 : index
    %c0_69 = arith.constant 0 : index
    %63 = vector.load %arg17[%c3_68, %c0_69] : memref<14x84xf32, #tpu.memory_space<vmem>>, vector<10x84xf32>
    %c3_70 = arith.constant 3 : index
    %c0_71 = arith.constant 0 : index
    %c0_72 = arith.constant 0 : index
    %64 = vector.load %arg6[%c3_70, %c0_71, %c0_72] : memref<5x84x100xf32, #tpu.memory_space<vmem>>, vector<1x84x100xf32>
    %65 = vector.shape_cast %64 : vector<1x84x100xf32> to vector<84x100xf32>
    %cst_73 = arith.constant dense<0.000000e+00> : vector<10x100xf32>
    %66 = tpu.matmul %63, %65, %cst_73 {dimension_numbers = #tpu.dot_dimension_numbers<[1], [0], [0], [1], [0, 0, 1, 1], [], []>} : vector<10x84xf32>, vector<84x100xf32>, vector<10x100xf32> -> vector<10x100xf32>
    %67 = arith.addf %62, %66 : vector<10x100xf32>
    %c4_74 = arith.constant 4 : index
    %c0_75 = arith.constant 0 : index
    %68 = vector.load %arg17[%c4_74, %c0_75] : memref<14x84xf32, #tpu.memory_space<vmem>>, vector<10x84xf32>
    %c4_76 = arith.constant 4 : index
    %c0_77 = arith.constant 0 : index
    %c0_78 = arith.constant 0 : index
    %69 = vector.load %arg6[%c4_76, %c0_77, %c0_78] : memref<5x84x100xf32, #tpu.memory_space<vmem>>, vector<1x84x100xf32>
    %70 = vector.shape_cast %69 : vector<1x84x100xf32> to vector<84x100xf32>
    %cst_79 = arith.constant dense<0.000000e+00> : vector<10x100xf32>
    %71 = tpu.matmul %68, %70, %cst_79 {dimension_numbers = #tpu.dot_dimension_numbers<[1], [0], [0], [1], [0, 0, 1, 1], [], []>} : vector<10x84xf32>, vector<84x100xf32>, vector<10x100xf32> -> vector<10x100xf32>
    %72 = arith.addf %67, %71 : vector<10x100xf32>
    %c0_80 = arith.constant 0 : index
    %c0_81 = arith.constant 0 : index
    %73 = vector.load %arg7[%c0_80, %c0_81] : memref<1x100xf32, #tpu.memory_space<vmem>>, vector<1x100xf32>
    %74 = vector.broadcast %73 : vector<1x100xf32> to vector<10x100xf32>
    %75 = arith.addf %72, %74 : vector<10x100xf32>
    %c0_82 = arith.constant 0 : index
    %c0_83 = arith.constant 0 : index
    %c0_84 = arith.constant 0 : index
    %76 = vector.load %arg8[%c0_82, %c0_83, %c0_84] : memref<2x100x50xf32, #tpu.memory_space<vmem>>, vector<1x100x50xf32>
    %77 = vector.shape_cast %76 : vector<1x100x50xf32> to vector<100x50xf32>
    %cst_85 = arith.constant dense<0.000000e+00> : vector<10x50xf32>
    %78 = tpu.matmul %75, %77, %cst_85 {dimension_numbers = #tpu.dot_dimension_numbers<[1], [0], [0], [1], [0, 0, 1, 1], [], []>} : vector<10x100xf32>, vector<100x50xf32>, vector<10x50xf32> -> vector<10x50xf32>
    %c1_86 = arith.constant 1 : index
    %c0_87 = arith.constant 0 : index
    %c0_88 = arith.constant 0 : index
    %79 = vector.load %arg8[%c1_86, %c0_87, %c0_88] : memref<2x100x50xf32, #tpu.memory_space<vmem>>, vector<1x100x50xf32>
    %80 = vector.shape_cast %79 : vector<1x100x50xf32> to vector<100x50xf32>
    %cst_89 = arith.constant dense<0.000000e+00> : vector<10x50xf32>
    %81 = tpu.matmul %75, %80, %cst_89 {dimension_numbers = #tpu.dot_dimension_numbers<[1], [0], [0], [1], [0, 0, 1, 1], [], []>} : vector<10x100xf32>, vector<100x50xf32>, vector<10x50xf32> -> vector<10x50xf32>
    %82 = arith.maximumf %78, %81 : vector<10x50xf32>
    %c0_90 = arith.constant 0 : index
    %c0_91 = arith.constant 0 : index
    %c0_92 = arith.constant 0 : index
    %83 = vector.load %arg9[%c0_90, %c0_91, %c0_92] : memref<2x5x10xf32, #tpu.memory_space<vmem>>, vector<1x5x10xf32>
    %84 = vector.shape_cast %83 : vector<1x5x10xf32> to vector<5x10xf32>
    %cst_93 = arith.constant dense<0.000000e+00> : vector<5x50xf32>
    %85 = tpu.matmul %84, %82, %cst_93 {dimension_numbers = #tpu.dot_dimension_numbers<[1], [0], [0], [1], [0, 0, 1, 1], [], []>} : vector<5x10xf32>, vector<10x50xf32>, vector<5x50xf32> -> vector<5x50xf32>
    %c1_94 = arith.constant 1 : index
    %c0_95 = arith.constant 0 : index
    %c0_96 = arith.constant 0 : index
    %86 = vector.load %arg9[%c1_94, %c0_95, %c0_96] : memref<2x5x10xf32, #tpu.memory_space<vmem>>, vector<1x5x10xf32>
    %87 = vector.shape_cast %86 : vector<1x5x10xf32> to vector<5x10xf32>
    %cst_97 = arith.constant dense<0.000000e+00> : vector<5x50xf32>
    %88 = tpu.matmul %87, %82, %cst_97 {dimension_numbers = #tpu.dot_dimension_numbers<[1], [0], [0], [1], [0, 0, 1, 1], [], []>} : vector<5x10xf32>, vector<10x50xf32>, vector<5x50xf32> -> vector<5x50xf32>
    %89 = arith.maximumf %85, %88 : vector<5x50xf32>
    %cst_98 = arith.constant 0.000000e+00 : f32
    %90 = vector.broadcast %cst_98 : f32 to vector<5x50xf32>
    %91 = arith.maximumf %89, %90 : vector<5x50xf32>
    %c0_99 = arith.constant 0 : index
    %c0_100 = arith.constant 0 : index
    %92 = vector.load %arg18[%c0_99, %c0_100] : memref<5x50xf32, #tpu.memory_space<vmem>>, vector<5x50xf32>
    tpu.vector_store %arg18[%c0_99, %c0_100], %91 {strides = array<i32>} : memref<5x50xf32, #tpu.memory_space<vmem>>, vector<5x50xf32>,
    %c0_101 = arith.constant 0 : index
    %c0_102 = arith.constant 0 : index
    %93 = vector.load %arg18[%c0_101, %c0_102] : memref<5x50xf32, #tpu.memory_space<vmem>>, vector<1x50xf32>
    %c0_103 = arith.constant 0 : index
    %c0_104 = arith.constant 0 : index
    %c0_105 = arith.constant 0 : index
    %94 = vector.load %arg10[%c0_103, %c0_104, %c0_105] : memref<5x50x128xf32, #tpu.memory_space<vmem>>, vector<1x50x128xf32>
    %95 = vector.shape_cast %94 : vector<1x50x128xf32> to vector<50x128xf32>
    %cst_106 = arith.constant dense<0.000000e+00> : vector<1x128xf32>
    %96 = tpu.matmul %93, %95, %cst_106 {dimension_numbers = #tpu.dot_dimension_numbers<[1], [0], [0], [1], [0, 0, 1, 1], [], []>} : vector<1x50xf32>, vector<50x128xf32>, vector<1x128xf32> -> vector<1x128xf32>
    %c1_107 = arith.constant 1 : index
    %c0_108 = arith.constant 0 : index
    %97 = vector.load %arg18[%c1_107, %c0_108] : memref<5x50xf32, #tpu.memory_space<vmem>>, vector<1x50xf32>
    %c1_109 = arith.constant 1 : index
    %c0_110 = arith.constant 0 : index
    %c0_111 = arith.constant 0 : index
    %98 = vector.load %arg10[%c1_109, %c0_110, %c0_111] : memref<5x50x128xf32, #tpu.memory_space<vmem>>, vector<1x50x128xf32>
    %99 = vector.shape_cast %98 : vector<1x50x128xf32> to vector<50x128xf32>
    %cst_112 = arith.constant dense<0.000000e+00> : vector<1x128xf32>
    %100 = tpu.matmul %97, %99, %cst_112 {dimension_numbers = #tpu.dot_dimension_numbers<[1], [0], [0], [1], [0, 0, 1, 1], [], []>} : vector<1x50xf32>, vector<50x128xf32>, vector<1x128xf32> -> vector<1x128xf32>
    %101 = arith.addf %96, %100 : vector<1x128xf32>
    %c2_113 = arith.constant 2 : index
    %c0_114 = arith.constant 0 : index
    %102 = vector.load %arg18[%c2_113, %c0_114] : memref<5x50xf32, #tpu.memory_space<vmem>>, vector<1x50xf32>
    %c2_115 = arith.constant 2 : index
    %c0_116 = arith.constant 0 : index
    %c0_117 = arith.constant 0 : index
    %103 = vector.load %arg10[%c2_115, %c0_116, %c0_117] : memref<5x50x128xf32, #tpu.memory_space<vmem>>, vector<1x50x128xf32>
    %104 = vector.shape_cast %103 : vector<1x50x128xf32> to vector<50x128xf32>
    %cst_118 = arith.constant dense<0.000000e+00> : vector<1x128xf32>
    %105 = tpu.matmul %102, %104, %cst_118 {dimension_numbers = #tpu.dot_dimension_numbers<[1], [0], [0], [1], [0, 0, 1, 1], [], []>} : vector<1x50xf32>, vector<50x128xf32>, vector<1x128xf32> -> vector<1x128xf32>
    %106 = arith.addf %101, %105 : vector<1x128xf32>
    %c3_119 = arith.constant 3 : index
    %c0_120 = arith.constant 0 : index
    %107 = vector.load %arg18[%c3_119, %c0_120] : memref<5x50xf32, #tpu.memory_space<vmem>>, vector<1x50xf32>
    %c3_121 = arith.constant 3 : index
    %c0_122 = arith.constant 0 : index
    %c0_123 = arith.constant 0 : index
    %108 = vector.load %arg10[%c3_121, %c0_122, %c0_123] : memref<5x50x128xf32, #tpu.memory_space<vmem>>, vector<1x50x128xf32>
    %109 = vector.shape_cast %108 : vector<1x50x128xf32> to vector<50x128xf32>
    %cst_124 = arith.constant dense<0.000000e+00> : vector<1x128xf32>
    %110 = tpu.matmul %107, %109, %cst_124 {dimension_numbers = #tpu.dot_dimension_numbers<[1], [0], [0], [1], [0, 0, 1, 1], [], []>} : vector<1x50xf32>, vector<50x128xf32>, vector<1x128xf32> -> vector<1x128xf32>
    %111 = arith.addf %106, %110 : vector<1x128xf32>
    %c4_125 = arith.constant 4 : index
    %c0_126 = arith.constant 0 : index
    %112 = vector.load %arg18[%c4_125, %c0_126] : memref<5x50xf32, #tpu.memory_space<vmem>>, vector<1x50xf32>
    %c4_127 = arith.constant 4 : index
    %c0_128 = arith.constant 0 : index
    %c0_129 = arith.constant 0 : index
    %113 = vector.load %arg10[%c4_127, %c0_128, %c0_129] : memref<5x50x128xf32, #tpu.memory_space<vmem>>, vector<1x50x128xf32>
    %114 = vector.shape_cast %113 : vector<1x50x128xf32> to vector<50x128xf32>
    %cst_130 = arith.constant dense<0.000000e+00> : vector<1x128xf32>
    %115 = tpu.matmul %112, %114, %cst_130 {dimension_numbers = #tpu.dot_dimension_numbers<[1], [0], [0], [1], [0, 0, 1, 1], [], []>} : vector<1x50xf32>, vector<50x128xf32>, vector<1x128xf32> -> vector<1x128xf32>
    %116 = arith.addf %111, %115 : vector<1x128xf32>
    %c0_131 = arith.constant 0 : index
    %c0_132 = arith.constant 0 : index
    %117 = vector.load %arg11[%c0_131, %c0_132] : memref<1x128xf32, #tpu.memory_space<vmem>>, vector<1x128xf32>
    %118 = arith.addf %116, %117 : vector<1x128xf32>
    %cst_133 = arith.constant 0.000000e+00 : f32
    %119 = vector.broadcast %cst_133 : f32 to vector<1x128xf32>
    %120 = arith.maximumf %118, %119 : vector<1x128xf32>
    %c0_134 = arith.constant 0 : index
    %c0_135 = arith.constant 0 : index
    %121 = vector.load %arg12[%c0_134, %c0_135] : memref<128x128xf32, #tpu.memory_space<vmem>>, vector<128x128xf32>
    %cst_136 = arith.constant dense<0.000000e+00> : vector<1x128xf32>
    %122 = tpu.matmul %120, %121, %cst_136 {dimension_numbers = #tpu.dot_dimension_numbers<[1], [0], [0], [1], [0, 0, 1, 1], [], []>} : vector<1x128xf32>, vector<128x128xf32>, vector<1x128xf32> -> vector<1x128xf32>
    %c0_137 = arith.constant 0 : index
    %c0_138 = arith.constant 0 : index
    %123 = vector.load %arg13[%c0_137, %c0_138] : memref<1x128xf32, #tpu.memory_space<vmem>>, vector<1x128xf32>
    %124 = arith.addf %122, %123 : vector<1x128xf32>
    %cst_139 = arith.constant 0.000000e+00 : f32
    %125 = vector.broadcast %cst_139 : f32 to vector<1x128xf32>
    %126 = arith.maximumf %124, %125 : vector<1x128xf32>
    %c0_140 = arith.constant 0 : index
    %c0_141 = arith.constant 0 : index
    %127 = vector.load %arg14[%c0_140, %c0_141] : memref<128x128xf32, #tpu.memory_space<vmem>>, vector<128x128xf32>
    %cst_142 = arith.constant dense<0.000000e+00> : vector<1x128xf32>
    %128 = tpu.matmul %126, %127, %cst_142 {dimension_numbers = #tpu.dot_dimension_numbers<[1], [0], [0], [1], [0, 0, 1, 1], [], []>} : vector<1x128xf32>, vector<128x128xf32>, vector<1x128xf32> -> vector<1x128xf32>
    %c0_143 = arith.constant 0 : index
    %c0_144 = arith.constant 0 : index
    %129 = vector.load %arg15[%c0_143, %c0_144] : memref<1x128xf32, #tpu.memory_space<vmem>>, vector<1x128xf32>
    %130 = arith.addf %128, %129 : vector<1x128xf32>
    %cst_145 = arith.constant dense<0xFF800000> : vector<1xf32>
    %131 = vector.multi_reduction <maximumf>, %130, %cst_145 [1] : vector<1x128xf32> to vector<1xf32>
    %132 = vector.shape_cast %131 : vector<1xf32> to vector<1x1xf32>
    %133 = vector.broadcast %132 : vector<1x1xf32> to vector<1x128xf32>
    %134 = arith.subf %130, %133 : vector<1x128xf32>
    %135 = math.exp %134 : vector<1x128xf32>
    %cst_146 = arith.constant dense<0.000000e+00> : vector<1xf32>
    %136 = vector.multi_reduction <add>, %135, %cst_146 [1] : vector<1x128xf32> to vector<1xf32>
    %137 = vector.shape_cast %136 : vector<1xf32> to vector<1x1xf32>
    %138 = math.log %137 : vector<1x1xf32>
    %139 = vector.broadcast %138 : vector<1x1xf32> to vector<1x128xf32>
    %140 = arith.subf %134, %139 : vector<1x128xf32>
    %c0_147 = arith.constant 0 : index
    %c0_148 = arith.constant 0 : index
    %c0_149 = arith.constant 0 : index
    %141 = vector.load %arg16[%c0_147, %c0_148, %c0_149] : memref<1x1x128xf32, #tpu.memory_space<vmem>>, vector<1x1x128xf32>
    %142 = vector.shape_cast %141 : vector<1x1x128xf32> to vector<1x128xf32>
    %143 = vector.shape_cast %140 : vector<1x128xf32> to vector<1x1x128xf32>
    tpu.vector_store %arg16[%c0_147, %c0_148, %c0_149], %143 {strides = array<i32>} : memref<1x1x128xf32, #tpu.memory_space<vmem>>, vector<1x1x128xf32>,
    return
  }
  func.func @transform_0(%arg0: i32) -> (i32, i32, i32) {
    %c0_i32 = arith.constant 0 : i32
    %c0_i32_0 = arith.constant 0 : i32
    %c0_i32_1 = arith.constant 0 : i32
    return %arg0, %c0_i32, %c0_i32_0 : i32, i32, i32
  }
  func.func @transform_1(%arg0: i32) -> (i32, i32, i32) {
    %c0_i32 = arith.constant 0 : i32
    %c0_i32_0 = arith.constant 0 : i32
    %c0_i32_1 = arith.constant 0 : i32
    %c0_i32_2 = arith.constant 0 : i32
    return %c0_i32, %c0_i32_0, %c0_i32_1 : i32, i32, i32
  }
  func.func @transform_2(%arg0: i32) -> (i32, i32) {
    %c0_i32 = arith.constant 0 : i32
    %c0_i32_0 = arith.constant 0 : i32
    %c0_i32_1 = arith.constant 0 : i32
    return %c0_i32, %c0_i32_0 : i32, i32
  }
  func.func @transform_3(%arg0: i32) -> (i32, i32, i32) {
    %c0_i32 = arith.constant 0 : i32
    %c0_i32_0 = arith.constant 0 : i32
    %c0_i32_1 = arith.constant 0 : i32
    %c0_i32_2 = arith.constant 0 : i32
    return %c0_i32, %c0_i32_0, %c0_i32_1 : i32, i32, i32
  }
  func.func @transform_4(%arg0: i32) -> (i32, i32, i32) {
    %c0_i32 = arith.constant 0 : i32
    %c0_i32_0 = arith.constant 0 : i32
    %c0_i32_1 = arith.constant 0 : i32
    %c0_i32_2 = arith.constant 0 : i32
    return %c0_i32, %c0_i32_0, %c0_i32_1 : i32, i32, i32
  }
  func.func @transform_5(%arg0: i32) -> (i32, i32, i32) {
    %c0_i32 = arith.constant 0 : i32
    %c0_i32_0 = arith.constant 0 : i32
    %c0_i32_1 = arith.constant 0 : i32
    %c0_i32_2 = arith.constant 0 : i32
    return %c0_i32, %c0_i32_0, %c0_i32_1 : i32, i32, i32
  }
  func.func @transform_6(%arg0: i32) -> (i32, i32) {
    %c0_i32 = arith.constant 0 : i32
    %c0_i32_0 = arith.constant 0 : i32
    %c0_i32_1 = arith.constant 0 : i32
    return %c0_i32, %c0_i32_0 : i32, i32
  }
  func.func @transform_7(%arg0: i32) -> (i32, i32, i32) {
    %c0_i32 = arith.constant 0 : i32
    %c0_i32_0 = arith.constant 0 : i32
    %c0_i32_1 = arith.constant 0 : i32
    %c0_i32_2 = arith.constant 0 : i32
    return %c0_i32, %c0_i32_0, %c0_i32_1 : i32, i32, i32
  }
  func.func @transform_8(%arg0: i32) -> (i32, i32, i32) {
    %c0_i32 = arith.constant 0 : i32
    %c0_i32_0 = arith.constant 0 : i32
    %c0_i32_1 = arith.constant 0 : i32
    %c0_i32_2 = arith.constant 0 : i32
    return %c0_i32, %c0_i32_0, %c0_i32_1 : i32, i32, i32
  }
  func.func @transform_9(%arg0: i32) -> (i32, i32, i32) {
    %c0_i32 = arith.constant 0 : i32
    %c0_i32_0 = arith.constant 0 : i32
    %c0_i32_1 = arith.constant 0 : i32
    %c0_i32_2 = arith.constant 0 : i32
    return %c0_i32, %c0_i32_0, %c0_i32_1 : i32, i32, i32
  }
  func.func @transform_10(%arg0: i32) -> (i32, i32) {
    %c0_i32 = arith.constant 0 : i32
    %c0_i32_0 = arith.constant 0 : i32
    %c0_i32_1 = arith.constant 0 : i32
    return %c0_i32, %c0_i32_0 : i32, i32
  }
  func.func @transform_11(%arg0: i32) -> (i32, i32) {
    %c0_i32 = arith.constant 0 : i32
    %c0_i32_0 = arith.constant 0 : i32
    %c0_i32_1 = arith.constant 0 : i32
    return %c0_i32, %c0_i32_0 : i32, i32
  }
  func.func @transform_12(%arg0: i32) -> (i32, i32) {
    %c0_i32 = arith.constant 0 : i32
    %c0_i32_0 = arith.constant 0 : i32
    %c0_i32_1 = arith.constant 0 : i32
    return %c0_i32, %c0_i32_0 : i32, i32
  }
  func.func @transform_13(%arg0: i32) -> (i32, i32) {
    %c0_i32 = arith.constant 0 : i32
    %c0_i32_0 = arith.constant 0 : i32
    %c0_i32_1 = arith.constant 0 : i32
    return %c0_i32, %c0_i32_0 : i32, i32
  }
  func.func @transform_14(%arg0: i32) -> (i32, i32) {
    %c0_i32 = arith.constant 0 : i32
    %c0_i32_0 = arith.constant 0 : i32
    %c0_i32_1 = arith.constant 0 : i32
    return %c0_i32, %c0_i32_0 : i32, i32
  }
  func.func @transform_15(%arg0: i32) -> (i32, i32, i32) {
    %c0_i32 = arith.constant 0 : i32
    %c0_i32_0 = arith.constant 0 : i32
    %c0_i32_1 = arith.constant 0 : i32
    return %arg0, %c0_i32, %c0_i32_0 : i32, i32, i32
  }
}

</mosaic_0001>

<llo_original>
// kernel: cifarnet_forward.1
$region0: #{cifarnet_forward.1}
  #allocation0 [shape = 'u32[]', space=smem, size = 0x4, offset = 0x4, fixed_abs, tag = 'smem constant byte address 0x4 - core index']
  #allocation1 [shape = 'u32[144,128]{1,0:T(1,128)}', space=vmem, size = 0x12000, scoped, tag = 'internal scratch']
  #allocation2 [shape = 'f32[14,84]{1,0:T(8,128)}', space=vmem, size = 0x2000, scoped, tag = 'scratch operand']
  #allocation3 [shape = 'f32[5,50]{1,0:T(8,128)}', space=vmem, size = 0x1000, scoped, tag = 'scratch operand']
  %s0 = inlined_call_operand.vmem [shape: f32[2,32,96], index: 0, kind: input, shape index: {}]
  %s1 = inlined_call_operand.vmem [shape: f32[5,96,168], index: 1, kind: input, shape index: {}]
  %s2 = inlined_call_operand.vmem [shape: f32[1,168], index: 2, kind: input, shape index: {}]
  %s3 = inlined_call_operand.vmem [shape: f32[2,168,84], index: 3, kind: input, shape index: {}]
  %s4 = inlined_call_operand.vmem [shape: f32[2,14,28], index: 4, kind: input, shape index: {}]
  %s5 = inlined_call_operand.vmem [shape: f32[5,84,100], index: 5, kind: input, shape index: {}]
  %s6 = inlined_call_operand.vmem [shape: f32[1,100], index: 6, kind: input, shape index: {}]
  %s7 = inlined_call_operand.vmem [shape: f32[2,100,50], index: 7, kind: input, shape index: {}]
  %s8 = inlined_call_operand.vmem [shape: f32[2,5,10], index: 8, kind: input, shape index: {}]
  %s9 = inlined_call_operand.vmem [shape: f32[5,50,128], index: 9, kind: input, shape index: {}]
  %s10 = inlined_call_operand.vmem [shape: f32[1,128], index: 10, kind: input, shape index: {}]
  %s11 = inlined_call_operand.vmem [shape: f32[128,128], index: 11, kind: input, shape index: {}]
  %s12 = inlined_call_operand.vmem [shape: f32[1,128], index: 12, kind: input, shape index: {}]
  %s13 = inlined_call_operand.vmem [shape: f32[128,128], index: 13, kind: input, shape index: {}]
  %s14 = inlined_call_operand.vmem [shape: f32[1,128], index: 14, kind: input, shape index: {}]
  %s15 = inlined_call_operand.hbm [shape: f32[2,1,128], index: 15, kind: output, shape index: {}]
  %s16 = sld [smem:[#allocation0]]
  $region93: #{cifarnet_forward.1} parent=0
    _
  %s18 = ssub.s32 1, %s16
  %s19 = scalar_select 0, %s18, %s16
  $region1: #{cifarnet_forward.1} parent=0
    #allocation4 [shape = 'u8[1024]{0}', space=vmem, size = 0x400, scoped, tag = 'output window, operand 0']
    #allocation5 [shape = 's32[2]{0}', space=sflag, size = 0x8, scoped, tag = 'scoped memory for cifarnet_forward.1']
    %20 = vsyncpa [#allocation5], 0
    %s21 = scalar_lea.sflag [#allocation5], 1
    %22 = vsyncpa %s21, 0
    loop: start=0, step=1, limit=4
    $region2: #{cifarnet_forward.1} parent=1 // loop_pre_header
      _
    $region3: #{cifarnet_forward.1} parent=1 // loop_header
      %s24 = sphi 0, %s28
      %p25 = scmp.ge.s32.totalorder %s24, 4
      %s34 = sphi 0, %s36
      %s37 = sphi 0, %s34
      %s38 = sphi 0, %s37
      %s54 = sphi 0, %s38
      %s58 = sphi 0, %s58
      %s60 = sphi 0, %s58
      %s61 = sphi 0, %s60
      %s75 = sphi 0, %s61
      %s79 = sphi 0, %s79
      %s81 = sphi 0, %s79
      %s82 = sphi 0, %s81
      %s96 = sphi 0, %s82
      %s100 = sphi 0, %s100
      %s102 = sphi 0, %s100
      %s103 = sphi 0, %s102
      %s117 = sphi 0, %s103
      %s121 = sphi 0, %s121
      %s123 = sphi 0, %s121
      %s124 = sphi 0, %s123
      %s138 = sphi 0, %s124
      %s142 = sphi 0, %s142
      %s144 = sphi 0, %s142
      %s145 = sphi 0, %s144
      %s159 = sphi 0, %s145
      %s163 = sphi 0, %s163
      %s165 = sphi 0, %s163
      %s166 = sphi 0, %s165
      %s180 = sphi 0, %s166
      %s184 = sphi 0, %s184
      %s186 = sphi 0, %s184
      %s187 = sphi 0, %s186
      %s201 = sphi 0, %s187
      %s205 = sphi 0, %s205
      %s207 = sphi 0, %s205
      %s208 = sphi 0, %s207
      %s222 = sphi 0, %s208
      %s226 = sphi 0, %s226
      %s228 = sphi 0, %s226
      %s229 = sphi 0, %s228
      %s243 = sphi 0, %s229
      %s247 = sphi 0, %s247
      %s249 = sphi 0, %s247
      %s250 = sphi 0, %s249
      %s264 = sphi 0, %s250
      %s268 = sphi 0, %s268
      %s270 = sphi 0, %s268
      %s271 = sphi 0, %s270
      %s285 = sphi 0, %s271
      %s289 = sphi 0, %s289
      %s291 = sphi 0, %s289
      %s292 = sphi 0, %s291
      %s306 = sphi 0, %s292
      %s310 = sphi 0, %s310
      %s312 = sphi 0, %s310
      %s313 = sphi 0, %s312
      %s327 = sphi 0, %s313
      %s331 = sphi 0, %s331
      %s333 = sphi 0, %s331
      %s334 = sphi 0, %s333
      %s348 = sphi 0, %s334
      %s354 = sphi 0, %s356
      %s357 = sphi 0, %s354
      %s358 = sphi 0, %s357
      %s374 = sphi 0, %s358
    $region4: #{cifarnet_forward.1} parent=1 // loop_header_branch
      %27 = sbr.rel (%p25) target = $region8
    $region5: #{cifarnet_forward.1} parent=1 // loop_body
      %s29 = ssub.s32 %s24, 1
      %s30 = ssub.s32 %s24, 2
      %s31 = sadd.s32 %s24, 1
      %s32 = ssub.s32 %s24, %s31
      %p33 = scmp.eq.s32.totalorder %s32, 0
      %s35 = sadd.s32 %s34, 1
      %s36 = scalar_select %p33, %s34, %s35
      %p39 = pneg %p33
      %p40 = scmp.eq.s32.totalorder %s24, 1
      %p41 = por %p39, %p40
      %p42 = scmp.ne.s32.totalorder %s34, %s37
      %p43 = scmp.eq.s32.totalorder %s24, 0
      %p44 = por %p42, %p43
      %p45 = scmp.ne.s32.totalorder %s34, %s37
      %p46 = scmp.eq.s32.totalorder %s29, 1
      %p47 = por %p45, %p46
      %p48 = scmp.ne.s32.totalorder %s37, %s38
      %p49 = scmp.eq.s32.totalorder %s29, 0
      %p50 = por %p48, %p49
      %p51 = scmp.ne.s32.totalorder %s37, %s38
      %p52 = scmp.eq.s32.totalorder %s30, 1
      %p53 = por %p51, %p52
      %p55 = scmp.ne.s32.totalorder %s38, %s54
      %p56 = scmp.eq.s32.totalorder %s30, 0
      %p57 = por %p55, %p56
      %s59 = sadd.s32 %s58, 1
      %p62 = scmp.eq.s32.totalorder %s24, 1
      %p63 = scmp.ne.s32.totalorder %s58, %s60
      %p64 = scmp.eq.s32.totalorder %s24, 0
      %p65 = por %p63, %p64
      %p66 = scmp.ne.s32.totalorder %s58, %s60
      %p67 = scmp.eq.s32.totalorder %s29, 1
      %p68 = por %p66, %p67
      %p69 = scmp.ne.s32.totalorder %s60, %s61
      %p70 = scmp.eq.s32.totalorder %s29, 0
      %p71 = por %p69, %p70
      %p72 = scmp.ne.s32.totalorder %s60, %s61
      %p73 = scmp.eq.s32.totalorder %s30, 1
      %p74 = por %p72, %p73
      %p76 = scmp.ne.s32.totalorder %s61, %s75
      %p77 = scmp.eq.s32.totalorder %s30, 0
      %p78 = por %p76, %p77
      %s80 = sadd.s32 %s79, 1
      %p83 = scmp.eq.s32.totalorder %s24, 1
      %p84 = scmp.ne.s32.totalorder %s79, %s81
      %p85 = scmp.eq.s32.totalorder %s24, 0
      %p86 = por %p84, %p85
      %p87 = scmp.ne.s32.totalorder %s79, %s81
      %p88 = scmp.eq.s32.totalorder %s29, 1
      %p89 = por %p87, %p88
      %p90 = scmp.ne.s32.totalorder %s81, %s82
      %p91 = scmp.eq.s32.totalorder %s29, 0
      %p92 = por %p90, %p91
      %p93 = scmp.ne.s32.totalorder %s81, %s82
      %p94 = scmp.eq.s32.totalorder %s30, 1
      %p95 = por %p93, %p94
      %p97 = scmp.ne.s32.totalorder %s82, %s96
      %p98 = scmp.eq.s32.totalorder %s30, 0
      %p99 = por %p97, %p98
      %s101 = sadd.s32 %s100, 1
      %p104 = scmp.eq.s32.totalorder %s24, 1
      %p105 = scmp.ne.s32.totalorder %s100, %s102
      %p106 = scmp.eq.s32.totalorder %s24, 0
      %p107 = por %p105, %p106
      %p108 = scmp.ne.s32.totalorder %s100, %s102
      %p109 = scmp.eq.s32.totalorder %s29, 1
      %p110 = por %p108, %p109
      %p111 = scmp.ne.s32.totalorder %s102, %s103
      %p112 = scmp.eq.s32.totalorder %s29, 0
      %p113 = por %p111, %p112
      %p114 = scmp.ne.s32.totalorder %s102, %s103
      %p115 = scmp.eq.s32.totalorder %s30, 1
      %p116 = por %p114, %p115
      %p118 = scmp.ne.s32.totalorder %s103, %s117
      %p119 = scmp.eq.s32.totalorder %s30, 0
      %p120 = por %p118, %p119
      %s122 = sadd.s32 %s121, 1
      %p125 = scmp.eq.s32.totalorder %s24, 1
      %p126 = scmp.ne.s32.totalorder %s121, %s123
      %p127 = scmp.eq.s32.totalorder %s24, 0
      %p128 = por %p126, %p127
      %p129 = scmp.ne.s32.totalorder %s121, %s123
      %p130 = scmp.eq.s32.totalorder %s29, 1
      %p131 = por %p129, %p130
      %p132 = scmp.ne.s32.totalorder %s123, %s124
      %p133 = scmp.eq.s32.totalorder %s29, 0
      %p134 = por %p132, %p133
      %p135 = scmp.ne.s32.totalorder %s123, %s124
      %p136 = scmp.eq.s32.totalorder %s30, 1
      %p137 = por %p135, %p136
      %p139 = scmp.ne.s32.totalorder %s124, %s138
      %p140 = scmp.eq.s32.totalorder %s30, 0
      %p141 = por %p139, %p140
      %s143 = sadd.s32 %s142, 1
      %p146 = scmp.eq.s32.totalorder %s24, 1
      %p147 = scmp.ne.s32.totalorder %s142, %s144
      %p148 = scmp.eq.s32.totalorder %s24, 0
      %p149 = por %p147, %p148
      %p150 = scmp.ne.s32.totalorder %s142, %s144
      %p151 = scmp.eq.s32.totalorder %s29, 1
      %p152 = por %p150, %p151
      %p153 = scmp.ne.s32.totalorder %s144, %s145
      %p154 = scmp.eq.s32.totalorder %s29, 0
      %p155 = por %p153, %p154
      %p156 = scmp.ne.s32.totalorder %s144, %s145
      %p157 = scmp.eq.s32.totalorder %s30, 1
      %p158 = por %p156, %p157
      %p160 = scmp.ne.s32.totalorder %s145, %s159
      %p161 = scmp.eq.s32.totalorder %s30, 0
      %p162 = por %p160, %p161
      %s164 = sadd.s32 %s163, 1
      %p167 = scmp.eq.s32.totalorder %s24, 1
      %p168 = scmp.ne.s32.totalorder %s163, %s165
      %p169 = scmp.eq.s32.totalorder %s24, 0
      %p170 = por %p168, %p169
      %p171 = scmp.ne.s32.totalorder %s163, %s165
      %p172 = scmp.eq.s32.totalorder %s29, 1
      %p173 = por %p171, %p172
      %p174 = scmp.ne.s32.totalorder %s165, %s166
      %p175 = scmp.eq.s32.totalorder %s29, 0
      %p176 = por %p174, %p175
      %p177 = scmp.ne.s32.totalorder %s165, %s166
      %p178 = scmp.eq.s32.totalorder %s30, 1
      %p179 = por %p177, %p178
      %p181 = scmp.ne.s32.totalorder %s166, %s180
      %p182 = scmp.eq.s32.totalorder %s30, 0
      %p183 = por %p181, %p182
      %s185 = sadd.s32 %s184, 1
      %p188 = scmp.eq.s32.totalorder %s24, 1
      %p189 = scmp.ne.s32.totalorder %s184, %s186
      %p190 = scmp.eq.s32.totalorder %s24, 0
      %p191 = por %p189, %p190
      %p192 = scmp.ne.s32.totalorder %s184, %s186
      %p193 = scmp.eq.s32.totalorder %s29, 1
      %p194 = por %p192, %p193
      %p195 = scmp.ne.s32.totalorder %s186, %s187
      %p196 = scmp.eq.s32.totalorder %s29, 0
      %p197 = por %p195, %p196
      %p198 = scmp.ne.s32.totalorder %s186, %s187
      %p199 = scmp.eq.s32.totalorder %s30, 1
      %p200 = por %p198, %p199
      %p202 = scmp.ne.s32.totalorder %s187, %s201
      %p203 = scmp.eq.s32.totalorder %s30, 0
      %p204 = por %p202, %p203
      %s206 = sadd.s32 %s205, 1
      %p209 = scmp.eq.s32.totalorder %s24, 1
      %p210 = scmp.ne.s32.totalorder %s205, %s207
      %p211 = scmp.eq.s32.totalorder %s24, 0
      %p212 = por %p210, %p211
      %p213 = scmp.ne.s32.totalorder %s205, %s207
      %p214 = scmp.eq.s32.totalorder %s29, 1
      %p215 = por %p213, %p214
      %p216 = scmp.ne.s32.totalorder %s207, %s208
      %p217 = scmp.eq.s32.totalorder %s29, 0
      %p218 = por %p216, %p217
      %p219 = scmp.ne.s32.totalorder %s207, %s208
      %p220 = scmp.eq.s32.totalorder %s30, 1
      %p221 = por %p219, %p220
      %p223 = scmp.ne.s32.totalorder %s208, %s222
      %p224 = scmp.eq.s32.totalorder %s30, 0
      %p225 = por %p223, %p224
      %s227 = sadd.s32 %s226, 1
      %p230 = scmp.eq.s32.totalorder %s24, 1
      %p231 = scmp.ne.s32.totalorder %s226, %s228
      %p232 = scmp.eq.s32.totalorder %s24, 0
      %p233 = por %p231, %p232
      %p234 = scmp.ne.s32.totalorder %s226, %s228
      %p235 = scmp.eq.s32.totalorder %s29, 1
      %p236 = por %p234, %p235
      %p237 = scmp.ne.s32.totalorder %s228, %s229
      %p238 = scmp.eq.s32.totalorder %s29, 0
      %p239 = por %p237, %p238
      %p240 = scmp.ne.s32.totalorder %s228, %s229
      %p241 = scmp.eq.s32.totalorder %s30, 1
      %p242 = por %p240, %p241
      %p244 = scmp.ne.s32.totalorder %s229, %s243
      %p245 = scmp.eq.s32.totalorder %s30, 0
      %p246 = por %p244, %p245
      %s248 = sadd.s32 %s247, 1
      %p251 = scmp.eq.s32.totalorder %s24, 1
      %p252 = scmp.ne.s32.totalorder %s247, %s249
      %p253 = scmp.eq.s32.totalorder %s24, 0
      %p254 = por %p252, %p253
      %p255 = scmp.ne.s32.totalorder %s247, %s249
      %p256 = scmp.eq.s32.totalorder %s29, 1
      %p257 = por %p255, %p256
      %p258 = scmp.ne.s32.totalorder %s249, %s250
      %p259 = scmp.eq.s32.totalorder %s29, 0
      %p260 = por %p258, %p259
      %p261 = scmp.ne.s32.totalorder %s249, %s250
      %p262 = scmp.eq.s32.totalorder %s30, 1
      %p263 = por %p261, %p262
      %p265 = scmp.ne.s32.totalorder %s250, %s264
      %p266 = scmp.eq.s32.totalorder %s30, 0
      %p267 = por %p265, %p266
      %s269 = sadd.s32 %s268, 1
      %p272 = scmp.eq.s32.totalorder %s24, 1
      %p273 = scmp.ne.s32.totalorder %s268, %s270
      %p274 = scmp.eq.s32.totalorder %s24, 0
      %p275 = por %p273, %p274
      %p276 = scmp.ne.s32.totalorder %s268, %s270
      %p277 = scmp.eq.s32.totalorder %s29, 1
      %p278 = por %p276, %p277
      %p279 = scmp.ne.s32.totalorder %s270, %s271
      %p280 = scmp.eq.s32.totalorder %s29, 0
      %p281 = por %p279, %p280
      %p282 = scmp.ne.s32.totalorder %s270, %s271
      %p283 = scmp.eq.s32.totalorder %s30, 1
      %p284 = por %p282, %p283
      %p286 = scmp.ne.s32.totalorder %s271, %s285
      %p287 = scmp.eq.s32.totalorder %s30, 0
      %p288 = por %p286, %p287
      %s290 = sadd.s32 %s289, 1
      %p293 = scmp.eq.s32.totalorder %s24, 1
      %p294 = scmp.ne.s32.totalorder %s289, %s291
      %p295 = scmp.eq.s32.totalorder %s24, 0
      %p296 = por %p294, %p295
      %p297 = scmp.ne.s32.totalorder %s289, %s291
      %p298 = scmp.eq.s32.totalorder %s29, 1
      %p299 = por %p297, %p298
      %p300 = scmp.ne.s32.totalorder %s291, %s292
      %p301 = scmp.eq.s32.totalorder %s29, 0
      %p302 = por %p300, %p301
      %p303 = scmp.ne.s32.totalorder %s291, %s292
      %p304 = scmp.eq.s32.totalorder %s30, 1
      %p305 = por %p303, %p304
      %p307 = scmp.ne.s32.totalorder %s292, %s306
      %p308 = scmp.eq.s32.totalorder %s30, 0
      %p309 = por %p307, %p308
      %s311 = sadd.s32 %s310, 1
      %p314 = scmp.eq.s32.totalorder %s24, 1
      %p315 = scmp.ne.s32.totalorder %s310, %s312
      %p316 = scmp.eq.s32.totalorder %s24, 0
      %p317 = por %p315, %p316
      %p318 = scmp.ne.s32.totalorder %s310, %s312
      %p319 = scmp.eq.s32.totalorder %s29, 1
      %p320 = por %p318, %p319
      %p321 = scmp.ne.s32.totalorder %s312, %s313
      %p322 = scmp.eq.s32.totalorder %s29, 0
      %p323 = por %p321, %p322
      %p324 = scmp.ne.s32.totalorder %s312, %s313
      %p325 = scmp.eq.s32.totalorder %s30, 1
      %p326 = por %p324, %p325
      %p328 = scmp.ne.s32.totalorder %s313, %s327
      %p329 = scmp.eq.s32.totalorder %s30, 0
      %p330 = por %p328, %p329
      %s332 = sadd.s32 %s331, 1
      %p335 = scmp.eq.s32.totalorder %s24, 1
      %p336 = scmp.ne.s32.totalorder %s331, %s333
      %p337 = scmp.eq.s32.totalorder %s24, 0
      %p338 = por %p336, %p337
      %p339 = scmp.ne.s32.totalorder %s331, %s333
      %p340 = scmp.eq.s32.totalorder %s29, 1
      %p341 = por %p339, %p340
      %p342 = scmp.ne.s32.totalorder %s333, %s334
      %p343 = scmp.eq.s32.totalorder %s29, 0
      %p344 = por %p342, %p343
      %p345 = scmp.ne.s32.totalorder %s333, %s334
      %p346 = scmp.eq.s32.totalorder %s30, 1
      %p347 = por %p345, %p346
      %p349 = scmp.ne.s32.totalorder %s334, %s348
      %p350 = scmp.eq.s32.totalorder %s30, 0
      %p351 = por %p349, %p350
      %s352 = ssub.s32 %s24, %s31
      %p353 = scmp.eq.s32.totalorder %s352, 0
      %s355 = sadd.s32 %s354, 1
      %s356 = scalar_select %p353, %s354, %s355
      %p359 = pneg %p353
      %p360 = scmp.eq.s32.totalorder %s24, 1
      %p361 = por %p359, %p360
      %p362 = scmp.ne.s32.totalorder %s354, %s357
      %p363 = scmp.eq.s32.totalorder %s24, 0
      %p364 = por %p362, %p363
      %p365 = scmp.ne.s32.totalorder %s354, %s357
      %p366 = scmp.eq.s32.totalorder %s29, 1
      %p367 = por %p365, %p366
      %p368 = scmp.ne.s32.totalorder %s357, %s358
      %p369 = scmp.eq.s32.totalorder %s29, 0
      %p370 = por %p368, %p369
      %p371 = scmp.ne.s32.totalorder %s357, %s358
      %p372 = scmp.eq.s32.totalorder %s30, 1
      %p373 = por %p371, %p372
      %p375 = scmp.ne.s32.totalorder %s358, %s374
      %p376 = scmp.eq.s32.totalorder %s30, 0
      %p377 = por %p375, %p376
      %p378 = scmp.le.s32.totalorder 1, %s24
      %p379 = scmp.lt.s32.totalorder %s24, 3
      %p380 = pnand %p378, %p379
      %p381 = pneg %p380
      // Predicated region
      $region9: #{cifarnet_forward.1} parent=5 // pred_check
        _
      $region10: #{cifarnet_forward.1} parent=5 // pred_check_branch
        %383 = sbr.rel (%p380) target = $region12
      $region11: #{cifarnet_forward.1} parent=5 // pred_region
        %s384 = ssub.s32 %s24, 1
        // Predicated region
        $region13: #{cifarnet_forward.1} parent=11 // pred_check
          %p385 = pneg %p71
        $region14: #{cifarnet_forward.1} parent=11 // pred_check_branch
          %387 = sbr.rel (%p385) target = $region16
        $region15: #{cifarnet_forward.1} parent=11 // pred_region
          _
        $region16: #{cifarnet_forward.1} parent=11 // pred_fallthru
          _
        // Predicated region
        $region17: #{cifarnet_forward.1} parent=11 // pred_check
          %p388 = pneg %p92
        $region18: #{cifarnet_forward.1} parent=11 // pred_check_branch
          %390 = sbr.rel (%p388) target = $region20
        $region19: #{cifarnet_forward.1} parent=11 // pred_region
          _
        $region20: #{cifarnet_forward.1} parent=11 // pred_fallthru
          _
        // Predicated region
        $region21: #{cifarnet_forward.1} parent=11 // pred_check
          %p391 = pneg %p113
        $region22: #{cifarnet_forward.1} parent=11 // pred_check_branch
          %393 = sbr.rel (%p391) target = $region24
        $region23: #{cifarnet_forward.1} parent=11 // pred_region
          _
        $region24: #{cifarnet_forward.1} parent=11 // pred_fallthru
          _
        // Predicated region
        $region25: #{cifarnet_forward.1} parent=11 // pred_check
          %p394 = pneg %p134
        $region26: #{cifarnet_forward.1} parent=11 // pred_check_branch
          %396 = sbr.rel (%p394) target = $region28
        $region27: #{cifarnet_forward.1} parent=11 // pred_region
          _
        $region28: #{cifarnet_forward.1} parent=11 // pred_fallthru
          _
        // Predicated region
        $region29: #{cifarnet_forward.1} parent=11 // pred_check
          %p397 = pneg %p155
        $region30: #{cifarnet_forward.1} parent=11 // pred_check_branch
          %399 = sbr.rel (%p397) target = $region32
        $region31: #{cifarnet_forward.1} parent=11 // pred_region
          _
        $region32: #{cifarnet_forward.1} parent=11 // pred_fallthru
          _
        // Predicated region
        $region33: #{cifarnet_forward.1} parent=11 // pred_check
          %p400 = pneg %p176
        $region34: #{cifarnet_forward.1} parent=11 // pred_check_branch
          %402 = sbr.rel (%p400) target = $region36
        $region35: #{cifarnet_forward.1} parent=11 // pred_region
          _
        $region36: #{cifarnet_forward.1} parent=11 // pred_fallthru
          _
        // Predicated region
        $region37: #{cifarnet_forward.1} parent=11 // pred_check
          %p403 = pneg %p197
        $region38: #{cifarnet_forward.1} parent=11 // pred_check_branch
          %405 = sbr.rel (%p403) target = $region40
        $region39: #{cifarnet_forward.1} parent=11 // pred_region
          _
        $region40: #{cifarnet_forward.1} parent=11 // pred_fallthru
          _
        // Predicated region
        $region41: #{cifarnet_forward.1} parent=11 // pred_check
          %p406 = pneg %p218
        $region42: #{cifarnet_forward.1} parent=11 // pred_check_branch
          %408 = sbr.rel (%p406) target = $region44
        $region43: #{cifarnet_forward.1} parent=11 // pred_region
          _
        $region44: #{cifarnet_forward.1} parent=11 // pred_fallthru
          _
        // Predicated region
        $region45: #{cifarnet_forward.1} parent=11 // pred_check
          %p409 = pneg %p239
        $region46: #{cifarnet_forward.1} parent=11 // pred_check_branch
          %411 = sbr.rel (%p409) target = $region48
        $region47: #{cifarnet_forward.1} parent=11 // pred_region
          _
        $region48: #{cifarnet_forward.1} parent=11 // pred_fallthru
          _
        // Predicated region
        $region49: #{cifarnet_forward.1} parent=11 // pred_check
          %p412 = pneg %p260
        $region50: #{cifarnet_forward.1} parent=11 // pred_check_branch
          %414 = sbr.rel (%p412) target = $region52
        $region51: #{cifarnet_forward.1} parent=11 // pred_region
          _
        $region52: #{cifarnet_forward.1} parent=11 // pred_fallthru
          _
        // Predicated region
        $region53: #{cifarnet_forward.1} parent=11 // pred_check
          %p415 = pneg %p281
        $region54: #{cifarnet_forward.1} parent=11 // pred_check_branch
          %417 = sbr.rel (%p415) target = $region56
        $region55: #{cifarnet_forward.1} parent=11 // pred_region
          _
        $region56: #{cifarnet_forward.1} parent=11 // pred_fallthru
          _
        // Predicated region
        $region57: #{cifarnet_forward.1} parent=11 // pred_check
          %p418 = pneg %p302
        $region58: #{cifarnet_forward.1} parent=11 // pred_check_branch
          %420 = sbr.rel (%p418) target = $region60
        $region59: #{cifarnet_forward.1} parent=11 // pred_region
          _
        $region60: #{cifarnet_forward.1} parent=11 // pred_fallthru
          _
        // Predicated region
        $region61: #{cifarnet_forward.1} parent=11 // pred_check
          %p421 = pneg %p323
        $region62: #{cifarnet_forward.1} parent=11 // pred_check_branch
          %423 = sbr.rel (%p421) target = $region64
        $region63: #{cifarnet_forward.1} parent=11 // pred_region
          _
        $region64: #{cifarnet_forward.1} parent=11 // pred_fallthru
          _
        // Predicated region
        $region65: #{cifarnet_forward.1} parent=11 // pred_check
          %p424 = pneg %p344
        $region66: #{cifarnet_forward.1} parent=11 // pred_check_branch
          %426 = sbr.rel (%p424) target = $region68
        $region67: #{cifarnet_forward.1} parent=11 // pred_region
          _
        $region68: #{cifarnet_forward.1} parent=11 // pred_fallthru
          _
      $region12: #{cifarnet_forward.1} parent=5 // pred_fallthru
        _
      %p427 = scmp.lt.s32.totalorder %s24, 2
      // Predicated region
      $region69: #{cifarnet_forward.1} parent=5 // pred_check
        %p428 = pneg %p427
      $region70: #{cifarnet_forward.1} parent=5 // pred_check_branch
        %430 = sbr.rel (%p428) target = $region72
      $region71: #{cifarnet_forward.1} parent=5 // pred_region
        // Predicated region
        $region73: #{cifarnet_forward.1} parent=71 // pred_check
          %p431 = pneg %p44
        $region74: #{cifarnet_forward.1} parent=71 // pred_check_branch
          %433 = sbr.rel (%p431) target = $region76
        $region75: #{cifarnet_forward.1} parent=71 // pred_region
          %p434 = scmp.lt.s32.totalorder %s24, 1
          %s435 = scalar_select %p434, %s24, 1
          %s436 = smul.addr %s435, 4
          %s437 = smul.addr %s436, 8
          %s438 = scalar_lea.vmem %s0, %s437
        $region76: #{cifarnet_forward.1} parent=71 // pred_fallthru
          _
      $region72: #{cifarnet_forward.1} parent=5 // pred_fallthru
        _
      %p439 = scmp.le.s32.totalorder 1, %s24
      %p440 = scmp.lt.s32.totalorder %s24, 3
      %p441 = pnand %p439, %p440
      %p442 = pneg %p441
      // Predicated region
      $region77: #{cifarnet_forward.1} parent=5 // pred_check
        _
      $region78: #{cifarnet_forward.1} parent=5 // pred_check_branch
        %444 = sbr.rel (%p441) target = $region80
      $region79: #{cifarnet_forward.1} parent=5 // pred_region
        %s445 = ssub.s32 %s24, 1
        %p446 = scmp.lt.s32.totalorder %s29, 1
        %s447 = scalar_select %p446, %s29, 1
        %s448 = smul.addr %s447, 4
        %s449 = smul.addr %s448, 8
        %s450 = scalar_lea.vmem %s0, %s449
        %p451 = pneg %p50
        %p452 = pneg %p47
        %p453 = pneg %p71
        %p454 = pneg %p68
        %p455 = pneg %p92
        %p456 = pneg %p89
        %p457 = pneg %p113
        %p458 = pneg %p110
        %p459 = pneg %p134
        %p460 = pneg %p131
        %p461 = pneg %p155
        %p462 = pneg %p152
        %p463 = pneg %p176
        %p464 = pneg %p173
        %p465 = pneg %p197
        %p466 = pneg %p194
        %p467 = pneg %p218
        %p468 = pneg %p215
        %p469 = pneg %p239
        %p470 = pneg %p236
        %p471 = pneg %p260
        %p472 = pneg %p257
        %p473 = pneg %p281
        %p474 = pneg %p278
        %p475 = pneg %p302
        %p476 = pneg %p299
        %p477 = pneg %p323
        %p478 = pneg %p320
        %p479 = pneg %p344
        %p480 = pneg %p341
        %p481 = pneg %p370
        %p482 = pneg %p367
        %s483 = sand.u32 %s357, 1
        %s484 = scalar_lea.sflag [#allocation5], %s483
        %s485 = sand.u32 %s357, 1
        %s486 = scalar_lea.vmem [#allocation4], %s485
        %p487 = scmp.lt.s32.totalorder %s29, 1
        %s488 = scalar_select %p487, %s29, 1
        %s489 = smul.addr %s488, 4
        %s490 = smul.addr %s489, 8
        %s491 = scalar_lea.vmem %s0, %s490
        %v492 = vld [vmem:[%s491] sm:$0xff]
        %v493 = vld [vmem:[%s491 + $0x8] sm:$0xff]
        %v494 = vld [vmem:[%s491 + $0x10] sm:$0xff]
        %v495 = vld [vmem:[%s491 + $0x18] sm:$0xf]
        %v496 = vld [vmem:[%s1] sm:$0xff]
        %v497 = vld [vmem:[%s1 + $0x8] sm:$0xff]
        %v498 = vld [vmem:[%s1 + $0x10] sm:$0xff]
        %v499 = vld [vmem:[%s1 + $0x18] sm:$0xff]
        %v500 = vld [vmem:[%s1 + $0x20] sm:$0xff]
        %v501 = vld [vmem:[%s1 + $0x28] sm:$0xff]
        %v502 = vld [vmem:[%s1 + $0x30] sm:$0xff]
        %v503 = vld [vmem:[%s1 + $0x38] sm:$0xff]
        %v504 = vld [vmem:[%s1 + $0x40] sm:$0xff]
        %v505 = vld [vmem:[%s1 + $0x48] sm:$0xff]
        %v506 = vld [vmem:[%s1 + $0x50] sm:$0xff]
        %v507 = vld [vmem:[%s1 + $0x58] sm:$0xff]
        %v508 = vld [vmem:[%s1 + $0x60] sm:$0xff]
        %v509 = vld [vmem:[%s1 + $0x68] sm:$0xff]
        %v510 = vld [vmem:[%s1 + $0x70] sm:$0xff]
        %v511 = vld [vmem:[%s1 + $0x78] sm:$0xff]
        %v512 = vld [vmem:[%s1 + $0x80] sm:$0xff]
        %v513 = vld [vmem:[%s1 + $0x88] sm:$0xff]
        %v514 = vld [vmem:[%s1 + $0x90] sm:$0xff]
        %v515 = vld [vmem:[%s1 + $0x98] sm:$0xff]
        %v516 = vld [vmem:[%s1 + $0xa0] sm:$0xff]
        %v517 = vld [vmem:[%s1 + $0xa8] sm:$0xff]
        %v518 = vld [vmem:[%s1 + $0xb0] sm:$0xff]
        %v519 = vld [vmem:[%s1 + $0xb8] sm:$0xff]
        %v520 = vld [vmem:[%s491 + $0x1] sm:$0xff]
        %v521 = vld [vmem:[%s491 + $0x9] sm:$0xff]
        %v522 = vld [vmem:[%s491 + $0x11] sm:$0xff]
        %v523 = vld [vmem:[%s491 + $0x19] sm:$0xf]
        %s524 = scalar_lea.vmem %s1, 192
        %v525 = vld [vmem:[%s524] sm:$0xff]
        %v526 = vld [vmem:[%s524 + $0x8] sm:$0xff]
        %v527 = vld [vmem:[%s524 + $0x10] sm:$0xff]
        %v528 = vld [vmem:[%s524 + $0x18] sm:$0xff]
        %v529 = vld [vmem:[%s524 + $0x20] sm:$0xff]
        %v530 = vld [vmem:[%s524 + $0x28] sm:$0xff]
        %v531 = vld [vmem:[%s524 + $0x30] sm:$0xff]
        %v532 = vld [vmem:[%s524 + $0x38] sm:$0xff]
        %v533 = vld [vmem:[%s524 + $0x40] sm:$0xff]
        %v534 = vld [vmem:[%s524 + $0x48] sm:$0xff]
        %v535 = vld [vmem:[%s524 + $0x50] sm:$0xff]
        %v536 = vld [vmem:[%s524 + $0x58] sm:$0xff]
        %v537 = vld [vmem:[%s524 + $0x60] sm:$0xff]
        %v538 = vld [vmem:[%s524 + $0x68] sm:$0xff]
        %v539 = vld [vmem:[%s524 + $0x70] sm:$0xff]
        %v540 = vld [vmem:[%s524 + $0x78] sm:$0xff]
        %v541 = vld [vmem:[%s524 + $0x80] sm:$0xff]
        %v542 = vld [vmem:[%s524 + $0x88] sm:$0xff]
        %v543 = vld [vmem:[%s524 + $0x90] sm:$0xff]
        %v544 = vld [vmem:[%s524 + $0x98] sm:$0xff]
        %v545 = vld [vmem:[%s524 + $0xa0] sm:$0xff]
        %v546 = vld [vmem:[%s524 + $0xa8] sm:$0xff]
        %v547 = vld [vmem:[%s524 + $0xb0] sm:$0xff]
        %v548 = vld [vmem:[%s524 + $0xb8] sm:$0xff]
        %vm549 = vcmask 785408
        %v551 = vsel %vm549, %v520, 0
        %v554 = vsel %vm549, %v521, 0
        %v557 = vsel %vm549, %v522, 0
        %v560 = vsel %vm549, %v523, 0
        %562 = vmatprep.subr.mxu0 %v526
        %563 = vmatpush1.msra.mxu0 %v525
        %564 = vmatprep.subr.mxu0 %v528
        %565 = vmatpush1.msra.mxu0 %v527
        %566 = vmatprep.subr.mxu0 %v530
        %567 = vmatpush1.msra.mxu0 %v529
        %568 = vmatprep.subr.mxu0 %v532
        %569 = vmatpush1.msra.mxu0 %v531
        %570 = vmatprep.subr.mxu0 %v534
        %571 = vmatpush1.msra.mxu0 %v533
        %572 = vmatprep.subr.mxu0 %v536
        %573 = vmatpush1.msra.mxu0 %v535
        %574 = vmatprep.subr.mxu0 %v538
        %575 = vmatpush1.msra.mxu0 %v537
        %576 = vmatprep.subr.mxu0 %v540
        %577 = vmatpush1.msra.mxu0 %v539
        %578 = vmatprep.subr.mxu0 %v542
        %579 = vmatpush1.msra.mxu0 %v541
        %580 = vmatprep.subr.mxu0 %v544
        %581 = vmatpush1.msra.mxu0 %v543
        %582 = vmatprep.subr.mxu0 %v546
        %583 = vmatpush1.msra.mxu0 %v545
        %584 = vmatprep.subr.mxu0 %v548
        %585 = vmatpush1.msra.mxu0 %v547
        %586 = vmatprep.subr.mxu0 0.0
        %587 = vmatpush1.msra.mxu0 0.0
        %588 = vmatprep.subr.mxu0 0.0
        %589 = vmatpush1.msra.mxu0 0.0
        %590 = vmatprep.subr.mxu0 0.0
        %591 = vmatpush1.msra.mxu0 0.0
        %592 = vmatprep.subr.mxu0 0.0
        %593 = vmatpush1.msra.mxu0 0.0
        %594 = vmatprep.subr.mxu0 0.0
        %595 = vmatpush1.msra.mxu0 0.0
        %596 = vmatprep.subr.mxu0 0.0
        %597 = vmatpush1.msra.mxu0 0.0
        %598 = vmatprep.subr.mxu0 0.0
        %599 = vmatpush1.msra.mxu0 0.0
        %600 = vmatprep.subr.mxu0 0.0
        %601 = vmatpush1.msra.mxu0 0.0
        %602 = vmatprep.subr.mxu0 0.0
        %603 = vmatpush1.msra.mxu0 0.0
        %604 = vmatprep.subr.mxu0 0.0
        %605 = vmatpush1.msra.mxu0 0.0
        %606 = vmatprep.subr.mxu0 0.0
        %607 = vmatpush1.msra.mxu0 0.0
        %608 = vmatprep.subr.mxu0 0.0
        %609 = vmatpush1.msra.mxu0 0.0
        %610 = vmatprep.subr.mxu0 0.0
        %611 = vmatpush1.msra.mxu0 0.0
        %612 = vmatprep.subr.mxu0 0.0
        %613 = vmatpush1.msra.mxu0 0.0
        %614 = vmatprep.subr.mxu0 0.0
        %615 = vmatpush1.msra.mxu0 0.0
        %616 = vmatprep.subr.mxu0 0.0
        %617 = vmatpush1.msra.mxu0 0.0
        %618 = vmatprep.subr.mxu0 0.0
        %619 = vmatpush1.msra.mxu0 0.0
        %620 = vmatprep.subr.mxu0 0.0
        %621 = vmatpush1.msra.mxu0 0.0
        %622 = vmatprep.subr.mxu0 0.0
        %623 = vmatpush1.msra.mxu0 0.0
        %624 = vmatprep.subr.mxu0 0.0
        %625 = vmatpush1.msra.mxu0 0.0
        %626 = vmatprep.mubr.f32.mxu0 0.0
        %627 = vmatmul.mubr.f32.gmra.mrb[0].mxu0 %v551
        %v628 = vpop.f32.mrb[0].mxu0
        %v629 = vadd.f32 0.0, %v628
        %v630 = vpop.f32.mrb[0].mxu0
        %v631 = vadd.f32 0.0, %v630
        %632 = vmatprep.mubr.f32.mxu0 0.0
        %633 = vmatmul.mubr.f32.gmra.mrb[0].mxu0 %v554
        %v634 = vpop.f32.mrb[0].mxu0
        %v635 = vadd.f32 0.0, %v634
        %v636 = vpop.f32.mrb[0].mxu0
        %v637 = vadd.f32 0.0, %v636
        %638 = vmatprep.mubr.f32.mxu0 0.0
        %639 = vmatmul.mubr.f32.gmra.mrb[0].mxu0 %v557
        %v640 = vpop.f32.mrb[0].mxu0
        %v641 = vadd.f32 0.0, %v640
        %v642 = vpop.f32.mrb[0].mxu0
        %v643 = vadd.f32 0.0, %v642
        %644 = vmatprep.mubr.f32.mxu0 0.0
        %645 = vmatmul.mubr.f32.gmra.mrb[0].mxu0 %v560
        %v646 = vpop.f32.mrb[0].mxu0
        %v647 = vadd.f32 0.0, %v646
        %v648 = vpop.f32.mrb[0].mxu0
        %v649 = vadd.f32 0.0, %v648
        %650 = vdwg.mxu0
        %v652 = vsel %vm549, %v492, 0
        %v655 = vsel %vm549, %v493, 0
        %v658 = vsel %vm549, %v494, 0
        %v661 = vsel %vm549, %v495, 0
        %663 = vmatprep.subr.mxu0 %v497
        %664 = vmatpush1.msra.mxu0 %v496
        %665 = vmatprep.subr.mxu0 %v499
        %666 = vmatpush1.msra.mxu0 %v498
        %667 = vmatprep.subr.mxu0 %v501
        %668 = vmatpush1.msra.mxu0 %v500
        %669 = vmatprep.subr.mxu0 %v503
        %670 = vmatpush1.msra.mxu0 %v502
        %671 = vmatprep.subr.mxu0 %v505
        %672 = vmatpush1.msra.mxu0 %v504
        %673 = vmatprep.subr.mxu0 %v507
        %674 = vmatpush1.msra.mxu0 %v506
        %675 = vmatprep.subr.mxu0 %v509
        %676 = vmatpush1.msra.mxu0 %v508
        %677 = vmatprep.subr.mxu0 %v511
        %678 = vmatpush1.msra.mxu0 %v510
        %679 = vmatprep.subr.mxu0 %v513
        %680 = vmatpush1.msra.mxu0 %v512
        %681 = vmatprep.subr.mxu0 %v515
        %682 = vmatpush1.msra.mxu0 %v514
        %683 = vmatprep.subr.mxu0 %v517
        %684 = vmatpush1.msra.mxu0 %v516
        %685 = vmatprep.subr.mxu0 %v519
        %686 = vmatpush1.msra.mxu0 %v518
        %687 = vmatprep.subr.mxu0 0.0
        %688 = vmatpush1.msra.mxu0 0.0
        %689 = vmatprep.subr.mxu0 0.0
        %690 = vmatpush1.msra.mxu0 0.0
        %691 = vmatprep.subr.mxu0 0.0
        %692 = vmatpush1.msra.mxu0 0.0
        %693 = vmatprep.subr.mxu0 0.0
        %694 = vmatpush1.msra.mxu0 0.0
        %695 = vmatprep.subr.mxu0 0.0
        %696 = vmatpush1.msra.mxu0 0.0
        %697 = vmatprep.subr.mxu0 0.0
        %698 = vmatpush1.msra.mxu0 0.0
        %699 = vmatprep.subr.mxu0 0.0
        %700 = vmatpush1.msra.mxu0 0.0
        %701 = vmatprep.subr.mxu0 0.0
        %702 = vmatpush1.msra.mxu0 0.0
        %703 = vmatprep.subr.mxu0 0.0
        %704 = vmatpush1.msra.mxu0 0.0
        %705 = vmatprep.subr.mxu0 0.0
        %706 = vmatpush1.msra.mxu0 0.0
        %707 = vmatprep.subr.mxu0 0.0
        %708 = vmatpush1.msra.mxu0 0.0
        %709 = vmatprep.subr.mxu0 0.0
        %710 = vmatpush1.msra.mxu0 0.0
        %711 = vmatprep.subr.mxu0 0.0
        %712 = vmatpush1.msra.mxu0 0.0
        %713 = vmatprep.subr.mxu0 0.0
        %714 = vmatpush1.msra.mxu0 0.0
        %715 = vmatprep.subr.mxu0 0.0
        %716 = vmatpush1.msra.mxu0 0.0
        %717 = vmatprep.subr.mxu0 0.0
        %718 = vmatpush1.msra.mxu0 0.0
        %719 = vmatprep.subr.mxu0 0.0
        %720 = vmatpush1.msra.mxu0 0.0
        %721 = vmatprep.subr.mxu0 0.0
        %722 = vmatpush1.msra.mxu0 0.0
        %723 = vmatprep.subr.mxu0 0.0
        %724 = vmatpush1.msra.mxu0 0.0
        %725 = vmatprep.subr.mxu0 0.0
        %726 = vmatpush1.msra.mxu0 0.0
        %727 = vmatprep.mubr.f32.mxu0 0.0
        %728 = vmatmul.mubr.f32.gmra.mrb[0].mxu0 %v652
        %v729 = vpop.f32.mrb[0].mxu0
        %v730 = vadd.f32 %v629, %v729
        %v731 = vpop.f32.mrb[0].mxu0
        %v732 = vadd.f32 %v631, %v731
        %733 = vmatprep.mubr.f32.mxu0 0.0
        %734 = vmatmul.mubr.f32.gmra.mrb[0].mxu0 %v655
        %v735 = vpop.f32.mrb[0].mxu0
        %v736 = vadd.f32 %v635, %v735
        %v737 = vpop.f32.mrb[0].mxu0
        %v738 = vadd.f32 %v637, %v737
        %739 = vmatprep.mubr.f32.mxu0 0.0
        %740 = vmatmul.mubr.f32.gmra.mrb[0].mxu0 %v658
        %v741 = vpop.f32.mrb[0].mxu0
        %v742 = vadd.f32 %v641, %v741
        %v743 = vpop.f32.mrb[0].mxu0
        %v744 = vadd.f32 %v643, %v743
        %745 = vmatprep.mubr.f32.mxu0 0.0
        %746 = vmatmul.mubr.f32.gmra.mrb[0].mxu0 %v661
        %v747 = vpop.f32.mrb[0].mxu0
        %v748 = vadd.f32 %v647, %v747
        %v749 = vpop.f32.mrb[0].mxu0
        %v750 = vadd.f32 %v649, %v749
        %751 = vdwg.mxu0
        %v752 = vld [vmem:[%s491 + $0x2] sm:$0xff]
        %v753 = vld [vmem:[%s491 + $0xa] sm:$0xff]
        %v754 = vld [vmem:[%s491 + $0x12] sm:$0xff]
        %v755 = vld [vmem:[%s491 + $0x1a] sm:$0xf]
        %s756 = scalar_lea.vmem %s1, 384
        %v757 = vld [vmem:[%s756] sm:$0xff]
        %v758 = vld [vmem:[%s756 + $0x8] sm:$0xff]
        %v759 = vld [vmem:[%s756 + $0x10] sm:$0xff]
        %v760 = vld [vmem:[%s756 + $0x18] sm:$0xff]
        %v761 = vld [vmem:[%s756 + $0x20] sm:$0xff]
        %v762 = vld [vmem:[%s756 + $0x28] sm:$0xff]
        %v763 = vld [vmem:[%s756 + $0x30] sm:$0xff]
        %v764 = vld [vmem:[%s756 + $0x38] sm:$0xff]
        %v765 = vld [vmem:[%s756 + $0x40] sm:$0xff]
        %v766 = vld [vmem:[%s756 + $0x48] sm:$0xff]
        %v767 = vld [vmem:[%s756 + $0x50] sm:$0xff]
        %v768 = vld [vmem:[%s756 + $0x58] sm:$0xff]
        %v769 = vld [vmem:[%s756 + $0x60] sm:$0xff]
        %v770 = vld [vmem:[%s756 + $0x68] sm:$0xff]
        %v771 = vld [vmem:[%s756 + $0x70] sm:$0xff]
        %v772 = vld [vmem:[%s756 + $0x78] sm:$0xff]
        %v773 = vld [vmem:[%s756 + $0x80] sm:$0xff]
        %v774 = vld [vmem:[%s756 + $0x88] sm:$0xff]
        %v775 = vld [vmem:[%s756 + $0x90] sm:$0xff]
        %v776 = vld [vmem:[%s756 + $0x98] sm:$0xff]
        %v777 = vld [vmem:[%s756 + $0xa0] sm:$0xff]
        %v778 = vld [vmem:[%s756 + $0xa8] sm:$0xff]
        %v779 = vld [vmem:[%s756 + $0xb0] sm:$0xff]
        %v780 = vld [vmem:[%s756 + $0xb8] sm:$0xff]
        %v782 = vsel %vm549, %v752, 0
        %v785 = vsel %vm549, %v753, 0
        %v788 = vsel %vm549, %v754, 0
        %v791 = vsel %vm549, %v755, 0
        %793 = vmatprep.subr.mxu0 %v758
        %794 = vmatpush1.msra.mxu0 %v757
        %795 = vmatprep.subr.mxu0 %v760
        %796 = vmatpush1.msra.mxu0 %v759
        %797 = vmatprep.subr.mxu0 %v762
        %798 = vmatpush1.msra.mxu0 %v761
        %799 = vmatprep.subr.mxu0 %v764
        %800 = vmatpush1.msra.mxu0 %v763
        %801 = vmatprep.subr.mxu0 %v766
        %802 = vmatpush1.msra.mxu0 %v765
        %803 = vmatprep.subr.mxu0 %v768
        %804 = vmatpush1.msra.mxu0 %v767
        %805 = vmatprep.subr.mxu0 %v770
        %806 = vmatpush1.msra.mxu0 %v769
        %807 = vmatprep.subr.mxu0 %v772
        %808 = vmatpush1.msra.mxu0 %v771
        %809 = vmatprep.subr.mxu0 %v774
        %810 = vmatpush1.msra.mxu0 %v773
        %811 = vmatprep.subr.mxu0 %v776
        %812 = vmatpush1.msra.mxu0 %v775
        %813 = vmatprep.subr.mxu0 %v778
        %814 = vmatpush1.msra.mxu0 %v777
        %815 = vmatprep.subr.mxu0 %v780
        %816 = vmatpush1.msra.mxu0 %v779
        %817 = vmatprep.subr.mxu0 0.0
        %818 = vmatpush1.msra.mxu0 0.0
        %819 = vmatprep.subr.mxu0 0.0
        %820 = vmatpush1.msra.mxu0 0.0
        %821 = vmatprep.subr.mxu0 0.0
        %822 = vmatpush1.msra.mxu0 0.0
        %823 = vmatprep.subr.mxu0 0.0
        %824 = vmatpush1.msra.mxu0 0.0
        %825 = vmatprep.subr.mxu0 0.0
        %826 = vmatpush1.msra.mxu0 0.0
        %827 = vmatprep.subr.mxu0 0.0
        %828 = vmatpush1.msra.mxu0 0.0
        %829 = vmatprep.subr.mxu0 0.0
        %830 = vmatpush1.msra.mxu0 0.0
        %831 = vmatprep.subr.mxu0 0.0
        %832 = vmatpush1.msra.mxu0 0.0
        %833 = vmatprep.subr.mxu0 0.0
        %834 = vmatpush1.msra.mxu0 0.0
        %835 = vmatprep.subr.mxu0 0.0
        %836 = vmatpush1.msra.mxu0 0.0
        %837 = vmatprep.subr.mxu0 0.0
        %838 = vmatpush1.msra.mxu0 0.0
        %839 = vmatprep.subr.mxu0 0.0
        %840 = vmatpush1.msra.mxu0 0.0
        %841 = vmatprep.subr.mxu0 0.0
        %842 = vmatpush1.msra.mxu0 0.0
        %843 = vmatprep.subr.mxu0 0.0
        %844 = vmatpush1.msra.mxu0 0.0
        %845 = vmatprep.subr.mxu0 0.0
        %846 = vmatpush1.msra.mxu0 0.0
        %847 = vmatprep.subr.mxu0 0.0
        %848 = vmatpush1.msra.mxu0 0.0
        %849 = vmatprep.subr.mxu0 0.0
        %850 = vmatpush1.msra.mxu0 0.0
        %851 = vmatprep.subr.mxu0 0.0
        %852 = vmatpush1.msra.mxu0 0.0
        %853 = vmatprep.subr.mxu0 0.0
        %854 = vmatpush1.msra.mxu0 0.0
        %855 = vmatprep.subr.mxu0 0.0
        %856 = vmatpush1.msra.mxu0 0.0
        %857 = vmatprep.mubr.f32.mxu0 0.0
        %858 = vmatmul.mubr.f32.gmra.mrb[0].mxu0 %v782
        %v859 = vpop.f32.mrb[0].mxu0
        %v860 = vadd.f32 0.0, %v859
        %v861 = vpop.f32.mrb[0].mxu0
        %v862 = vadd.f32 0.0, %v861
        %863 = vmatprep.mubr.f32.mxu0 0.0
        %864 = vmatmul.mubr.f32.gmra.mrb[0].mxu0 %v785
        %v865 = vpop.f32.mrb[0].mxu0
        %v866 = vadd.f32 0.0, %v865
        %v867 = vpop.f32.mrb[0].mxu0
        %v868 = vadd.f32 0.0, %v867
        %869 = vmatprep.mubr.f32.mxu0 0.0
        %870 = vmatmul.mubr.f32.gmra.mrb[0].mxu0 %v788
        %v871 = vpop.f32.mrb[0].mxu0
        %v872 = vadd.f32 0.0, %v871
        %v873 = vpop.f32.mrb[0].mxu0
        %v874 = vadd.f32 0.0, %v873
        %875 = vmatprep.mubr.f32.mxu0 0.0
        %876 = vmatmul.mubr.f32.gmra.mrb[0].mxu0 %v791
        %v877 = vpop.f32.mrb[0].mxu0
        %v878 = vadd.f32 0.0, %v877
        %v879 = vpop.f32.mrb[0].mxu0
        %v880 = vadd.f32 0.0, %v879
        %881 = vdwg.mxu0
        %v882 = vadd.f32 %v730, %v860
        %v883 = vadd.f32 %v732, %v862
        %v884 = vadd.f32 %v736, %v866
        %v885 = vadd.f32 %v738, %v868
        %v886 = vadd.f32 %v742, %v872
        %v887 = vadd.f32 %v744, %v874
        %v888 = vadd.f32 %v748, %v878
        %v889 = vadd.f32 %v750, %v880
        %v890 = vld [vmem:[%s491 + $0x3] sm:$0xff]
        %v891 = vld [vmem:[%s491 + $0xb] sm:$0xff]
        %v892 = vld [vmem:[%s491 + $0x13] sm:$0xff]
        %v893 = vld [vmem:[%s491 + $0x1b] sm:$0xf]
        %s894 = scalar_lea.vmem %s1, 576
        %v895 = vld [vmem:[%s894] sm:$0xff]
        %v896 = vld [vmem:[%s894 + $0x8] sm:$0xff]
        %v897 = vld [vmem:[%s894 + $0x10] sm:$0xff]
        %v898 = vld [vmem:[%s894 + $0x18] sm:$0xff]
        %v899 = vld [vmem:[%s894 + $0x20] sm:$0xff]
        %v900 = vld [vmem:[%s894 + $0x28] sm:$0xff]
        %v901 = vld [vmem:[%s894 + $0x30] sm:$0xff]
        %v902 = vld [vmem:[%s894 + $0x38] sm:$0xff]
        %v903 = vld [vmem:[%s894 + $0x40] sm:$0xff]
        %v904 = vld [vmem:[%s894 + $0x48] sm:$0xff]
        %v905 = vld [vmem:[%s894 + $0x50] sm:$0xff]
        %v906 = vld [vmem:[%s894 + $0x58] sm:$0xff]
        %v907 = vld [vmem:[%s894 + $0x60] sm:$0xff]
        %v908 = vld [vmem:[%s894 + $0x68] sm:$0xff]
        %v909 = vld [vmem:[%s894 + $0x70] sm:$0xff]
        %v910 = vld [vmem:[%s894 + $0x78] sm:$0xff]
        %v911 = vld [vmem:[%s894 + $0x80] sm:$0xff]
        %v912 = vld [vmem:[%s894 + $0x88] sm:$0xff]
        %v913 = vld [vmem:[%s894 + $0x90] sm:$0xff]
        %v914 = vld [vmem:[%s894 + $0x98] sm:$0xff]
        %v915 = vld [vmem:[%s894 + $0xa0] sm:$0xff]
        %v916 = vld [vmem:[%s894 + $0xa8] sm:$0xff]
        %v917 = vld [vmem:[%s894 + $0xb0] sm:$0xff]
        %v918 = vld [vmem:[%s894 + $0xb8] sm:$0xff]
        %v920 = vsel %vm549, %v890, 0
        %v923 = vsel %vm549, %v891, 0
        %v926 = vsel %vm549, %v892, 0
        %v929 = vsel %vm549, %v893, 0
        %931 = vmatprep.subr.mxu0 %v896
        %932 = vmatpush1.msra.mxu0 %v895
        %933 = vmatprep.subr.mxu0 %v898
        %934 = vmatpush1.msra.mxu0 %v897
        %935 = vmatprep.subr.mxu0 %v900
        %936 = vmatpush1.msra.mxu0 %v899
        %937 = vmatprep.subr.mxu0 %v902
        %938 = vmatpush1.msra.mxu0 %v901
        %939 = vmatprep.subr.mxu0 %v904
        %940 = vmatpush1.msra.mxu0 %v903
        %941 = vmatprep.subr.mxu0 %v906
        %942 = vmatpush1.msra.mxu0 %v905
        %943 = vmatprep.subr.mxu0 %v908
        %944 = vmatpush1.msra.mxu0 %v907
        %945 = vmatprep.subr.mxu0 %v910
        %946 = vmatpush1.msra.mxu0 %v909
        %947 = vmatprep.subr.mxu0 %v912
        %948 = vmatpush1.msra.mxu0 %v911
        %949 = vmatprep.subr.mxu0 %v914
        %950 = vmatpush1.msra.mxu0 %v913
        %951 = vmatprep.subr.mxu0 %v916
        %952 = vmatpush1.msra.mxu0 %v915
        %953 = vmatprep.subr.mxu0 %v918
        %954 = vmatpush1.msra.mxu0 %v917
        %955 = vmatprep.subr.mxu0 0.0
        %956 = vmatpush1.msra.mxu0 0.0
        %957 = vmatprep.subr.mxu0 0.0
        %958 = vmatpush1.msra.mxu0 0.0
        %959 = vmatprep.subr.mxu0 0.0
        %960 = vmatpush1.msra.mxu0 0.0
        %961 = vmatprep.subr.mxu0 0.0
        %962 = vmatpush1.msra.mxu0 0.0
        %963 = vmatprep.subr.mxu0 0.0
        %964 = vmatpush1.msra.mxu0 0.0
        %965 = vmatprep.subr.mxu0 0.0
        %966 = vmatpush1.msra.mxu0 0.0
        %967 = vmatprep.subr.mxu0 0.0
        %968 = vmatpush1.msra.mxu0 0.0
        %969 = vmatprep.subr.mxu0 0.0
        %970 = vmatpush1.msra.mxu0 0.0
        %971 = vmatprep.subr.mxu0 0.0
        %972 = vmatpush1.msra.mxu0 0.0
        %973 = vmatprep.subr.mxu0 0.0
        %974 = vmatpush1.msra.mxu0 0.0
        %975 = vmatprep.subr.mxu0 0.0
        %976 = vmatpush1.msra.mxu0 0.0
        %977 = vmatprep.subr.mxu0 0.0
        %978 = vmatpush1.msra.mxu0 0.0
        %979 = vmatprep.subr.mxu0 0.0
        %980 = vmatpush1.msra.mxu0 0.0
        %981 = vmatprep.subr.mxu0 0.0
        %982 = vmatpush1.msra.mxu0 0.0
        %983 = vmatprep.subr.mxu0 0.0
        %984 = vmatpush1.msra.mxu0 0.0
        %985 = vmatprep.subr.mxu0 0.0
        %986 = vmatpush1.msra.mxu0 0.0
        %987 = vmatprep.subr.mxu0 0.0
        %988 = vmatpush1.msra.mxu0 0.0
        %989 = vmatprep.subr.mxu0 0.0
        %990 = vmatpush1.msra.mxu0 0.0
        %991 = vmatprep.subr.mxu0 0.0
        %992 = vmatpush1.msra.mxu0 0.0
        %993 = vmatprep.subr.mxu0 0.0
        %994 = vmatpush1.msra.mxu0 0.0
        %995 = vmatprep.mubr.f32.mxu0 0.0
        %996 = vmatmul.mubr.f32.gmra.mrb[0].mxu0 %v920
        %v997 = vpop.f32.mrb[0].mxu0
        %v998 = vadd.f32 0.0, %v997
        %v999 = vpop.f32.mrb[0].mxu0
        %v1000 = vadd.f32 0.0, %v999
        %1001 = vmatprep.mubr.f32.mxu0 0.0
        %1002 = vmatmul.mubr.f32.gmra.mrb[0].mxu0 %v923
        %v1003 = vpop.f32.mrb[0].mxu0
        %v1004 = vadd.f32 0.0, %v1003
        %v1005 = vpop.f32.mrb[0].mxu0
        %v1006 = vadd.f32 0.0, %v1005
        %1007 = vmatprep.mubr.f32.mxu0 0.0
        %1008 = vmatmul.mubr.f32.gmra.mrb[0].mxu0 %v926
        %v1009 = vpop.f32.mrb[0].mxu0
        %v1010 = vadd.f32 0.0, %v1009
        %v1011 = vpop.f32.mrb[0].mxu0
        %v1012 = vadd.f32 0.0, %v1011
        %1013 = vmatprep.mubr.f32.mxu0 0.0
        %1014 = vmatmul.mubr.f32.gmra.mrb[0].mxu0 %v929
        %v1015 = vpop.f32.mrb[0].mxu0
        %v1016 = vadd.f32 0.0, %v1015
        %v1017 = vpop.f32.mrb[0].mxu0
        %v1018 = vadd.f32 0.0, %v1017
        %1019 = vdwg.mxu0
        %v1020 = vadd.f32 %v882, %v998
        %v1021 = vadd.f32 %v883, %v1000
        %v1022 = vadd.f32 %v884, %v1004
        %v1023 = vadd.f32 %v885, %v1006
        %v1024 = vadd.f32 %v886, %v1010
        %v1025 = vadd.f32 %v887, %v1012
        %v1026 = vadd.f32 %v888, %v1016
        %v1027 = vadd.f32 %v889, %v1018
        %v1028 = vld [vmem:[%s491 + $0x4] sm:$0xff]
        %v1029 = vld [vmem:[%s491 + $0xc] sm:$0xff]
        %v1030 = vld [vmem:[%s491 + $0x14] sm:$0xff]
        %v1031 = vld [vmem:[%s491 + $0x1c] sm:$0xf]
        %s1032 = scalar_lea.vmem %s1, 768
        %v1033 = vld [vmem:[%s1032] sm:$0xff]
        %v1034 = vld [vmem:[%s1032 + $0x8] sm:$0xff]
        %v1035 = vld [vmem:[%s1032 + $0x10] sm:$0xff]
        %v1036 = vld [vmem:[%s1032 + $0x18] sm:$0xff]
        %v1037 = vld [vmem:[%s1032 + $0x20] sm:$0xff]
        %v1038 = vld [vmem:[%s1032 + $0x28] sm:$0xff]
        %v1039 = vld [vmem:[%s1032 + $0x30] sm:$0xff]
        %v1040 = vld [vmem:[%s1032 + $0x38] sm:$0xff]
        %v1041 = vld [vmem:[%s1032 + $0x40] sm:$0xff]
        %v1042 = vld [vmem:[%s1032 + $0x48] sm:$0xff]
        %v1043 = vld [vmem:[%s1032 + $0x50] sm:$0xff]
        %v1044 = vld [vmem:[%s1032 + $0x58] sm:$0xff]
        %v1045 = vld [vmem:[%s1032 + $0x60] sm:$0xff]
        %v1046 = vld [vmem:[%s1032 + $0x68] sm:$0xff]
        %v1047 = vld [vmem:[%s1032 + $0x70] sm:$0xff]
        %v1048 = vld [vmem:[%s1032 + $0x78] sm:$0xff]
        %v1049 = vld [vmem:[%s1032 + $0x80] sm:$0xff]
        %v1050 = vld [vmem:[%s1032 + $0x88] sm:$0xff]
        %v1051 = vld [vmem:[%s1032 + $0x90] sm:$0xff]
        %v1052 = vld [vmem:[%s1032 + $0x98] sm:$0xff]
        %v1053 = vld [vmem:[%s1032 + $0xa0] sm:$0xff]
        %v1054 = vld [vmem:[%s1032 + $0xa8] sm:$0xff]
        %v1055 = vld [vmem:[%s1032 + $0xb0] sm:$0xff]
        %v1056 = vld [vmem:[%s1032 + $0xb8] sm:$0xff]
        %v1058 = vsel %vm549, %v1028, 0
        %v1061 = vsel %vm549, %v1029, 0
        %v1064 = vsel %vm549, %v1030, 0
        %v1067 = vsel %vm549, %v1031, 0
        %1069 = vmatprep.subr.mxu0 %v1034
        %1070 = vmatpush1.msra.mxu0 %v1033
        %1071 = vmatprep.subr.mxu0 %v1036
        %1072 = vmatpush1.msra.mxu0 %v1035
        %1073 = vmatprep.subr.mxu0 %v1038
        %1074 = vmatpush1.msra.mxu0 %v1037
        %1075 = vmatprep.subr.mxu0 %v1040
        %1076 = vmatpush1.msra.mxu0 %v1039
        %1077 = vmatprep.subr.mxu0 %v1042
        %1078 = vmatpush1.msra.mxu0 %v1041
        %1079 = vmatprep.subr.mxu0 %v1044
        %1080 = vmatpush1.msra.mxu0 %v1043
        %1081 = vmatprep.subr.mxu0 %v1046
        %1082 = vmatpush1.msra.mxu0 %v1045
        %1083 = vmatprep.subr.mxu0 %v1048
        %1084 = vmatpush1.msra.mxu0 %v1047
        %1085 = vmatprep.subr.mxu0 %v1050
        %1086 = vmatpush1.msra.mxu0 %v1049
        %1087 = vmatprep.subr.mxu0 %v1052
        %1088 = vmatpush1.msra.mxu0 %v1051
        %1089 = vmatprep.subr.mxu0 %v1054
        %1090 = vmatpush1.msra.mxu0 %v1053
        %1091 = vmatprep.subr.mxu0 %v1056
        %1092 = vmatpush1.msra.mxu0 %v1055
        %1093 = vmatprep.subr.mxu0 0.0
        %1094 = vmatpush1.msra.mxu0 0.0
        %1095 = vmatprep.subr.mxu0 0.0
        %1096 = vmatpush1.msra.mxu0 0.0
        %1097 = vmatprep.subr.mxu0 0.0
        %1098 = vmatpush1.msra.mxu0 0.0
        %1099 = vmatprep.subr.mxu0 0.0
        %1100 = vmatpush1.msra.mxu0 0.0
        %1101 = vmatprep.subr.mxu0 0.0
        %1102 = vmatpush1.msra.mxu0 0.0
        %1103 = vmatprep.subr.mxu0 0.0
        %1104 = vmatpush1.msra.mxu0 0.0
        %1105 = vmatprep.subr.mxu0 0.0
        %1106 = vmatpush1.msra.mxu0 0.0
        %1107 = vmatprep.subr.mxu0 0.0
        %1108 = vmatpush1.msra.mxu0 0.0
        %1109 = vmatprep.subr.mxu0 0.0
        %1110 = vmatpush1.msra.mxu0 0.0
        %1111 = vmatprep.subr.mxu0 0.0
        %1112 = vmatpush1.msra.mxu0 0.0
        %1113 = vmatprep.subr.mxu0 0.0
        %1114 = vmatpush1.msra.mxu0 0.0
        %1115 = vmatprep.subr.mxu0 0.0
        %1116 = vmatpush1.msra.mxu0 0.0
        %1117 = vmatprep.subr.mxu0 0.0
        %1118 = vmatpush1.msra.mxu0 0.0
        %1119 = vmatprep.subr.mxu0 0.0
        %1120 = vmatpush1.msra.mxu0 0.0
        %1121 = vmatprep.subr.mxu0 0.0
        %1122 = vmatpush1.msra.mxu0 0.0
        %1123 = vmatprep.subr.mxu0 0.0
        %1124 = vmatpush1.msra.mxu0 0.0
        %1125 = vmatprep.subr.mxu0 0.0
        %1126 = vmatpush1.msra.mxu0 0.0
        %1127 = vmatprep.subr.mxu0 0.0
        %1128 = vmatpush1.msra.mxu0 0.0
        %1129 = vmatprep.subr.mxu0 0.0
        %1130 = vmatpush1.msra.mxu0 0.0
        %1131 = vmatprep.subr.mxu0 0.0
        %1132 = vmatpush1.msra.mxu0 0.0
        %1133 = vmatprep.mubr.f32.mxu0 0.0
        %1134 = vmatmul.mubr.f32.gmra.mrb[0].mxu0 %v1058
        %v1135 = vpop.f32.mrb[0].mxu0
        %v1136 = vadd.f32 0.0, %v1135
        %v1137 = vpop.f32.mrb[0].mxu0
        %v1138 = vadd.f32 0.0, %v1137
        %1139 = vmatprep.mubr.f32.mxu0 0.0
        %1140 = vmatmul.mubr.f32.gmra.mrb[0].mxu0 %v1061
        %v1141 = vpop.f32.mrb[0].mxu0
        %v1142 = vadd.f32 0.0, %v1141
        %v1143 = vpop.f32.mrb[0].mxu0
        %v1144 = vadd.f32 0.0, %v1143
        %1145 = vmatprep.mubr.f32.mxu0 0.0
        %1146 = vmatmul.mubr.f32.gmra.mrb[0].mxu0 %v1064
        %v1147 = vpop.f32.mrb[0].mxu0
        %v1148 = vadd.f32 0.0, %v1147
        %v1149 = vpop.f32.mrb[0].mxu0
        %v1150 = vadd.f32 0.0, %v1149
        %1151 = vmatprep.mubr.f32.mxu0 0.0
        %1152 = vmatmul.mubr.f32.gmra.mrb[0].mxu0 %v1067
        %v1153 = vpop.f32.mrb[0].mxu0
        %v1154 = vadd.f32 0.0, %v1153
        %v1155 = vpop.f32.mrb[0].mxu0
        %v1156 = vadd.f32 0.0, %v1155
        %1157 = vdwg.mxu0
        %v1158 = vadd.f32 %v1020, %v1136
        %v1159 = vadd.f32 %v1021, %v1138
        %v1160 = vadd.f32 %v1022, %v1142
        %v1161 = vadd.f32 %v1023, %v1144
        %v1162 = vadd.f32 %v1024, %v1148
        %v1163 = vadd.f32 %v1025, %v1150
        %v1164 = vadd.f32 %v1026, %v1154
        %v1165 = vadd.f32 %v1027, %v1156
        %v1166 = vld [vmem:[%s2] sm:$0x3]
        %v1168 = vlaneseq
        %v1169 = vshrl.u32 %v1168, 7
        %v1170 = vsub.s32 0, %v1169
        %v1171 = vrot.slane %v1166, %v1170
        %v1172 = vlaneseq
        %v1173 = vshrl.u32 %v1172, 7
        %v1174 = vsub.s32 1, %v1173
        %v1175 = vrot.slane %v1166, %v1174
        %v1178 = vadd.f32 %v1158, %v1171
        %v1179 = vadd.f32 %v1159, %v1175
        %v1180 = vadd.f32 %v1160, %v1171
        %v1181 = vadd.f32 %v1161, %v1175
        %v1182 = vadd.f32 %v1162, %v1171
        %v1183 = vadd.f32 %v1163, %v1175
        %v1184 = vadd.f32 %v1164, %v1171
        %v1185 = vadd.f32 %v1165, %v1175
        %v1186 = vld [vmem:[%s3] sm:$0xff]
        %v1187 = vld [vmem:[%s3 + $0x8] sm:$0xff]
        %v1188 = vld [vmem:[%s3 + $0x10] sm:$0xff]
        %v1189 = vld [vmem:[%s3 + $0x18] sm:$0xff]
        %v1190 = vld [vmem:[%s3 + $0x20] sm:$0xff]
        %v1191 = vld [vmem:[%s3 + $0x28] sm:$0xff]
        %v1192 = vld [vmem:[%s3 + $0x30] sm:$0xff]
        %v1193 = vld [vmem:[%s3 + $0x38] sm:$0xff]
        %v1194 = vld [vmem:[%s3 + $0x40] sm:$0xff]
        %v1195 = vld [vmem:[%s3 + $0x48] sm:$0xff]
        %v1196 = vld [vmem:[%s3 + $0x50] sm:$0xff]
        %v1197 = vld [vmem:[%s3 + $0x58] sm:$0xff]
        %v1198 = vld [vmem:[%s3 + $0x60] sm:$0xff]
        %v1199 = vld [vmem:[%s3 + $0x68] sm:$0xff]
        %v1200 = vld [vmem:[%s3 + $0x70] sm:$0xff]
        %v1201 = vld [vmem:[%s3 + $0x78] sm:$0xff]
        %v1202 = vld [vmem:[%s3 + $0x80] sm:$0xff]
        %v1203 = vld [vmem:[%s3 + $0x88] sm:$0xff]
        %v1204 = vld [vmem:[%s3 + $0x90] sm:$0xff]
        %v1205 = vld [vmem:[%s3 + $0x98] sm:$0xff]
        %v1206 = vld [vmem:[%s3 + $0xa0] sm:$0xff]
        %vm1207 = vcmask 326656
        %v1209 = vsel %vm1207, %v1179, 0
        %v1212 = vsel %vm1207, %v1181, 0
        %v1215 = vsel %vm1207, %v1183, 0
        %v1218 = vsel %vm1207, %v1185, 0
        %1220 = vmatprep.subr.mxu0 0.0
        %1221 = vmatpush1.msra.mxu0 %v1186
        %1222 = vmatprep.subr.mxu0 0.0
        %1223 = vmatpush1.msra.mxu0 %v1187
        %1224 = vmatprep.subr.mxu0 0.0
        %1225 = vmatpush1.msra.mxu0 %v1188
        %1226 = vmatprep.subr.mxu0 0.0
        %1227 = vmatpush1.msra.mxu0 %v1189
        %1228 = vmatprep.subr.mxu0 0.0
        %1229 = vmatpush1.msra.mxu0 %v1190
        %1230 = vmatprep.subr.mxu0 0.0
        %1231 = vmatpush1.msra.mxu0 %v1191
        %1232 = vmatprep.subr.mxu0 0.0
        %1233 = vmatpush1.msra.mxu0 %v1192
        %1234 = vmatprep.subr.mxu0 0.0
        %1235 = vmatpush1.msra.mxu0 %v1193
        %1236 = vmatprep.subr.mxu0 0.0
        %1237 = vmatpush1.msra.mxu0 %v1194
        %1238 = vmatprep.subr.mxu0 0.0
        %1239 = vmatpush1.msra.mxu0 %v1195
        %1240 = vmatprep.subr.mxu0 0.0
        %1241 = vmatpush1.msra.mxu0 %v1196
        %1242 = vmatprep.subr.mxu0 0.0
        %1243 = vmatpush1.msra.mxu0 %v1197
        %1244 = vmatprep.subr.mxu0 0.0
        %1245 = vmatpush1.msra.mxu0 %v1198
        %1246 = vmatprep.subr.mxu0 0.0
        %1247 = vmatpush1.msra.mxu0 %v1199
        %1248 = vmatprep.subr.mxu0 0.0
        %1249 = vmatpush1.msra.mxu0 %v1200
        %1250 = vmatprep.subr.mxu0 0.0
        %1251 = vmatpush1.msra.mxu0 %v1201
        %1252 = vmatprep.subr.mxu0 0.0
        %1253 = vmatpush1.msra.mxu0 %v1202
        %1254 = vmatprep.subr.mxu0 0.0
        %1255 = vmatpush1.msra.mxu0 %v1203
        %1256 = vmatprep.subr.mxu0 0.0
        %1257 = vmatpush1.msra.mxu0 %v1204
        %1258 = vmatprep.subr.mxu0 0.0
        %1259 = vmatpush1.msra.mxu0 %v1205
        %1260 = vmatprep.subr.mxu0 0.0
        %1261 = vmatpush1.msra.mxu0 %v1206
        %1262 = vmatprep.subr.mxu0 0.0
        %1263 = vmatpush1.msra.mxu0 0.0
        %1264 = vmatprep.subr.mxu0 0.0
        %1265 = vmatpush1.msra.mxu0 0.0
        %1266 = vmatprep.subr.mxu0 0.0
        %1267 = vmatpush1.msra.mxu0 0.0
        %1268 = vmatprep.subr.mxu0 0.0
        %1269 = vmatpush1.msra.mxu0 0.0
        %1270 = vmatprep.subr.mxu0 0.0
        %1271 = vmatpush1.msra.mxu0 0.0
        %1272 = vmatprep.subr.mxu0 0.0
        %1273 = vmatpush1.msra.mxu0 0.0
        %1274 = vmatprep.subr.mxu0 0.0
        %1275 = vmatpush1.msra.mxu0 0.0
        %1276 = vmatprep.subr.mxu0 0.0
        %1277 = vmatpush1.msra.mxu0 0.0
        %1278 = vmatprep.subr.mxu0 0.0
        %1279 = vmatpush1.msra.mxu0 0.0
        %1280 = vmatprep.subr.mxu0 0.0
        %1281 = vmatpush1.msra.mxu0 0.0
        %1282 = vmatprep.subr.mxu0 0.0
        %1283 = vmatpush1.msra.mxu0 0.0
        %1284 = vmatprep.mubr.f32.mxu0 %v1209
        %1285 = vmatmul.mubr.f32.gmra.mrb[0].mxu0 %v1178
        %v1286 = vpop.f32.mrb[0].mxu0
        %v1287 = vadd.f32 0.0, %v1286
        %v1288 = vpop.f32.mrb[0].mxu0
        %1289 = vmatprep.mubr.f32.mxu0 %v1212
        %1290 = vmatmul.mubr.f32.gmra.mrb[0].mxu0 %v1180
        %v1291 = vpop.f32.mrb[0].mxu0
        %v1292 = vadd.f32 0.0, %v1291
        %v1293 = vpop.f32.mrb[0].mxu0
        %1294 = vmatprep.mubr.f32.mxu0 %v1215
        %1295 = vmatmul.mubr.f32.gmra.mrb[0].mxu0 %v1182
        %v1296 = vpop.f32.mrb[0].mxu0
        %v1297 = vadd.f32 0.0, %v1296
        %v1298 = vpop.f32.mrb[0].mxu0
        %1299 = vmatprep.mubr.f32.mxu0 %v1218
        %1300 = vmatmul.mubr.f32.gmra.mrb[0].mxu0 %v1184
        %v1301 = vpop.f32.mrb[0].mxu0
        %v1302 = vadd.f32 0.0, %v1301
        %v1303 = vpop.f32.mrb[0].mxu0
        %1304 = vdwg.mxu0
        %s1305 = scalar_lea.vmem %s3, 168
        %v1306 = vld [vmem:[%s1305] sm:$0xff]
        %v1307 = vld [vmem:[%s1305 + $0x8] sm:$0xff]
        %v1308 = vld [vmem:[%s1305 + $0x10] sm:$0xff]
        %v1309 = vld [vmem:[%s1305 + $0x18] sm:$0xff]
        %v1310 = vld [vmem:[%s1305 + $0x20] sm:$0xff]
        %v1311 = vld [vmem:[%s1305 + $0x28] sm:$0xff]
        %v1312 = vld [vmem:[%s1305 + $0x30] sm:$0xff]
        %v1313 = vld [vmem:[%s1305 + $0x38] sm:$0xff]
        %v1314 = vld [vmem:[%s1305 + $0x40] sm:$0xff]
        %v1315 = vld [vmem:[%s1305 + $0x48] sm:$0xff]
        %v1316 = vld [vmem:[%s1305 + $0x50] sm:$0xff]
        %v1317 = vld [vmem:[%s1305 + $0x58] sm:$0xff]
        %v1318 = vld [vmem:[%s1305 + $0x60] sm:$0xff]
        %v1319 = vld [vmem:[%s1305 + $0x68] sm:$0xff]
        %v1320 = vld [vmem:[%s1305 + $0x70] sm:$0xff]
        %v1321 = vld [vmem:[%s1305 + $0x78] sm:$0xff]
        %v1322 = vld [vmem:[%s1305 + $0x80] sm:$0xff]
        %v1323 = vld [vmem:[%s1305 + $0x88] sm:$0xff]
        %v1324 = vld [vmem:[%s1305 + $0x90] sm:$0xff]
        %v1325 = vld [vmem:[%s1305 + $0x98] sm:$0xff]
        %v1326 = vld [vmem:[%s1305 + $0xa0] sm:$0xff]
        %1327 = vmatprep.subr.mxu0 0.0
        %1328 = vmatpush1.msra.mxu0 %v1306
        %1329 = vmatprep.subr.mxu0 0.0
        %1330 = vmatpush1.msra.mxu0 %v1307
        %1331 = vmatprep.subr.mxu0 0.0
        %1332 = vmatpush1.msra.mxu0 %v1308
        %1333 = vmatprep.subr.mxu0 0.0
        %1334 = vmatpush1.msra.mxu0 %v1309
        %1335 = vmatprep.subr.mxu0 0.0
        %1336 = vmatpush1.msra.mxu0 %v1310
        %1337 = vmatprep.subr.mxu0 0.0
        %1338 = vmatpush1.msra.mxu0 %v1311
        %1339 = vmatprep.subr.mxu0 0.0
        %1340 = vmatpush1.msra.mxu0 %v1312
        %1341 = vmatprep.subr.mxu0 0.0
        %1342 = vmatpush1.msra.mxu0 %v1313
        %1343 = vmatprep.subr.mxu0 0.0
        %1344 = vmatpush1.msra.mxu0 %v1314
        %1345 = vmatprep.subr.mxu0 0.0
        %1346 = vmatpush1.msra.mxu0 %v1315
        %1347 = vmatprep.subr.mxu0 0.0
        %1348 = vmatpush1.msra.mxu0 %v1316
        %1349 = vmatprep.subr.mxu0 0.0
        %1350 = vmatpush1.msra.mxu0 %v1317
        %1351 = vmatprep.subr.mxu0 0.0
        %1352 = vmatpush1.msra.mxu0 %v1318
        %1353 = vmatprep.subr.mxu0 0.0
        %1354 = vmatpush1.msra.mxu0 %v1319
        %1355 = vmatprep.subr.mxu0 0.0
        %1356 = vmatpush1.msra.mxu0 %v1320
        %1357 = vmatprep.subr.mxu0 0.0
        %1358 = vmatpush1.msra.mxu0 %v1321
        %1359 = vmatprep.subr.mxu0 0.0
        %1360 = vmatpush1.msra.mxu0 %v1322
        %1361 = vmatprep.subr.mxu0 0.0
        %1362 = vmatpush1.msra.mxu0 %v1323
        %1363 = vmatprep.subr.mxu0 0.0
        %1364 = vmatpush1.msra.mxu0 %v1324
        %1365 = vmatprep.subr.mxu0 0.0
        %1366 = vmatpush1.msra.mxu0 %v1325
        %1367 = vmatprep.subr.mxu0 0.0
        %1368 = vmatpush1.msra.mxu0 %v1326
        %1369 = vmatprep.subr.mxu0 0.0
        %1370 = vmatpush1.msra.mxu0 0.0
        %1371 = vmatprep.subr.mxu0 0.0
        %1372 = vmatpush1.msra.mxu0 0.0
        %1373 = vmatprep.subr.mxu0 0.0
        %1374 = vmatpush1.msra.mxu0 0.0
        %1375 = vmatprep.subr.mxu0 0.0
        %1376 = vmatpush1.msra.mxu0 0.0
        %1377 = vmatprep.subr.mxu0 0.0
        %1378 = vmatpush1.msra.mxu0 0.0
        %1379 = vmatprep.subr.mxu0 0.0
        %1380 = vmatpush1.msra.mxu0 0.0
        %1381 = vmatprep.subr.mxu0 0.0
        %1382 = vmatpush1.msra.mxu0 0.0
        %1383 = vmatprep.subr.mxu0 0.0
        %1384 = vmatpush1.msra.mxu0 0.0
        %1385 = vmatprep.subr.mxu0 0.0
        %1386 = vmatpush1.msra.mxu0 0.0
        %1387 = vmatprep.subr.mxu0 0.0
        %1388 = vmatpush1.msra.mxu0 0.0
        %1389 = vmatprep.subr.mxu0 0.0
        %1390 = vmatpush1.msra.mxu0 0.0
        %1391 = vmatprep.mubr.f32.mxu0 %v1209
        %1392 = vmatmul.mubr.f32.gmra.mrb[0].mxu0 %v1178
        %v1393 = vpop.f32.mrb[0].mxu0
        %v1394 = vadd.f32 0.0, %v1393
        %v1395 = vpop.f32.mrb[0].mxu0
        %1396 = vmatprep.mubr.f32.mxu0 %v1212
        %1397 = vmatmul.mubr.f32.gmra.mrb[0].mxu0 %v1180
        %v1398 = vpop.f32.mrb[0].mxu0
        %v1399 = vadd.f32 0.0, %v1398
        %v1400 = vpop.f32.mrb[0].mxu0
        %1401 = vmatprep.mubr.f32.mxu0 %v1215
        %1402 = vmatmul.mubr.f32.gmra.mrb[0].mxu0 %v1182
        %v1403 = vpop.f32.mrb[0].mxu0
        %v1404 = vadd.f32 0.0, %v1403
        %v1405 = vpop.f32.mrb[0].mxu0
        %1406 = vmatprep.mubr.f32.mxu0 %v1218
        %1407 = vmatmul.mubr.f32.gmra.mrb[0].mxu0 %v1184
        %v1408 = vpop.f32.mrb[0].mxu0
        %v1409 = vadd.f32 0.0, %v1408
        %v1410 = vpop.f32.mrb[0].mxu0
        %1411 = vdwg.mxu0
        %v1412 = vmax.f32 %v1287, %v1394
        %v1413 = vmax.f32 %v1292, %v1399
        %v1414 = vmax.f32 %v1297, %v1404
        %v1415 = vmax.f32 %v1302, %v1409
        %v1416 = vld [vmem:[%s4] sm:$0xff]
        %v1417 = vld [vmem:[%s4 + $0x8] sm:$0x3f]
        %vm1418 = vcmask 228352
        %v1420 = vsel %vm1418, %v1416, 0
        %v1423 = vsel %vm1418, %v1417, 0
        %vm1425 = vcmask 1043456
        %v1427 = vsel %vm1425, %v1415, 0
        %1429 = vmatprep.subr.mxu0 0.0
        %1430 = vmatpush1.msra.mxu0 %v1412
        %1431 = vmatprep.subr.mxu0 0.0
        %1432 = vmatpush1.msra.mxu0 %v1413
        %1433 = vmatprep.subr.mxu0 0.0
        %1434 = vmatpush1.msra.mxu0 %v1414
        %1435 = vmatprep.subr.mxu0 0.0
        %1436 = vmatpush1.msra.mxu0 %v1427
        %1437 = vmatprep.subr.mxu0 0.0
        %1438 = vmatpush1.msra.mxu0 0.0
        %1439 = vmatprep.subr.mxu0 0.0
        %1440 = vmatpush1.msra.mxu0 0.0
        %1441 = vmatprep.subr.mxu0 0.0
        %1442 = vmatpush1.msra.mxu0 0.0
        %1443 = vmatprep.subr.mxu0 0.0
        %1444 = vmatpush1.msra.mxu0 0.0
        %1445 = vmatprep.subr.mxu0 0.0
        %1446 = vmatpush1.msra.mxu0 0.0
        %1447 = vmatprep.subr.mxu0 0.0
        %1448 = vmatpush1.msra.mxu0 0.0
        %1449 = vmatprep.subr.mxu0 0.0
        %1450 = vmatpush1.msra.mxu0 0.0
        %1451 = vmatprep.subr.mxu0 0.0
        %1452 = vmatpush1.msra.mxu0 0.0
        %1453 = vmatprep.subr.mxu0 0.0
        %1454 = vmatpush1.msra.mxu0 0.0
        %1455 = vmatprep.subr.mxu0 0.0
        %1456 = vmatpush1.msra.mxu0 0.0
        %1457 = vmatprep.subr.mxu0 0.0
        %1458 = vmatpush1.msra.mxu0 0.0
        %1459 = vmatprep.subr.mxu0 0.0
        %1460 = vmatpush1.msra.mxu0 0.0
        %1461 = vmatprep.subr.mxu0 0.0
        %1462 = vmatpush1.msra.mxu0 0.0
        %1463 = vmatprep.subr.mxu0 0.0
        %1464 = vmatpush1.msra.mxu0 0.0
        %1465 = vmatprep.subr.mxu0 0.0
        %1466 = vmatpush1.msra.mxu0 0.0
        %1467 = vmatprep.subr.mxu0 0.0
        %1468 = vmatpush1.msra.mxu0 0.0
        %1469 = vmatprep.subr.mxu0 0.0
        %1470 = vmatpush1.msra.mxu0 0.0
        %1471 = vmatprep.subr.mxu0 0.0
        %1472 = vmatpush1.msra.mxu0 0.0
        %1473 = vmatprep.subr.mxu0 0.0
        %1474 = vmatpush1.msra.mxu0 0.0
        %1475 = vmatprep.subr.mxu0 0.0
        %1476 = vmatpush1.msra.mxu0 0.0
        %1477 = vmatprep.subr.mxu0 0.0
        %1478 = vmatpush1.msra.mxu0 0.0
        %1479 = vmatprep.subr.mxu0 0.0
        %1480 = vmatpush1.msra.mxu0 0.0
        %1481 = vmatprep.subr.mxu0 0.0
        %1482 = vmatpush1.msra.mxu0 0.0
        %1483 = vmatprep.subr.mxu0 0.0
        %1484 = vmatpush1.msra.mxu0 0.0
        %1485 = vmatprep.subr.mxu0 0.0
        %1486 = vmatpush1.msra.mxu0 0.0
        %1487 = vmatprep.subr.mxu0 0.0
        %1488 = vmatpush1.msra.mxu0 0.0
        %1489 = vmatprep.subr.mxu0 0.0
        %1490 = vmatpush1.msra.mxu0 0.0
        %1491 = vmatprep.subr.mxu0 0.0
        %1492 = vmatpush1.msra.mxu0 0.0
        %1493 = vmatprep.mubr.f32.mxu0 0.0
        %1494 = vmatmul.mubr.f32.gmra.mrb[0].mxu0 %v1420
        %v1495 = vpop.f32.mrb[0].mxu0
        %v1496 = vadd.f32 0.0, %v1495
        %v1497 = vpop.f32.mrb[0].mxu0
        %1498 = vmatprep.mubr.f32.mxu0 0.0
        %1499 = vmatmul.mubr.f32.gmra.mrb[0].mxu0 %v1423
        %v1500 = vpop.f32.mrb[0].mxu0
        %v1501 = vadd.f32 0.0, %v1500
        %v1502 = vpop.f32.mrb[0].mxu0
        %1503 = vdwg.mxu0
        %s1504 = scalar_lea.vmem %s4, 16
        %v1505 = vld [vmem:[%s1504] sm:$0xff]
        %v1506 = vld [vmem:[%s1504 + $0x8] sm:$0x3f]
        %v1508 = vsel %vm1418, %v1505, 0
        %v1511 = vsel %vm1418, %v1506, 0
        %1513 = vmatprep.subr.mxu0 0.0
        %1514 = vmatpush1.msra.mxu0 %v1412
        %1515 = vmatprep.subr.mxu0 0.0
        %1516 = vmatpush1.msra.mxu0 %v1413
        %1517 = vmatprep.subr.mxu0 0.0
        %1518 = vmatpush1.msra.mxu0 %v1414
        %1519 = vmatprep.subr.mxu0 0.0
        %1520 = vmatpush1.msra.mxu0 %v1427
        %1521 = vmatprep.subr.mxu0 0.0
        %1522 = vmatpush1.msra.mxu0 0.0
        %1523 = vmatprep.subr.mxu0 0.0
        %1524 = vmatpush1.msra.mxu0 0.0
        %1525 = vmatprep.subr.mxu0 0.0
        %1526 = vmatpush1.msra.mxu0 0.0
        %1527 = vmatprep.subr.mxu0 0.0
        %1528 = vmatpush1.msra.mxu0 0.0
        %1529 = vmatprep.subr.mxu0 0.0
        %1530 = vmatpush1.msra.mxu0 0.0
        %1531 = vmatprep.subr.mxu0 0.0
        %1532 = vmatpush1.msra.mxu0 0.0
        %1533 = vmatprep.subr.mxu0 0.0
        %1534 = vmatpush1.msra.mxu0 0.0
        %1535 = vmatprep.subr.mxu0 0.0
        %1536 = vmatpush1.msra.mxu0 0.0
        %1537 = vmatprep.subr.mxu0 0.0
        %1538 = vmatpush1.msra.mxu0 0.0
        %1539 = vmatprep.subr.mxu0 0.0
        %1540 = vmatpush1.msra.mxu0 0.0
        %1541 = vmatprep.subr.mxu0 0.0
        %1542 = vmatpush1.msra.mxu0 0.0
        %1543 = vmatprep.subr.mxu0 0.0
        %1544 = vmatpush1.msra.mxu0 0.0
        %1545 = vmatprep.subr.mxu0 0.0
        %1546 = vmatpush1.msra.mxu0 0.0
        %1547 = vmatprep.subr.mxu0 0.0
        %1548 = vmatpush1.msra.mxu0 0.0
        %1549 = vmatprep.subr.mxu0 0.0
        %1550 = vmatpush1.msra.mxu0 0.0
        %1551 = vmatprep.subr.mxu0 0.0
        %1552 = vmatpush1.msra.mxu0 0.0
        %1553 = vmatprep.subr.mxu0 0.0
        %1554 = vmatpush1.msra.mxu0 0.0
        %1555 = vmatprep.subr.mxu0 0.0
        %1556 = vmatpush1.msra.mxu0 0.0
        %1557 = vmatprep.subr.mxu0 0.0
        %1558 = vmatpush1.msra.mxu0 0.0
        %1559 = vmatprep.subr.mxu0 0.0
        %1560 = vmatpush1.msra.mxu0 0.0
        %1561 = vmatprep.subr.mxu0 0.0
        %1562 = vmatpush1.msra.mxu0 0.0
        %1563 = vmatprep.subr.mxu0 0.0
        %1564 = vmatpush1.msra.mxu0 0.0
        %1565 = vmatprep.subr.mxu0 0.0
        %1566 = vmatpush1.msra.mxu0 0.0
        %1567 = vmatprep.subr.mxu0 0.0
        %1568 = vmatpush1.msra.mxu0 0.0
        %1569 = vmatprep.subr.mxu0 0.0
        %1570 = vmatpush1.msra.mxu0 0.0
        %1571 = vmatprep.subr.mxu0 0.0
        %1572 = vmatpush1.msra.mxu0 0.0
        %1573 = vmatprep.subr.mxu0 0.0
        %1574 = vmatpush1.msra.mxu0 0.0
        %1575 = vmatprep.subr.mxu0 0.0
        %1576 = vmatpush1.msra.mxu0 0.0
        %1577 = vmatprep.mubr.f32.mxu0 0.0
        %1578 = vmatmul.mubr.f32.gmra.mrb[0].mxu0 %v1508
        %v1579 = vpop.f32.mrb[0].mxu0
        %v1580 = vadd.f32 0.0, %v1579
        %v1581 = vpop.f32.mrb[0].mxu0
        %1582 = vmatprep.mubr.f32.mxu0 0.0
        %1583 = vmatmul.mubr.f32.gmra.mrb[0].mxu0 %v1511
        %v1584 = vpop.f32.mrb[0].mxu0
        %v1585 = vadd.f32 0.0, %v1584
        %v1586 = vpop.f32.mrb[0].mxu0
        %1587 = vdwg.mxu0
        %v1588 = vmax.f32 %v1496, %v1580
        %v1589 = vmax.f32 %v1501, %v1585
        %v1590 = vmax.f32 %v1588, 0.0
        %v1591 = vmax.f32 %v1589, 0.0
        %vm1592 = vcmask 687104
        %1593 = vst.msk [vmem:[#allocation2] sm:$0xff] %vm1592, %v1590
        %vm1594 = vcmask 685056
        %1595 = vst.msk [vmem:[#allocation2 + $0x8] sm:$0x3f] %vm1594, %v1591
        %v1596 = vld [vmem:[#allocation2] sm:$0xff]
        %v1597 = vld [vmem:[#allocation2 + $0x8] sm:$0x3]
        %v1598 = vld [vmem:[%s5] sm:$0xff]
        %v1599 = vld [vmem:[%s5 + $0x8] sm:$0xff]
        %v1600 = vld [vmem:[%s5 + $0x10] sm:$0xff]
        %v1601 = vld [vmem:[%s5 + $0x18] sm:$0xff]
        %v1602 = vld [vmem:[%s5 + $0x20] sm:$0xff]
        %v1603 = vld [vmem:[%s5 + $0x28] sm:$0xff]
        %v1604 = vld [vmem:[%s5 + $0x30] sm:$0xff]
        %v1605 = vld [vmem:[%s5 + $0x38] sm:$0xff]
        %v1606 = vld [vmem:[%s5 + $0x40] sm:$0xff]
        %v1607 = vld [vmem:[%s5 + $0x48] sm:$0xff]
        %v1608 = vld [vmem:[%s5 + $0x50] sm:$0xf]
        %v1609 = vld [vmem:[#allocation2 + $0x1] sm:$0xff]
        %v1610 = vld [vmem:[#allocation2 + $0x9] sm:$0x3]
        %s1611 = scalar_lea.vmem %s5, 88
        %v1612 = vld [vmem:[%s1611] sm:$0xff]
        %v1613 = vld [vmem:[%s1611 + $0x8] sm:$0xff]
        %v1614 = vld [vmem:[%s1611 + $0x10] sm:$0xff]
        %v1615 = vld [vmem:[%s1611 + $0x18] sm:$0xff]
        %v1616 = vld [vmem:[%s1611 + $0x20] sm:$0xff]
        %v1617 = vld [vmem:[%s1611 + $0x28] sm:$0xff]
        %v1618 = vld [vmem:[%s1611 + $0x30] sm:$0xff]
        %v1619 = vld [vmem:[%s1611 + $0x38] sm:$0xff]
        %v1620 = vld [vmem:[%s1611 + $0x40] sm:$0xff]
        %v1621 = vld [vmem:[%s1611 + $0x48] sm:$0xff]
        %v1622 = vld [vmem:[%s1611 + $0x50] sm:$0xf]
        %v1624 = vsel %vm1592, %v1609, 0
        %v1627 = vsel %vm1592, %v1610, 0
        %v1630 = vsel %vm1425, %v1622, 0
        %1632 = vmatprep.subr.mxu0 0.0
        %1633 = vmatpush1.msra.mxu0 %v1612
        %1634 = vmatprep.subr.mxu0 0.0
        %1635 = vmatpush1.msra.mxu0 %v1613
        %1636 = vmatprep.subr.mxu0 0.0
        %1637 = vmatpush1.msra.mxu0 %v1614
        %1638 = vmatprep.subr.mxu0 0.0
        %1639 = vmatpush1.msra.mxu0 %v1615
        %1640 = vmatprep.subr.mxu0 0.0
        %1641 = vmatpush1.msra.mxu0 %v1616
        %1642 = vmatprep.subr.mxu0 0.0
        %1643 = vmatpush1.msra.mxu0 %v1617
        %1644 = vmatprep.subr.mxu0 0.0
        %1645 = vmatpush1.msra.mxu0 %v1618
        %1646 = vmatprep.subr.mxu0 0.0
        %1647 = vmatpush1.msra.mxu0 %v1619
        %1648 = vmatprep.subr.mxu0 0.0
        %1649 = vmatpush1.msra.mxu0 %v1620
        %1650 = vmatprep.subr.mxu0 0.0
        %1651 = vmatpush1.msra.mxu0 %v1621
        %1652 = vmatprep.subr.mxu0 0.0
        %1653 = vmatpush1.msra.mxu0 %v1630
        %1654 = vmatprep.subr.mxu0 0.0
        %1655 = vmatpush1.msra.mxu0 0.0
        %1656 = vmatprep.subr.mxu0 0.0
        %1657 = vmatpush1.msra.mxu0 0.0
        %1658 = vmatprep.subr.mxu0 0.0
        %1659 = vmatpush1.msra.mxu0 0.0
        %1660 = vmatprep.subr.mxu0 0.0
        %1661 = vmatpush1.msra.mxu0 0.0
        %1662 = vmatprep.subr.mxu0 0.0
        %1663 = vmatpush1.msra.mxu0 0.0
        %1664 = vmatprep.subr.mxu0 0.0
        %1665 = vmatpush1.msra.mxu0 0.0
        %1666 = vmatprep.subr.mxu0 0.0
        %1667 = vmatpush1.msra.mxu0 0.0
        %1668 = vmatprep.subr.mxu0 0.0
        %1669 = vmatpush1.msra.mxu0 0.0
        %1670 = vmatprep.subr.mxu0 0.0
        %1671 = vmatpush1.msra.mxu0 0.0
        %1672 = vmatprep.subr.mxu0 0.0
        %1673 = vmatpush1.msra.mxu0 0.0
        %1674 = vmatprep.subr.mxu0 0.0
        %1675 = vmatpush1.msra.mxu0 0.0
        %1676 = vmatprep.subr.mxu0 0.0
        %1677 = vmatpush1.msra.mxu0 0.0
        %1678 = vmatprep.subr.mxu0 0.0
        %1679 = vmatpush1.msra.mxu0 0.0
        %1680 = vmatprep.subr.mxu0 0.0
        %1681 = vmatpush1.msra.mxu0 0.0
        %1682 = vmatprep.subr.mxu0 0.0
        %1683 = vmatpush1.msra.mxu0 0.0
        %1684 = vmatprep.subr.mxu0 0.0
        %1685 = vmatpush1.msra.mxu0 0.0
        %1686 = vmatprep.subr.mxu0 0.0
        %1687 = vmatpush1.msra.mxu0 0.0
        %1688 = vmatprep.subr.mxu0 0.0
        %1689 = vmatpush1.msra.mxu0 0.0
        %1690 = vmatprep.subr.mxu0 0.0
        %1691 = vmatpush1.msra.mxu0 0.0
        %1692 = vmatprep.subr.mxu0 0.0
        %1693 = vmatpush1.msra.mxu0 0.0
        %1694 = vmatprep.subr.mxu0 0.0
        %1695 = vmatpush1.msra.mxu0 0.0
        %1696 = vmatprep.mubr.f32.mxu0 0.0
        %1697 = vmatmul.mubr.f32.gmra.mrb[0].mxu0 %v1624
        %v1698 = vpop.f32.mrb[0].mxu0
        %v1699 = vadd.f32 0.0, %v1698
        %v1700 = vpop.f32.mrb[0].mxu0
        %1701 = vmatprep.mubr.f32.mxu0 0.0
        %1702 = vmatmul.mubr.f32.gmra.mrb[0].mxu0 %v1627
        %v1703 = vpop.f32.mrb[0].mxu0
        %v1704 = vadd.f32 0.0, %v1703
        %v1705 = vpop.f32.mrb[0].mxu0
        %1706 = vdwg.mxu0
        %v1708 = vsel %vm1592, %v1596, 0
        %v1711 = vsel %vm1592, %v1597, 0
        %v1714 = vsel %vm1425, %v1608, 0
        %1716 = vmatprep.subr.mxu0 0.0
        %1717 = vmatpush1.msra.mxu0 %v1598
        %1718 = vmatprep.subr.mxu0 0.0
        %1719 = vmatpush1.msra.mxu0 %v1599
        %1720 = vmatprep.subr.mxu0 0.0
        %1721 = vmatpush1.msra.mxu0 %v1600
        %1722 = vmatprep.subr.mxu0 0.0
        %1723 = vmatpush1.msra.mxu0 %v1601
        %1724 = vmatprep.subr.mxu0 0.0
        %1725 = vmatpush1.msra.mxu0 %v1602
        %1726 = vmatprep.subr.mxu0 0.0
        %1727 = vmatpush1.msra.mxu0 %v1603
        %1728 = vmatprep.subr.mxu0 0.0
        %1729 = vmatpush1.msra.mxu0 %v1604
        %1730 = vmatprep.subr.mxu0 0.0
        %1731 = vmatpush1.msra.mxu0 %v1605
        %1732 = vmatprep.subr.mxu0 0.0
        %1733 = vmatpush1.msra.mxu0 %v1606
        %1734 = vmatprep.subr.mxu0 0.0
        %1735 = vmatpush1.msra.mxu0 %v1607
        %1736 = vmatprep.subr.mxu0 0.0
        %1737 = vmatpush1.msra.mxu0 %v1714
        %1738 = vmatprep.subr.mxu0 0.0
        %1739 = vmatpush1.msra.mxu0 0.0
        %1740 = vmatprep.subr.mxu0 0.0
        %1741 = vmatpush1.msra.mxu0 0.0
        %1742 = vmatprep.subr.mxu0 0.0
        %1743 = vmatpush1.msra.mxu0 0.0
        %1744 = vmatprep.subr.mxu0 0.0
        %1745 = vmatpush1.msra.mxu0 0.0
        %1746 = vmatprep.subr.mxu0 0.0
        %1747 = vmatpush1.msra.mxu0 0.0
        %1748 = vmatprep.subr.mxu0 0.0
        %1749 = vmatpush1.msra.mxu0 0.0
        %1750 = vmatprep.subr.mxu0 0.0
        %1751 = vmatpush1.msra.mxu0 0.0
        %1752 = vmatprep.subr.mxu0 0.0
        %1753 = vmatpush1.msra.mxu0 0.0
        %1754 = vmatprep.subr.mxu0 0.0
        %1755 = vmatpush1.msra.mxu0 0.0
        %1756 = vmatprep.subr.mxu0 0.0
        %1757 = vmatpush1.msra.mxu0 0.0
        %1758 = vmatprep.subr.mxu0 0.0
        %1759 = vmatpush1.msra.mxu0 0.0
        %1760 = vmatprep.subr.mxu0 0.0
        %1761 = vmatpush1.msra.mxu0 0.0
        %1762 = vmatprep.subr.mxu0 0.0
        %1763 = vmatpush1.msra.mxu0 0.0
        %1764 = vmatprep.subr.mxu0 0.0
        %1765 = vmatpush1.msra.mxu0 0.0
        %1766 = vmatprep.subr.mxu0 0.0
        %1767 = vmatpush1.msra.mxu0 0.0
        %1768 = vmatprep.subr.mxu0 0.0
        %1769 = vmatpush1.msra.mxu0 0.0
        %1770 = vmatprep.subr.mxu0 0.0
        %1771 = vmatpush1.msra.mxu0 0.0
        %1772 = vmatprep.subr.mxu0 0.0
        %1773 = vmatpush1.msra.mxu0 0.0
        %1774 = vmatprep.subr.mxu0 0.0
        %1775 = vmatpush1.msra.mxu0 0.0
        %1776 = vmatprep.subr.mxu0 0.0
        %1777 = vmatpush1.msra.mxu0 0.0
        %1778 = vmatprep.subr.mxu0 0.0
        %1779 = vmatpush1.msra.mxu0 0.0
        %1780 = vmatprep.mubr.f32.mxu0 0.0
        %1781 = vmatmul.mubr.f32.gmra.mrb[0].mxu0 %v1708
        %v1782 = vpop.f32.mrb[0].mxu0
        %v1783 = vadd.f32 %v1699, %v1782
        %v1784 = vpop.f32.mrb[0].mxu0
        %1785 = vmatprep.mubr.f32.mxu0 0.0
        %1786 = vmatmul.mubr.f32.gmra.mrb[0].mxu0 %v1711
        %v1787 = vpop.f32.mrb[0].mxu0
        %v1788 = vadd.f32 %v1704, %v1787
        %v1789 = vpop.f32.mrb[0].mxu0
        %1790 = vdwg.mxu0
        %v1791 = vld [vmem:[#allocation2 + $0x2] sm:$0xff]
        %v1792 = vld [vmem:[#allocation2 + $0xa] sm:$0x3]
        %s1793 = scalar_lea.vmem %s5, 176
        %v1794 = vld [vmem:[%s1793] sm:$0xff]
        %v1795 = vld [vmem:[%s1793 + $0x8] sm:$0xff]
        %v1796 = vld [vmem:[%s1793 + $0x10] sm:$0xff]
        %v1797 = vld [vmem:[%s1793 + $0x18] sm:$0xff]
        %v1798 = vld [vmem:[%s1793 + $0x20] sm:$0xff]
        %v1799 = vld [vmem:[%s1793 + $0x28] sm:$0xff]
        %v1800 = vld [vmem:[%s1793 + $0x30] sm:$0xff]
        %v1801 = vld [vmem:[%s1793 + $0x38] sm:$0xff]
        %v1802 = vld [vmem:[%s1793 + $0x40] sm:$0xff]
        %v1803 = vld [vmem:[%s1793 + $0x48] sm:$0xff]
        %v1804 = vld [vmem:[%s1793 + $0x50] sm:$0xf]
        %v1806 = vsel %vm1592, %v1791, 0
        %v1809 = vsel %vm1592, %v1792, 0
        %v1812 = vsel %vm1425, %v1804, 0
        %1814 = vmatprep.subr.mxu0 0.0
        %1815 = vmatpush1.msra.mxu0 %v1794
        %1816 = vmatprep.subr.mxu0 0.0
        %1817 = vmatpush1.msra.mxu0 %v1795
        %1818 = vmatprep.subr.mxu0 0.0
        %1819 = vmatpush1.msra.mxu0 %v1796
        %1820 = vmatprep.subr.mxu0 0.0
        %1821 = vmatpush1.msra.mxu0 %v1797
        %1822 = vmatprep.subr.mxu0 0.0
        %1823 = vmatpush1.msra.mxu0 %v1798
        %1824 = vmatprep.subr.mxu0 0.0
        %1825 = vmatpush1.msra.mxu0 %v1799
        %1826 = vmatprep.subr.mxu0 0.0
        %1827 = vmatpush1.msra.mxu0 %v1800
        %1828 = vmatprep.subr.mxu0 0.0
        %1829 = vmatpush1.msra.mxu0 %v1801
        %1830 = vmatprep.subr.mxu0 0.0
        %1831 = vmatpush1.msra.mxu0 %v1802
        %1832 = vmatprep.subr.mxu0 0.0
        %1833 = vmatpush1.msra.mxu0 %v1803
        %1834 = vmatprep.subr.mxu0 0.0
        %1835 = vmatpush1.msra.mxu0 %v1812
        %1836 = vmatprep.subr.mxu0 0.0
        %1837 = vmatpush1.msra.mxu0 0.0
        %1838 = vmatprep.subr.mxu0 0.0
        %1839 = vmatpush1.msra.mxu0 0.0
        %1840 = vmatprep.subr.mxu0 0.0
        %1841 = vmatpush1.msra.mxu0 0.0
        %1842 = vmatprep.subr.mxu0 0.0
        %1843 = vmatpush1.msra.mxu0 0.0
        %1844 = vmatprep.subr.mxu0 0.0
        %1845 = vmatpush1.msra.mxu0 0.0
        %1846 = vmatprep.subr.mxu0 0.0
        %1847 = vmatpush1.msra.mxu0 0.0
        %1848 = vmatprep.subr.mxu0 0.0
        %1849 = vmatpush1.msra.mxu0 0.0
        %1850 = vmatprep.subr.mxu0 0.0
        %1851 = vmatpush1.msra.mxu0 0.0
        %1852 = vmatprep.subr.mxu0 0.0
        %1853 = vmatpush1.msra.mxu0 0.0
        %1854 = vmatprep.subr.mxu0 0.0
        %1855 = vmatpush1.msra.mxu0 0.0
        %1856 = vmatprep.subr.mxu0 0.0
        %1857 = vmatpush1.msra.mxu0 0.0
        %1858 = vmatprep.subr.mxu0 0.0
        %1859 = vmatpush1.msra.mxu0 0.0
        %1860 = vmatprep.subr.mxu0 0.0
        %1861 = vmatpush1.msra.mxu0 0.0
        %1862 = vmatprep.subr.mxu0 0.0
        %1863 = vmatpush1.msra.mxu0 0.0
        %1864 = vmatprep.subr.mxu0 0.0
        %1865 = vmatpush1.msra.mxu0 0.0
        %1866 = vmatprep.subr.mxu0 0.0
        %1867 = vmatpush1.msra.mxu0 0.0
        %1868 = vmatprep.subr.mxu0 0.0
        %1869 = vmatpush1.msra.mxu0 0.0
        %1870 = vmatprep.subr.mxu0 0.0
        %1871 = vmatpush1.msra.mxu0 0.0
        %1872 = vmatprep.subr.mxu0 0.0
        %1873 = vmatpush1.msra.mxu0 0.0
        %1874 = vmatprep.subr.mxu0 0.0
        %1875 = vmatpush1.msra.mxu0 0.0
        %1876 = vmatprep.subr.mxu0 0.0
        %1877 = vmatpush1.msra.mxu0 0.0
        %1878 = vmatprep.mubr.f32.mxu0 0.0
        %1879 = vmatmul.mubr.f32.gmra.mrb[0].mxu0 %v1806
        %v1880 = vpop.f32.mrb[0].mxu0
        %v1881 = vadd.f32 0.0, %v1880
        %v1882 = vpop.f32.mrb[0].mxu0
        %1883 = vmatprep.mubr.f32.mxu0 0.0
        %1884 = vmatmul.mubr.f32.gmra.mrb[0].mxu0 %v1809
        %v1885 = vpop.f32.mrb[0].mxu0
        %v1886 = vadd.f32 0.0, %v1885
        %v1887 = vpop.f32.mrb[0].mxu0
        %1888 = vdwg.mxu0
        %v1889 = vadd.f32 %v1783, %v1881
        %v1890 = vadd.f32 %v1788, %v1886
        %v1891 = vld [vmem:[#allocation2 + $0x3] sm:$0xff]
        %v1892 = vld [vmem:[#allocation2 + $0xb] sm:$0x3]
        %s1893 = scalar_lea.vmem %s5, 264
        %v1894 = vld [vmem:[%s1893] sm:$0xff]
        %v1895 = vld [vmem:[%s1893 + $0x8] sm:$0xff]
        %v1896 = vld [vmem:[%s1893 + $0x10] sm:$0xff]
        %v1897 = vld [vmem:[%s1893 + $0x18] sm:$0xff]
        %v1898 = vld [vmem:[%s1893 + $0x20] sm:$0xff]
        %v1899 = vld [vmem:[%s1893 + $0x28] sm:$0xff]
        %v1900 = vld [vmem:[%s1893 + $0x30] sm:$0xff]
        %v1901 = vld [vmem:[%s1893 + $0x38] sm:$0xff]
        %v1902 = vld [vmem:[%s1893 + $0x40] sm:$0xff]
        %v1903 = vld [vmem:[%s1893 + $0x48] sm:$0xff]
        %v1904 = vld [vmem:[%s1893 + $0x50] sm:$0xf]
        %v1906 = vsel %vm1592, %v1891, 0
        %v1909 = vsel %vm1592, %v1892, 0
        %v1912 = vsel %vm1425, %v1904, 0
        %1914 = vmatprep.subr.mxu0 0.0
        %1915 = vmatpush1.msra.mxu0 %v1894
        %1916 = vmatprep.subr.mxu0 0.0
        %1917 = vmatpush1.msra.mxu0 %v1895
        %1918 = vmatprep.subr.mxu0 0.0
        %1919 = vmatpush1.msra.mxu0 %v1896
        %1920 = vmatprep.subr.mxu0 0.0
        %1921 = vmatpush1.msra.mxu0 %v1897
        %1922 = vmatprep.subr.mxu0 0.0
        %1923 = vmatpush1.msra.mxu0 %v1898
        %1924 = vmatprep.subr.mxu0 0.0
        %1925 = vmatpush1.msra.mxu0 %v1899
        %1926 = vmatprep.subr.mxu0 0.0
        %1927 = vmatpush1.msra.mxu0 %v1900
        %1928 = vmatprep.subr.mxu0 0.0
        %1929 = vmatpush1.msra.mxu0 %v1901
        %1930 = vmatprep.subr.mxu0 0.0
        %1931 = vmatpush1.msra.mxu0 %v1902
        %1932 = vmatprep.subr.mxu0 0.0
        %1933 = vmatpush1.msra.mxu0 %v1903
        %1934 = vmatprep.subr.mxu0 0.0
        %1935 = vmatpush1.msra.mxu0 %v1912
        %1936 = vmatprep.subr.mxu0 0.0
        %1937 = vmatpush1.msra.mxu0 0.0
        %1938 = vmatprep.subr.mxu0 0.0
        %1939 = vmatpush1.msra.mxu0 0.0
        %1940 = vmatprep.subr.mxu0 0.0
        %1941 = vmatpush1.msra.mxu0 0.0
        %1942 = vmatprep.subr.mxu0 0.0
        %1943 = vmatpush1.msra.mxu0 0.0
        %1944 = vmatprep.subr.mxu0 0.0
        %1945 = vmatpush1.msra.mxu0 0.0
        %1946 = vmatprep.subr.mxu0 0.0
        %1947 = vmatpush1.msra.mxu0 0.0
        %1948 = vmatprep.subr.mxu0 0.0
        %1949 = vmatpush1.msra.mxu0 0.0
        %1950 = vmatprep.subr.mxu0 0.0
        %1951 = vmatpush1.msra.mxu0 0.0
        %1952 = vmatprep.subr.mxu0 0.0
        %1953 = vmatpush1.msra.mxu0 0.0
        %1954 = vmatprep.subr.mxu0 0.0
        %1955 = vmatpush1.msra.mxu0 0.0
        %1956 = vmatprep.subr.mxu0 0.0
        %1957 = vmatpush1.msra.mxu0 0.0
        %1958 = vmatprep.subr.mxu0 0.0
        %1959 = vmatpush1.msra.mxu0 0.0
        %1960 = vmatprep.subr.mxu0 0.0
        %1961 = vmatpush1.msra.mxu0 0.0
        %1962 = vmatprep.subr.mxu0 0.0
        %1963 = vmatpush1.msra.mxu0 0.0
        %1964 = vmatprep.subr.mxu0 0.0
        %1965 = vmatpush1.msra.mxu0 0.0
        %1966 = vmatprep.subr.mxu0 0.0
        %1967 = vmatpush1.msra.mxu0 0.0
        %1968 = vmatprep.subr.mxu0 0.0
        %1969 = vmatpush1.msra.mxu0 0.0
        %1970 = vmatprep.subr.mxu0 0.0
        %1971 = vmatpush1.msra.mxu0 0.0
        %1972 = vmatprep.subr.mxu0 0.0
        %1973 = vmatpush1.msra.mxu0 0.0
        %1974 = vmatprep.subr.mxu0 0.0
        %1975 = vmatpush1.msra.mxu0 0.0
        %1976 = vmatprep.subr.mxu0 0.0
        %1977 = vmatpush1.msra.mxu0 0.0
        %1978 = vmatprep.mubr.f32.mxu0 0.0
        %1979 = vmatmul.mubr.f32.gmra.mrb[0].mxu0 %v1906
        %v1980 = vpop.f32.mrb[0].mxu0
        %v1981 = vadd.f32 0.0, %v1980
        %v1982 = vpop.f32.mrb[0].mxu0
        %1983 = vmatprep.mubr.f32.mxu0 0.0
        %1984 = vmatmul.mubr.f32.gmra.mrb[0].mxu0 %v1909
        %v1985 = vpop.f32.mrb[0].mxu0
        %v1986 = vadd.f32 0.0, %v1985
        %v1987 = vpop.f32.mrb[0].mxu0
        %1988 = vdwg.mxu0
        %v1989 = vadd.f32 %v1889, %v1981
        %v1990 = vadd.f32 %v1890, %v1986
        %v1991 = vld [vmem:[#allocation2 + $0x4] sm:$0xff]
        %v1992 = vld [vmem:[#allocation2 + $0xc] sm:$0x3]
        %s1993 = scalar_lea.vmem %s5, 352
        %v1994 = vld [vmem:[%s1993] sm:$0xff]
        %v1995 = vld [vmem:[%s1993 + $0x8] sm:$0xff]
        %v1996 = vld [vmem:[%s1993 + $0x10] sm:$0xff]
        %v1997 = vld [vmem:[%s1993 + $0x18] sm:$0xff]
        %v1998 = vld [vmem:[%s1993 + $0x20] sm:$0xff]
        %v1999 = vld [vmem:[%s1993 + $0x28] sm:$0xff]
        %v2000 = vld [vmem:[%s1993 + $0x30] sm:$0xff]
        %v2001 = vld [vmem:[%s1993 + $0x38] sm:$0xff]
        %v2002 = vld [vmem:[%s1993 + $0x40] sm:$0xff]
        %v2003 = vld [vmem:[%s1993 + $0x48] sm:$0xff]
        %v2004 = vld [vmem:[%s1993 + $0x50] sm:$0xf]
        %v2006 = vsel %vm1592, %v1991, 0
        %v2009 = vsel %vm1592, %v1992, 0
        %v2012 = vsel %vm1425, %v2004, 0
        %2014 = vmatprep.subr.mxu0 0.0
        %2015 = vmatpush1.msra.mxu0 %v1994
        %2016 = vmatprep.subr.mxu0 0.0
        %2017 = vmatpush1.msra.mxu0 %v1995
        %2018 = vmatprep.subr.mxu0 0.0
        %2019 = vmatpush1.msra.mxu0 %v1996
        %2020 = vmatprep.subr.mxu0 0.0
        %2021 = vmatpush1.msra.mxu0 %v1997
        %2022 = vmatprep.subr.mxu0 0.0
        %2023 = vmatpush1.msra.mxu0 %v1998
        %2024 = vmatprep.subr.mxu0 0.0
        %2025 = vmatpush1.msra.mxu0 %v1999
        %2026 = vmatprep.subr.mxu0 0.0
        %2027 = vmatpush1.msra.mxu0 %v2000
        %2028 = vmatprep.subr.mxu0 0.0
        %2029 = vmatpush1.msra.mxu0 %v2001
        %2030 = vmatprep.subr.mxu0 0.0
        %2031 = vmatpush1.msra.mxu0 %v2002
        %2032 = vmatprep.subr.mxu0 0.0
        %2033 = vmatpush1.msra.mxu0 %v2003
        %2034 = vmatprep.subr.mxu0 0.0
        %2035 = vmatpush1.msra.mxu0 %v2012
        %2036 = vmatprep.subr.mxu0 0.0
        %2037 = vmatpush1.msra.mxu0 0.0
        %2038 = vmatprep.subr.mxu0 0.0
        %2039 = vmatpush1.msra.mxu0 0.0
        %2040 = vmatprep.subr.mxu0 0.0
        %2041 = vmatpush1.msra.mxu0 0.0
        %2042 = vmatprep.subr.mxu0 0.0
        %2043 = vmatpush1.msra.mxu0 0.0
        %2044 = vmatprep.subr.mxu0 0.0
        %2045 = vmatpush1.msra.mxu0 0.0
        %2046 = vmatprep.subr.mxu0 0.0
        %2047 = vmatpush1.msra.mxu0 0.0
        %2048 = vmatprep.subr.mxu0 0.0
        %2049 = vmatpush1.msra.mxu0 0.0
        %2050 = vmatprep.subr.mxu0 0.0
        %2051 = vmatpush1.msra.mxu0 0.0
        %2052 = vmatprep.subr.mxu0 0.0
        %2053 = vmatpush1.msra.mxu0 0.0
        %2054 = vmatprep.subr.mxu0 0.0
        %2055 = vmatpush1.msra.mxu0 0.0
        %2056 = vmatprep.subr.mxu0 0.0
        %2057 = vmatpush1.msra.mxu0 0.0
        %2058 = vmatprep.subr.mxu0 0.0
        %2059 = vmatpush1.msra.mxu0 0.0
        %2060 = vmatprep.subr.mxu0 0.0
        %2061 = vmatpush1.msra.mxu0 0.0
        %2062 = vmatprep.subr.mxu0 0.0
        %2063 = vmatpush1.msra.mxu0 0.0
        %2064 = vmatprep.subr.mxu0 0.0
        %2065 = vmatpush1.msra.mxu0 0.0
        %2066 = vmatprep.subr.mxu0 0.0
        %2067 = vmatpush1.msra.mxu0 0.0
        %2068 = vmatprep.subr.mxu0 0.0
        %2069 = vmatpush1.msra.mxu0 0.0
        %2070 = vmatprep.subr.mxu0 0.0
        %2071 = vmatpush1.msra.mxu0 0.0
        %2072 = vmatprep.subr.mxu0 0.0
        %2073 = vmatpush1.msra.mxu0 0.0
        %2074 = vmatprep.subr.mxu0 0.0
        %2075 = vmatpush1.msra.mxu0 0.0
        %2076 = vmatprep.subr.mxu0 0.0
        %2077 = vmatpush1.msra.mxu0 0.0
        %2078 = vmatprep.mubr.f32.mxu0 0.0
        %2079 = vmatmul.mubr.f32.gmra.mrb[0].mxu0 %v2006
        %v2080 = vpop.f32.mrb[0].mxu0
        %v2081 = vadd.f32 0.0, %v2080
        %v2082 = vpop.f32.mrb[0].mxu0
        %2083 = vmatprep.mubr.f32.mxu0 0.0
        %2084 = vmatmul.mubr.f32.gmra.mrb[0].mxu0 %v2009
        %v2085 = vpop.f32.mrb[0].mxu0
        %v2086 = vadd.f32 0.0, %v2085
        %v2087 = vpop.f32.mrb[0].mxu0
        %2088 = vdwg.mxu0
        %v2089 = vadd.f32 %v1989, %v2081
        %v2090 = vadd.f32 %v1990, %v2086
        %v2091 = vld [vmem:[%s6] sm:$0x1]
        %v2093 = vlaneseq
        %v2094 = vshrl.u32 %v2093, 7
        %v2095 = vsub.s32 0, %v2094
        %v2096 = vrot.slane %v2091, %v2095
        %v2098 = vadd.f32 %v2089, %v2096
        %v2099 = vadd.f32 %v2090, %v2096
        %v2100 = vld [vmem:[%s7] sm:$0xff]
        %v2101 = vld [vmem:[%s7 + $0x8] sm:$0xff]
        %v2102 = vld [vmem:[%s7 + $0x10] sm:$0xff]
        %v2103 = vld [vmem:[%s7 + $0x18] sm:$0xff]
        %v2104 = vld [vmem:[%s7 + $0x20] sm:$0xff]
        %v2105 = vld [vmem:[%s7 + $0x28] sm:$0xff]
        %v2106 = vld [vmem:[%s7 + $0x30] sm:$0xff]
        %v2107 = vld [vmem:[%s7 + $0x38] sm:$0xff]
        %v2108 = vld [vmem:[%s7 + $0x40] sm:$0xff]
        %v2109 = vld [vmem:[%s7 + $0x48] sm:$0xff]
        %v2110 = vld [vmem:[%s7 + $0x50] sm:$0xff]
        %v2111 = vld [vmem:[%s7 + $0x58] sm:$0xff]
        %v2112 = vld [vmem:[%s7 + $0x60] sm:$0xf]
        %vm2113 = vcmask 818176
        %v2115 = vsel %vm2113, %v2098, 0
        %v2118 = vsel %vm2113, %v2099, 0
        %v2121 = vsel %vm1425, %v2112, 0
        %2123 = vmatprep.subr.mxu0 0.0
        %2124 = vmatpush1.msra.mxu0 %v2100
        %2125 = vmatprep.subr.mxu0 0.0
        %2126 = vmatpush1.msra.mxu0 %v2101
        %2127 = vmatprep.subr.mxu0 0.0
        %2128 = vmatpush1.msra.mxu0 %v2102
        %2129 = vmatprep.subr.mxu0 0.0
        %2130 = vmatpush1.msra.mxu0 %v2103
        %2131 = vmatprep.subr.mxu0 0.0
        %2132 = vmatpush1.msra.mxu0 %v2104
        %2133 = vmatprep.subr.mxu0 0.0
        %2134 = vmatpush1.msra.mxu0 %v2105
        %2135 = vmatprep.subr.mxu0 0.0
        %2136 = vmatpush1.msra.mxu0 %v2106
        %2137 = vmatprep.subr.mxu0 0.0
        %2138 = vmatpush1.msra.mxu0 %v2107
        %2139 = vmatprep.subr.mxu0 0.0
        %2140 = vmatpush1.msra.mxu0 %v2108
        %2141 = vmatprep.subr.mxu0 0.0
        %2142 = vmatpush1.msra.mxu0 %v2109
        %2143 = vmatprep.subr.mxu0 0.0
        %2144 = vmatpush1.msra.mxu0 %v2110
        %2145 = vmatprep.subr.mxu0 0.0
        %2146 = vmatpush1.msra.mxu0 %v2111
        %2147 = vmatprep.subr.mxu0 0.0
        %2148 = vmatpush1.msra.mxu0 %v2121
        %2149 = vmatprep.subr.mxu0 0.0
        %2150 = vmatpush1.msra.mxu0 0.0
        %2151 = vmatprep.subr.mxu0 0.0
        %2152 = vmatpush1.msra.mxu0 0.0
        %2153 = vmatprep.subr.mxu0 0.0
        %2154 = vmatpush1.msra.mxu0 0.0
        %2155 = vmatprep.subr.mxu0 0.0
        %2156 = vmatpush1.msra.mxu0 0.0
        %2157 = vmatprep.subr.mxu0 0.0
        %2158 = vmatpush1.msra.mxu0 0.0
        %2159 = vmatprep.subr.mxu0 0.0
        %2160 = vmatpush1.msra.mxu0 0.0
        %2161 = vmatprep.subr.mxu0 0.0
        %2162 = vmatpush1.msra.mxu0 0.0
        %2163 = vmatprep.subr.mxu0 0.0
        %2164 = vmatpush1.msra.mxu0 0.0
        %2165 = vmatprep.subr.mxu0 0.0
        %2166 = vmatpush1.msra.mxu0 0.0
        %2167 = vmatprep.subr.mxu0 0.0
        %2168 = vmatpush1.msra.mxu0 0.0
        %2169 = vmatprep.subr.mxu0 0.0
        %2170 = vmatpush1.msra.mxu0 0.0
        %2171 = vmatprep.subr.mxu0 0.0
        %2172 = vmatpush1.msra.mxu0 0.0
        %2173 = vmatprep.subr.mxu0 0.0
        %2174 = vmatpush1.msra.mxu0 0.0
        %2175 = vmatprep.subr.mxu0 0.0
        %2176 = vmatpush1.msra.mxu0 0.0
        %2177 = vmatprep.subr.mxu0 0.0
        %2178 = vmatpush1.msra.mxu0 0.0
        %2179 = vmatprep.subr.mxu0 0.0
        %2180 = vmatpush1.msra.mxu0 0.0
        %2181 = vmatprep.subr.mxu0 0.0
        %2182 = vmatpush1.msra.mxu0 0.0
        %2183 = vmatprep.subr.mxu0 0.0
        %2184 = vmatpush1.msra.mxu0 0.0
        %2185 = vmatprep.subr.mxu0 0.0
        %2186 = vmatpush1.msra.mxu0 0.0
        %2187 = vmatprep.mubr.f32.mxu0 0.0
        %2188 = vmatmul.mubr.f32.gmra.mrb[0].mxu0 %v2115
        %v2189 = vpop.f32.mrb[0].mxu0
        %v2190 = vadd.f32 0.0, %v2189
        %v2191 = vpop.f32.mrb[0].mxu0
        %2192 = vmatprep.mubr.f32.mxu0 0.0
        %2193 = vmatmul.mubr.f32.gmra.mrb[0].mxu0 %v2118
        %v2194 = vpop.f32.mrb[0].mxu0
        %v2195 = vadd.f32 0.0, %v2194
        %v2196 = vpop.f32.mrb[0].mxu0
        %2197 = vdwg.mxu0
        %s2198 = scalar_lea.vmem %s7, 104
        %v2199 = vld [vmem:[%s2198] sm:$0xff]
        %v2200 = vld [vmem:[%s2198 + $0x8] sm:$0xff]
        %v2201 = vld [vmem:[%s2198 + $0x10] sm:$0xff]
        %v2202 = vld [vmem:[%s2198 + $0x18] sm:$0xff]
        %v2203 = vld [vmem:[%s2198 + $0x20] sm:$0xff]
        %v2204 = vld [vmem:[%s2198 + $0x28] sm:$0xff]
        %v2205 = vld [vmem:[%s2198 + $0x30] sm:$0xff]
        %v2206 = vld [vmem:[%s2198 + $0x38] sm:$0xff]
        %v2207 = vld [vmem:[%s2198 + $0x40] sm:$0xff]
        %v2208 = vld [vmem:[%s2198 + $0x48] sm:$0xff]
        %v2209 = vld [vmem:[%s2198 + $0x50] sm:$0xff]
        %v2210 = vld [vmem:[%s2198 + $0x58] sm:$0xff]
        %v2211 = vld [vmem:[%s2198 + $0x60] sm:$0xf]
        %v2213 = vsel %vm1425, %v2211, 0
        %2215 = vmatprep.subr.mxu0 0.0
        %2216 = vmatpush1.msra.mxu0 %v2199
        %2217 = vmatprep.subr.mxu0 0.0
        %2218 = vmatpush1.msra.mxu0 %v2200
        %2219 = vmatprep.subr.mxu0 0.0
        %2220 = vmatpush1.msra.mxu0 %v2201
        %2221 = vmatprep.subr.mxu0 0.0
        %2222 = vmatpush1.msra.mxu0 %v2202
        %2223 = vmatprep.subr.mxu0 0.0
        %2224 = vmatpush1.msra.mxu0 %v2203
        %2225 = vmatprep.subr.mxu0 0.0
        %2226 = vmatpush1.msra.mxu0 %v2204
        %2227 = vmatprep.subr.mxu0 0.0
        %2228 = vmatpush1.msra.mxu0 %v2205
        %2229 = vmatprep.subr.mxu0 0.0
        %2230 = vmatpush1.msra.mxu0 %v2206
        %2231 = vmatprep.subr.mxu0 0.0
        %2232 = vmatpush1.msra.mxu0 %v2207
        %2233 = vmatprep.subr.mxu0 0.0
        %2234 = vmatpush1.msra.mxu0 %v2208
        %2235 = vmatprep.subr.mxu0 0.0
        %2236 = vmatpush1.msra.mxu0 %v2209
        %2237 = vmatprep.subr.mxu0 0.0
        %2238 = vmatpush1.msra.mxu0 %v2210
        %2239 = vmatprep.subr.mxu0 0.0
        %2240 = vmatpush1.msra.mxu0 %v2213
        %2241 = vmatprep.subr.mxu0 0.0
        %2242 = vmatpush1.msra.mxu0 0.0
        %2243 = vmatprep.subr.mxu0 0.0
        %2244 = vmatpush1.msra.mxu0 0.0
        %2245 = vmatprep.subr.mxu0 0.0
        %2246 = vmatpush1.msra.mxu0 0.0
        %2247 = vmatprep.subr.mxu0 0.0
        %2248 = vmatpush1.msra.mxu0 0.0
        %2249 = vmatprep.subr.mxu0 0.0
        %2250 = vmatpush1.msra.mxu0 0.0
        %2251 = vmatprep.subr.mxu0 0.0
        %2252 = vmatpush1.msra.mxu0 0.0
        %2253 = vmatprep.subr.mxu0 0.0
        %2254 = vmatpush1.msra.mxu0 0.0
        %2255 = vmatprep.subr.mxu0 0.0
        %2256 = vmatpush1.msra.mxu0 0.0
        %2257 = vmatprep.subr.mxu0 0.0
        %2258 = vmatpush1.msra.mxu0 0.0
        %2259 = vmatprep.subr.mxu0 0.0
        %2260 = vmatpush1.msra.mxu0 0.0
        %2261 = vmatprep.subr.mxu0 0.0
        %2262 = vmatpush1.msra.mxu0 0.0
        %2263 = vmatprep.subr.mxu0 0.0
        %2264 = vmatpush1.msra.mxu0 0.0
        %2265 = vmatprep.subr.mxu0 0.0
        %2266 = vmatpush1.msra.mxu0 0.0
        %2267 = vmatprep.subr.mxu0 0.0
        %2268 = vmatpush1.msra.mxu0 0.0
        %2269 = vmatprep.subr.mxu0 0.0
        %2270 = vmatpush1.msra.mxu0 0.0
        %2271 = vmatprep.subr.mxu0 0.0
        %2272 = vmatpush1.msra.mxu0 0.0
        %2273 = vmatprep.subr.mxu0 0.0
        %2274 = vmatpush1.msra.mxu0 0.0
        %2275 = vmatprep.subr.mxu0 0.0
        %2276 = vmatpush1.msra.mxu0 0.0
        %2277 = vmatprep.subr.mxu0 0.0
        %2278 = vmatpush1.msra.mxu0 0.0
        %2279 = vmatprep.mubr.f32.mxu0 0.0
        %2280 = vmatmul.mubr.f32.gmra.mrb[0].mxu0 %v2115
        %v2281 = vpop.f32.mrb[0].mxu0
        %v2282 = vadd.f32 0.0, %v2281
        %v2283 = vpop.f32.mrb[0].mxu0
        %2284 = vmatprep.mubr.f32.mxu0 0.0
        %2285 = vmatmul.mubr.f32.gmra.mrb[0].mxu0 %v2118
        %v2286 = vpop.f32.mrb[0].mxu0
        %v2287 = vadd.f32 0.0, %v2286
        %v2288 = vpop.f32.mrb[0].mxu0
        %2289 = vdwg.mxu0
        %v2290 = vmax.f32 %v2190, %v2282
        %v2291 = vmax.f32 %v2195, %v2287
        %v2292 = vld [vmem:[%s8] sm:$0x1f]
        %vm2293 = vcmask 80896
        %v2295 = vsel %vm2293, %v2292, 0
        %vm2297 = vcmask 1041408
        %v2299 = vsel %vm2297, %v2291, 0
        %2301 = vmatprep.subr.mxu0 0.0
        %2302 = vmatpush1.msra.mxu0 %v2290
        %2303 = vmatprep.subr.mxu0 0.0
        %2304 = vmatpush1.msra.mxu0 %v2299
        %2305 = vmatprep.subr.mxu0 0.0
        %2306 = vmatpush1.msra.mxu0 0.0
        %2307 = vmatprep.subr.mxu0 0.0
        %2308 = vmatpush1.msra.mxu0 0.0
        %2309 = vmatprep.subr.mxu0 0.0
        %2310 = vmatpush1.msra.mxu0 0.0
        %2311 = vmatprep.subr.mxu0 0.0
        %2312 = vmatpush1.msra.mxu0 0.0
        %2313 = vmatprep.subr.mxu0 0.0
        %2314 = vmatpush1.msra.mxu0 0.0
        %2315 = vmatprep.subr.mxu0 0.0
        %2316 = vmatpush1.msra.mxu0 0.0
        %2317 = vmatprep.subr.mxu0 0.0
        %2318 = vmatpush1.msra.mxu0 0.0
        %2319 = vmatprep.subr.mxu0 0.0
        %2320 = vmatpush1.msra.mxu0 0.0
        %2321 = vmatprep.subr.mxu0 0.0
        %2322 = vmatpush1.msra.mxu0 0.0
        %2323 = vmatprep.subr.mxu0 0.0
        %2324 = vmatpush1.msra.mxu0 0.0
        %2325 = vmatprep.subr.mxu0 0.0
        %2326 = vmatpush1.msra.mxu0 0.0
        %2327 = vmatprep.subr.mxu0 0.0
        %2328 = vmatpush1.msra.mxu0 0.0
        %2329 = vmatprep.subr.mxu0 0.0
        %2330 = vmatpush1.msra.mxu0 0.0
        %2331 = vmatprep.subr.mxu0 0.0
        %2332 = vmatpush1.msra.mxu0 0.0
        %2333 = vmatprep.subr.mxu0 0.0
        %2334 = vmatpush1.msra.mxu0 0.0
        %2335 = vmatprep.subr.mxu0 0.0
        %2336 = vmatpush1.msra.mxu0 0.0
        %2337 = vmatprep.subr.mxu0 0.0
        %2338 = vmatpush1.msra.mxu0 0.0
        %2339 = vmatprep.subr.mxu0 0.0
        %2340 = vmatpush1.msra.mxu0 0.0
        %2341 = vmatprep.subr.mxu0 0.0
        %2342 = vmatpush1.msra.mxu0 0.0
        %2343 = vmatprep.subr.mxu0 0.0
        %2344 = vmatpush1.msra.mxu0 0.0
        %2345 = vmatprep.subr.mxu0 0.0
        %2346 = vmatpush1.msra.mxu0 0.0
        %2347 = vmatprep.subr.mxu0 0.0
        %2348 = vmatpush1.msra.mxu0 0.0
        %2349 = vmatprep.subr.mxu0 0.0
        %2350 = vmatpush1.msra.mxu0 0.0
        %2351 = vmatprep.subr.mxu0 0.0
        %2352 = vmatpush1.msra.mxu0 0.0
        %2353 = vmatprep.subr.mxu0 0.0
        %2354 = vmatpush1.msra.mxu0 0.0
        %2355 = vmatprep.subr.mxu0 0.0
        %2356 = vmatpush1.msra.mxu0 0.0
        %2357 = vmatprep.subr.mxu0 0.0
        %2358 = vmatpush1.msra.mxu0 0.0
        %2359 = vmatprep.subr.mxu0 0.0
        %2360 = vmatpush1.msra.mxu0 0.0
        %2361 = vmatprep.subr.mxu0 0.0
        %2362 = vmatpush1.msra.mxu0 0.0
        %2363 = vmatprep.subr.mxu0 0.0
        %2364 = vmatpush1.msra.mxu0 0.0
        %2365 = vmatprep.mubr.f32.mxu0 0.0
        %2366 = vmatmul.mubr.f32.gmra.mrb[0].mxu0 %v2295
        %v2367 = vpop.f32.mrb[0].mxu0
        %v2368 = vadd.f32 0.0, %v2367
        %v2369 = vpop.f32.mrb[0].mxu0
        %2370 = vdwg.mxu0
        %s2371 = scalar_lea.vmem %s8, 8
        %v2372 = vld [vmem:[%s2371] sm:$0x1f]
        %v2374 = vsel %vm2293, %v2372, 0
        %2376 = vmatprep.subr.mxu0 0.0
        %2377 = vmatpush1.msra.mxu0 %v2290
        %2378 = vmatprep.subr.mxu0 0.0
        %2379 = vmatpush1.msra.mxu0 %v2299
        %2380 = vmatprep.subr.mxu0 0.0
        %2381 = vmatpush1.msra.mxu0 0.0
        %2382 = vmatprep.subr.mxu0 0.0
        %2383 = vmatpush1.msra.mxu0 0.0
        %2384 = vmatprep.subr.mxu0 0.0
        %2385 = vmatpush1.msra.mxu0 0.0
        %2386 = vmatprep.subr.mxu0 0.0
        %2387 = vmatpush1.msra.mxu0 0.0
        %2388 = vmatprep.subr.mxu0 0.0
        %2389 = vmatpush1.msra.mxu0 0.0
        %2390 = vmatprep.subr.mxu0 0.0
        %2391 = vmatpush1.msra.mxu0 0.0
        %2392 = vmatprep.subr.mxu0 0.0
        %2393 = vmatpush1.msra.mxu0 0.0
        %2394 = vmatprep.subr.mxu0 0.0
        %2395 = vmatpush1.msra.mxu0 0.0
        %2396 = vmatprep.subr.mxu0 0.0
        %2397 = vmatpush1.msra.mxu0 0.0
        %2398 = vmatprep.subr.mxu0 0.0
        %2399 = vmatpush1.msra.mxu0 0.0
        %2400 = vmatprep.subr.mxu0 0.0
        %2401 = vmatpush1.msra.mxu0 0.0
        %2402 = vmatprep.subr.mxu0 0.0
        %2403 = vmatpush1.msra.mxu0 0.0
        %2404 = vmatprep.subr.mxu0 0.0
        %2405 = vmatpush1.msra.mxu0 0.0
        %2406 = vmatprep.subr.mxu0 0.0
        %2407 = vmatpush1.msra.mxu0 0.0
        %2408 = vmatprep.subr.mxu0 0.0
        %2409 = vmatpush1.msra.mxu0 0.0
        %2410 = vmatprep.subr.mxu0 0.0
        %2411 = vmatpush1.msra.mxu0 0.0
        %2412 = vmatprep.subr.mxu0 0.0
        %2413 = vmatpush1.msra.mxu0 0.0
        %2414 = vmatprep.subr.mxu0 0.0
        %2415 = vmatpush1.msra.mxu0 0.0
        %2416 = vmatprep.subr.mxu0 0.0
        %2417 = vmatpush1.msra.mxu0 0.0
        %2418 = vmatprep.subr.mxu0 0.0
        %2419 = vmatpush1.msra.mxu0 0.0
        %2420 = vmatprep.subr.mxu0 0.0
        %2421 = vmatpush1.msra.mxu0 0.0
        %2422 = vmatprep.subr.mxu0 0.0
        %2423 = vmatpush1.msra.mxu0 0.0
        %2424 = vmatprep.subr.mxu0 0.0
        %2425 = vmatpush1.msra.mxu0 0.0
        %2426 = vmatprep.subr.mxu0 0.0
        %2427 = vmatpush1.msra.mxu0 0.0
        %2428 = vmatprep.subr.mxu0 0.0
        %2429 = vmatpush1.msra.mxu0 0.0
        %2430 = vmatprep.subr.mxu0 0.0
        %2431 = vmatpush1.msra.mxu0 0.0
        %2432 = vmatprep.subr.mxu0 0.0
        %2433 = vmatpush1.msra.mxu0 0.0
        %2434 = vmatprep.subr.mxu0 0.0
        %2435 = vmatpush1.msra.mxu0 0.0
        %2436 = vmatprep.subr.mxu0 0.0
        %2437 = vmatpush1.msra.mxu0 0.0
        %2438 = vmatprep.subr.mxu0 0.0
        %2439 = vmatpush1.msra.mxu0 0.0
        %2440 = vmatprep.mubr.f32.mxu0 0.0
        %2441 = vmatmul.mubr.f32.gmra.mrb[0].mxu0 %v2374
        %v2442 = vpop.f32.mrb[0].mxu0
        %v2443 = vadd.f32 0.0, %v2442
        %v2444 = vpop.f32.mrb[0].mxu0
        %2445 = vdwg.mxu0
        %v2446 = vmax.f32 %v2368, %v2443
        %v2447 = vmax.f32 %v2446, 0.0
        %vm2448 = vcmask 405504
        %2449 = vst.msk [vmem:[#allocation3] sm:$0x1f] %vm2448, %v2447
        %v2450 = vld [vmem:[#allocation3] sm:$0x1]
        %v2451 = vld [vmem:[%s9] sm:$0xff]
        %v2452 = vld [vmem:[%s9 + $0x8] sm:$0xff]
        %v2453 = vld [vmem:[%s9 + $0x10] sm:$0xff]
        %v2454 = vld [vmem:[%s9 + $0x18] sm:$0xff]
        %v2455 = vld [vmem:[%s9 + $0x20] sm:$0xff]
        %v2456 = vld [vmem:[%s9 + $0x28] sm:$0xff]
        %v2457 = vld [vmem:[%s9 + $0x30] sm:$0x3]
        %v2458 = vld [vmem:[#allocation3 + $0x1] sm:$0x1]
        %s2459 = scalar_lea.vmem %s9, 56
        %v2460 = vld [vmem:[%s2459] sm:$0xff]
        %v2461 = vld [vmem:[%s2459 + $0x8] sm:$0xff]
        %v2462 = vld [vmem:[%s2459 + $0x10] sm:$0xff]
        %v2463 = vld [vmem:[%s2459 + $0x18] sm:$0xff]
        %v2464 = vld [vmem:[%s2459 + $0x20] sm:$0xff]
        %v2465 = vld [vmem:[%s2459 + $0x28] sm:$0xff]
        %v2466 = vld [vmem:[%s2459 + $0x30] sm:$0x3]
        %vm2467 = vcmask 408576
        %v2469 = vsel %vm2467, %v2458, 0
        %v2472 = vsel %vm2297, %v2466, 0
        %2474 = vmatprep.subr.mxu0 0.0
        %2475 = vmatpush1.msra.mxu0 %v2460
        %2476 = vmatprep.subr.mxu0 0.0
        %2477 = vmatpush1.msra.mxu0 %v2461
        %2478 = vmatprep.subr.mxu0 0.0
        %2479 = vmatpush1.msra.mxu0 %v2462
        %2480 = vmatprep.subr.mxu0 0.0
        %2481 = vmatpush1.msra.mxu0 %v2463
        %2482 = vmatprep.subr.mxu0 0.0
        %2483 = vmatpush1.msra.mxu0 %v2464
        %2484 = vmatprep.subr.mxu0 0.0
        %2485 = vmatpush1.msra.mxu0 %v2465
        %2486 = vmatprep.subr.mxu0 0.0
        %2487 = vmatpush1.msra.mxu0 %v2472
        %2488 = vmatprep.subr.mxu0 0.0
        %2489 = vmatpush1.msra.mxu0 0.0
        %2490 = vmatprep.subr.mxu0 0.0
        %2491 = vmatpush1.msra.mxu0 0.0
        %2492 = vmatprep.subr.mxu0 0.0
        %2493 = vmatpush1.msra.mxu0 0.0
        %2494 = vmatprep.subr.mxu0 0.0
        %2495 = vmatpush1.msra.mxu0 0.0
        %2496 = vmatprep.subr.mxu0 0.0
        %2497 = vmatpush1.msra.mxu0 0.0
        %2498 = vmatprep.subr.mxu0 0.0
        %2499 = vmatpush1.msra.mxu0 0.0
        %2500 = vmatprep.subr.mxu0 0.0
        %2501 = vmatpush1.msra.mxu0 0.0
        %2502 = vmatprep.subr.mxu0 0.0
        %2503 = vmatpush1.msra.mxu0 0.0
        %2504 = vmatprep.subr.mxu0 0.0
        %2505 = vmatpush1.msra.mxu0 0.0
        %2506 = vmatprep.subr.mxu0 0.0
        %2507 = vmatpush1.msra.mxu0 0.0
        %2508 = vmatprep.subr.mxu0 0.0
        %2509 = vmatpush1.msra.mxu0 0.0
        %2510 = vmatprep.subr.mxu0 0.0
        %2511 = vmatpush1.msra.mxu0 0.0
        %2512 = vmatprep.subr.mxu0 0.0
        %2513 = vmatpush1.msra.mxu0 0.0
        %2514 = vmatprep.subr.mxu0 0.0
        %2515 = vmatpush1.msra.mxu0 0.0
        %2516 = vmatprep.subr.mxu0 0.0
        %2517 = vmatpush1.msra.mxu0 0.0
        %2518 = vmatprep.subr.mxu0 0.0
        %2519 = vmatpush1.msra.mxu0 0.0
        %2520 = vmatprep.subr.mxu0 0.0
        %2521 = vmatpush1.msra.mxu0 0.0
        %2522 = vmatprep.subr.mxu0 0.0
        %2523 = vmatpush1.msra.mxu0 0.0
        %2524 = vmatprep.subr.mxu0 0.0
        %2525 = vmatpush1.msra.mxu0 0.0
        %2526 = vmatprep.subr.mxu0 0.0
        %2527 = vmatpush1.msra.mxu0 0.0
        %2528 = vmatprep.subr.mxu0 0.0
        %2529 = vmatpush1.msra.mxu0 0.0
        %2530 = vmatprep.subr.mxu0 0.0
        %2531 = vmatpush1.msra.mxu0 0.0
        %2532 = vmatprep.subr.mxu0 0.0
        %2533 = vmatpush1.msra.mxu0 0.0
        %2534 = vmatprep.subr.mxu0 0.0
        %2535 = vmatpush1.msra.mxu0 0.0
        %2536 = vmatprep.subr.mxu0 0.0
        %2537 = vmatpush1.msra.mxu0 0.0
        %2538 = vmatprep.mubr.f32.mxu0 0.0
        %2539 = vmatmul.mubr.f32.gmra.mrb[0].mxu0 %v2469
        %v2540 = vpop.f32.mrb[0].mxu0
        %v2541 = vadd.f32 0.0, %v2540
        %v2542 = vpop.f32.mrb[0].mxu0
        %2543 = vdwg.mxu0
        %v2545 = vsel %vm2467, %v2450, 0
        %v2548 = vsel %vm2297, %v2457, 0
        %2550 = vmatprep.subr.mxu0 0.0
        %2551 = vmatpush1.msra.mxu0 %v2451
        %2552 = vmatprep.subr.mxu0 0.0
        %2553 = vmatpush1.msra.mxu0 %v2452
        %2554 = vmatprep.subr.mxu0 0.0
        %2555 = vmatpush1.msra.mxu0 %v2453
        %2556 = vmatprep.subr.mxu0 0.0
        %2557 = vmatpush1.msra.mxu0 %v2454
        %2558 = vmatprep.subr.mxu0 0.0
        %2559 = vmatpush1.msra.mxu0 %v2455
        %2560 = vmatprep.subr.mxu0 0.0
        %2561 = vmatpush1.msra.mxu0 %v2456
        %2562 = vmatprep.subr.mxu0 0.0
        %2563 = vmatpush1.msra.mxu0 %v2548
        %2564 = vmatprep.subr.mxu0 0.0
        %2565 = vmatpush1.msra.mxu0 0.0
        %2566 = vmatprep.subr.mxu0 0.0
        %2567 = vmatpush1.msra.mxu0 0.0
        %2568 = vmatprep.subr.mxu0 0.0
        %2569 = vmatpush1.msra.mxu0 0.0
        %2570 = vmatprep.subr.mxu0 0.0
        %2571 = vmatpush1.msra.mxu0 0.0
        %2572 = vmatprep.subr.mxu0 0.0
        %2573 = vmatpush1.msra.mxu0 0.0
        %2574 = vmatprep.subr.mxu0 0.0
        %2575 = vmatpush1.msra.mxu0 0.0
        %2576 = vmatprep.subr.mxu0 0.0
        %2577 = vmatpush1.msra.mxu0 0.0
        %2578 = vmatprep.subr.mxu0 0.0
        %2579 = vmatpush1.msra.mxu0 0.0
        %2580 = vmatprep.subr.mxu0 0.0
        %2581 = vmatpush1.msra.mxu0 0.0
        %2582 = vmatprep.subr.mxu0 0.0
        %2583 = vmatpush1.msra.mxu0 0.0
        %2584 = vmatprep.subr.mxu0 0.0
        %2585 = vmatpush1.msra.mxu0 0.0
        %2586 = vmatprep.subr.mxu0 0.0
        %2587 = vmatpush1.msra.mxu0 0.0
        %2588 = vmatprep.subr.mxu0 0.0
        %2589 = vmatpush1.msra.mxu0 0.0
        %2590 = vmatprep.subr.mxu0 0.0
        %2591 = vmatpush1.msra.mxu0 0.0
        %2592 = vmatprep.subr.mxu0 0.0
        %2593 = vmatpush1.msra.mxu0 0.0
        %2594 = vmatprep.subr.mxu0 0.0
        %2595 = vmatpush1.msra.mxu0 0.0
        %2596 = vmatprep.subr.mxu0 0.0
        %2597 = vmatpush1.msra.mxu0 0.0
        %2598 = vmatprep.subr.mxu0 0.0
        %2599 = vmatpush1.msra.mxu0 0.0
        %2600 = vmatprep.subr.mxu0 0.0
        %2601 = vmatpush1.msra.mxu0 0.0
        %2602 = vmatprep.subr.mxu0 0.0
        %2603 = vmatpush1.msra.mxu0 0.0
        %2604 = vmatprep.subr.mxu0 0.0
        %2605 = vmatpush1.msra.mxu0 0.0
        %2606 = vmatprep.subr.mxu0 0.0
        %2607 = vmatpush1.msra.mxu0 0.0
        %2608 = vmatprep.subr.mxu0 0.0
        %2609 = vmatpush1.msra.mxu0 0.0
        %2610 = vmatprep.subr.mxu0 0.0
        %2611 = vmatpush1.msra.mxu0 0.0
        %2612 = vmatprep.subr.mxu0 0.0
        %2613 = vmatpush1.msra.mxu0 0.0
        %2614 = vmatprep.mubr.f32.mxu0 0.0
        %2615 = vmatmul.mubr.f32.gmra.mrb[0].mxu0 %v2545
        %v2616 = vpop.f32.mrb[0].mxu0
        %v2617 = vadd.f32 %v2541, %v2616
        %v2618 = vpop.f32.mrb[0].mxu0
        %2619 = vdwg.mxu0
        %v2620 = vld [vmem:[#allocation3 + $0x2] sm:$0x1]
        %s2621 = scalar_lea.vmem %s9, 112
        %v2622 = vld [vmem:[%s2621] sm:$0xff]
        %v2623 = vld [vmem:[%s2621 + $0x8] sm:$0xff]
        %v2624 = vld [vmem:[%s2621 + $0x10] sm:$0xff]
        %v2625 = vld [vmem:[%s2621 + $0x18] sm:$0xff]
        %v2626 = vld [vmem:[%s2621 + $0x20] sm:$0xff]
        %v2627 = vld [vmem:[%s2621 + $0x28] sm:$0xff]
        %v2628 = vld [vmem:[%s2621 + $0x30] sm:$0x3]
        %v2630 = vsel %vm2467, %v2620, 0
        %v2633 = vsel %vm2297, %v2628, 0
        %2635 = vmatprep.subr.mxu0 0.0
        %2636 = vmatpush1.msra.mxu0 %v2622
        %2637 = vmatprep.subr.mxu0 0.0
        %2638 = vmatpush1.msra.mxu0 %v2623
        %2639 = vmatprep.subr.mxu0 0.0
        %2640 = vmatpush1.msra.mxu0 %v2624
        %2641 = vmatprep.subr.mxu0 0.0
        %2642 = vmatpush1.msra.mxu0 %v2625
        %2643 = vmatprep.subr.mxu0 0.0
        %2644 = vmatpush1.msra.mxu0 %v2626
        %2645 = vmatprep.subr.mxu0 0.0
        %2646 = vmatpush1.msra.mxu0 %v2627
        %2647 = vmatprep.subr.mxu0 0.0
        %2648 = vmatpush1.msra.mxu0 %v2633
        %2649 = vmatprep.subr.mxu0 0.0
        %2650 = vmatpush1.msra.mxu0 0.0
        %2651 = vmatprep.subr.mxu0 0.0
        %2652 = vmatpush1.msra.mxu0 0.0
        %2653 = vmatprep.subr.mxu0 0.0
        %2654 = vmatpush1.msra.mxu0 0.0
        %2655 = vmatprep.subr.mxu0 0.0
        %2656 = vmatpush1.msra.mxu0 0.0
        %2657 = vmatprep.subr.mxu0 0.0
        %2658 = vmatpush1.msra.mxu0 0.0
        %2659 = vmatprep.subr.mxu0 0.0
        %2660 = vmatpush1.msra.mxu0 0.0
        %2661 = vmatprep.subr.mxu0 0.0
        %2662 = vmatpush1.msra.mxu0 0.0
        %2663 = vmatprep.subr.mxu0 0.0
        %2664 = vmatpush1.msra.mxu0 0.0
        %2665 = vmatprep.subr.mxu0 0.0
        %2666 = vmatpush1.msra.mxu0 0.0
        %2667 = vmatprep.subr.mxu0 0.0
        %2668 = vmatpush1.msra.mxu0 0.0
        %2669 = vmatprep.subr.mxu0 0.0
        %2670 = vmatpush1.msra.mxu0 0.0
        %2671 = vmatprep.subr.mxu0 0.0
        %2672 = vmatpush1.msra.mxu0 0.0
        %2673 = vmatprep.subr.mxu0 0.0
        %2674 = vmatpush1.msra.mxu0 0.0
        %2675 = vmatprep.subr.mxu0 0.0
        %2676 = vmatpush1.msra.mxu0 0.0
        %2677 = vmatprep.subr.mxu0 0.0
        %2678 = vmatpush1.msra.mxu0 0.0
        %2679 = vmatprep.subr.mxu0 0.0
        %2680 = vmatpush1.msra.mxu0 0.0
        %2681 = vmatprep.subr.mxu0 0.0
        %2682 = vmatpush1.msra.mxu0 0.0
        %2683 = vmatprep.subr.mxu0 0.0
        %2684 = vmatpush1.msra.mxu0 0.0
        %2685 = vmatprep.subr.mxu0 0.0
        %2686 = vmatpush1.msra.mxu0 0.0
        %2687 = vmatprep.subr.mxu0 0.0
        %2688 = vmatpush1.msra.mxu0 0.0
        %2689 = vmatprep.subr.mxu0 0.0
        %2690 = vmatpush1.msra.mxu0 0.0
        %2691 = vmatprep.subr.mxu0 0.0
        %2692 = vmatpush1.msra.mxu0 0.0
        %2693 = vmatprep.subr.mxu0 0.0
        %2694 = vmatpush1.msra.mxu0 0.0
        %2695 = vmatprep.subr.mxu0 0.0
        %2696 = vmatpush1.msra.mxu0 0.0
        %2697 = vmatprep.subr.mxu0 0.0
        %2698 = vmatpush1.msra.mxu0 0.0
        %2699 = vmatprep.mubr.f32.mxu0 0.0
        %2700 = vmatmul.mubr.f32.gmra.mrb[0].mxu0 %v2630
        %v2701 = vpop.f32.mrb[0].mxu0
        %v2702 = vadd.f32 0.0, %v2701
        %v2703 = vpop.f32.mrb[0].mxu0
        %2704 = vdwg.mxu0
        %v2705 = vadd.f32 %v2617, %v2702
        %v2706 = vld [vmem:[#allocation3 + $0x3] sm:$0x1]
        %s2707 = scalar_lea.vmem %s9, 168
        %v2708 = vld [vmem:[%s2707] sm:$0xff]
        %v2709 = vld [vmem:[%s2707 + $0x8] sm:$0xff]
        %v2710 = vld [vmem:[%s2707 + $0x10] sm:$0xff]
        %v2711 = vld [vmem:[%s2707 + $0x18] sm:$0xff]
        %v2712 = vld [vmem:[%s2707 + $0x20] sm:$0xff]
        %v2713 = vld [vmem:[%s2707 + $0x28] sm:$0xff]
        %v2714 = vld [vmem:[%s2707 + $0x30] sm:$0x3]
        %v2716 = vsel %vm2467, %v2706, 0
        %v2719 = vsel %vm2297, %v2714, 0
        %2721 = vmatprep.subr.mxu0 0.0
        %2722 = vmatpush1.msra.mxu0 %v2708
        %2723 = vmatprep.subr.mxu0 0.0
        %2724 = vmatpush1.msra.mxu0 %v2709
        %2725 = vmatprep.subr.mxu0 0.0
        %2726 = vmatpush1.msra.mxu0 %v2710
        %2727 = vmatprep.subr.mxu0 0.0
        %2728 = vmatpush1.msra.mxu0 %v2711
        %2729 = vmatprep.subr.mxu0 0.0
        %2730 = vmatpush1.msra.mxu0 %v2712
        %2731 = vmatprep.subr.mxu0 0.0
        %2732 = vmatpush1.msra.mxu0 %v2713
        %2733 = vmatprep.subr.mxu0 0.0
        %2734 = vmatpush1.msra.mxu0 %v2719
        %2735 = vmatprep.subr.mxu0 0.0
        %2736 = vmatpush1.msra.mxu0 0.0
        %2737 = vmatprep.subr.mxu0 0.0
        %2738 = vmatpush1.msra.mxu0 0.0
        %2739 = vmatprep.subr.mxu0 0.0
        %2740 = vmatpush1.msra.mxu0 0.0
        %2741 = vmatprep.subr.mxu0 0.0
        %2742 = vmatpush1.msra.mxu0 0.0
        %2743 = vmatprep.subr.mxu0 0.0
        %2744 = vmatpush1.msra.mxu0 0.0
        %2745 = vmatprep.subr.mxu0 0.0
        %2746 = vmatpush1.msra.mxu0 0.0
        %2747 = vmatprep.subr.mxu0 0.0
        %2748 = vmatpush1.msra.mxu0 0.0
        %2749 = vmatprep.subr.mxu0 0.0
        %2750 = vmatpush1.msra.mxu0 0.0
        %2751 = vmatprep.subr.mxu0 0.0
        %2752 = vmatpush1.msra.mxu0 0.0
        %2753 = vmatprep.subr.mxu0 0.0
        %2754 = vmatpush1.msra.mxu0 0.0
        %2755 = vmatprep.subr.mxu0 0.0
        %2756 = vmatpush1.msra.mxu0 0.0
        %2757 = vmatprep.subr.mxu0 0.0
        %2758 = vmatpush1.msra.mxu0 0.0
        %2759 = vmatprep.subr.mxu0 0.0
        %2760 = vmatpush1.msra.mxu0 0.0
        %2761 = vmatprep.subr.mxu0 0.0
        %2762 = vmatpush1.msra.mxu0 0.0
        %2763 = vmatprep.subr.mxu0 0.0
        %2764 = vmatpush1.msra.mxu0 0.0
        %2765 = vmatprep.subr.mxu0 0.0
        %2766 = vmatpush1.msra.mxu0 0.0
        %2767 = vmatprep.subr.mxu0 0.0
        %2768 = vmatpush1.msra.mxu0 0.0
        %2769 = vmatprep.subr.mxu0 0.0
        %2770 = vmatpush1.msra.mxu0 0.0
        %2771 = vmatprep.subr.mxu0 0.0
        %2772 = vmatpush1.msra.mxu0 0.0
        %2773 = vmatprep.subr.mxu0 0.0
        %2774 = vmatpush1.msra.mxu0 0.0
        %2775 = vmatprep.subr.mxu0 0.0
        %2776 = vmatpush1.msra.mxu0 0.0
        %2777 = vmatprep.subr.mxu0 0.0
        %2778 = vmatpush1.msra.mxu0 0.0
        %2779 = vmatprep.subr.mxu0 0.0
        %2780 = vmatpush1.msra.mxu0 0.0
        %2781 = vmatprep.subr.mxu0 0.0
        %2782 = vmatpush1.msra.mxu0 0.0
        %2783 = vmatprep.subr.mxu0 0.0
        %2784 = vmatpush1.msra.mxu0 0.0
        %2785 = vmatprep.mubr.f32.mxu0 0.0
        %2786 = vmatmul.mubr.f32.gmra.mrb[0].mxu0 %v2716
        %v2787 = vpop.f32.mrb[0].mxu0
        %v2788 = vadd.f32 0.0, %v2787
        %v2789 = vpop.f32.mrb[0].mxu0
        %2790 = vdwg.mxu0
        %v2791 = vadd.f32 %v2705, %v2788
        %v2792 = vld [vmem:[#allocation3 + $0x4] sm:$0x1]
        %s2793 = scalar_lea.vmem %s9, 224
        %v2794 = vld [vmem:[%s2793] sm:$0xff]
        %v2795 = vld [vmem:[%s2793 + $0x8] sm:$0xff]
        %v2796 = vld [vmem:[%s2793 + $0x10] sm:$0xff]
        %v2797 = vld [vmem:[%s2793 + $0x18] sm:$0xff]
        %v2798 = vld [vmem:[%s2793 + $0x20] sm:$0xff]
        %v2799 = vld [vmem:[%s2793 + $0x28] sm:$0xff]
        %v2800 = vld [vmem:[%s2793 + $0x30] sm:$0x3]
        %v2802 = vsel %vm2467, %v2792, 0
        %v2805 = vsel %vm2297, %v2800, 0
        %2807 = vmatprep.subr.mxu0 0.0
        %2808 = vmatpush1.msra.mxu0 %v2794
        %2809 = vmatprep.subr.mxu0 0.0
        %2810 = vmatpush1.msra.mxu0 %v2795
        %2811 = vmatprep.subr.mxu0 0.0
        %2812 = vmatpush1.msra.mxu0 %v2796
        %2813 = vmatprep.subr.mxu0 0.0
        %2814 = vmatpush1.msra.mxu0 %v2797
        %2815 = vmatprep.subr.mxu0 0.0
        %2816 = vmatpush1.msra.mxu0 %v2798
        %2817 = vmatprep.subr.mxu0 0.0
        %2818 = vmatpush1.msra.mxu0 %v2799
        %2819 = vmatprep.subr.mxu0 0.0
        %2820 = vmatpush1.msra.mxu0 %v2805
        %2821 = vmatprep.subr.mxu0 0.0
        %2822 = vmatpush1.msra.mxu0 0.0
        %2823 = vmatprep.subr.mxu0 0.0
        %2824 = vmatpush1.msra.mxu0 0.0
        %2825 = vmatprep.subr.mxu0 0.0
        %2826 = vmatpush1.msra.mxu0 0.0
        %2827 = vmatprep.subr.mxu0 0.0
        %2828 = vmatpush1.msra.mxu0 0.0
        %2829 = vmatprep.subr.mxu0 0.0
        %2830 = vmatpush1.msra.mxu0 0.0
        %2831 = vmatprep.subr.mxu0 0.0
        %2832 = vmatpush1.msra.mxu0 0.0
        %2833 = vmatprep.subr.mxu0 0.0
        %2834 = vmatpush1.msra.mxu0 0.0
        %2835 = vmatprep.subr.mxu0 0.0
        %2836 = vmatpush1.msra.mxu0 0.0
        %2837 = vmatprep.subr.mxu0 0.0
        %2838 = vmatpush1.msra.mxu0 0.0
        %2839 = vmatprep.subr.mxu0 0.0
        %2840 = vmatpush1.msra.mxu0 0.0
        %2841 = vmatprep.subr.mxu0 0.0
        %2842 = vmatpush1.msra.mxu0 0.0
        %2843 = vmatprep.subr.mxu0 0.0
        %2844 = vmatpush1.msra.mxu0 0.0
        %2845 = vmatprep.subr.mxu0 0.0
        %2846 = vmatpush1.msra.mxu0 0.0
        %2847 = vmatprep.subr.mxu0 0.0
        %2848 = vmatpush1.msra.mxu0 0.0
        %2849 = vmatprep.subr.mxu0 0.0
        %2850 = vmatpush1.msra.mxu0 0.0
        %2851 = vmatprep.subr.mxu0 0.0
        %2852 = vmatpush1.msra.mxu0 0.0
        %2853 = vmatprep.subr.mxu0 0.0
        %2854 = vmatpush1.msra.mxu0 0.0
        %2855 = vmatprep.subr.mxu0 0.0
        %2856 = vmatpush1.msra.mxu0 0.0
        %2857 = vmatprep.subr.mxu0 0.0
        %2858 = vmatpush1.msra.mxu0 0.0
        %2859 = vmatprep.subr.mxu0 0.0
        %2860 = vmatpush1.msra.mxu0 0.0
        %2861 = vmatprep.subr.mxu0 0.0
        %2862 = vmatpush1.msra.mxu0 0.0
        %2863 = vmatprep.subr.mxu0 0.0
        %2864 = vmatpush1.msra.mxu0 0.0
        %2865 = vmatprep.subr.mxu0 0.0
        %2866 = vmatpush1.msra.mxu0 0.0
        %2867 = vmatprep.subr.mxu0 0.0
        %2868 = vmatpush1.msra.mxu0 0.0
        %2869 = vmatprep.subr.mxu0 0.0
        %2870 = vmatpush1.msra.mxu0 0.0
        %2871 = vmatprep.mubr.f32.mxu0 0.0
        %2872 = vmatmul.mubr.f32.gmra.mrb[0].mxu0 %v2802
        %v2873 = vpop.f32.mrb[0].mxu0
        %v2874 = vadd.f32 0.0, %v2873
        %v2875 = vpop.f32.mrb[0].mxu0
        %2876 = vdwg.mxu0
        %v2877 = vadd.f32 %v2791, %v2874
        %v2878 = vld [vmem:[%s10] sm:$0x1]
        %v2879 = vadd.f32 %v2877, %v2878
        %v2880 = vmax.f32 %v2879, 0.0
        %v2881 = vld [vmem:[%s11] sm:$0xff]
        %v2882 = vld [vmem:[%s11 + $0x8] sm:$0xff]
        %v2883 = vld [vmem:[%s11 + $0x10] sm:$0xff]
        %v2884 = vld [vmem:[%s11 + $0x18] sm:$0xff]
        %v2885 = vld [vmem:[%s11 + $0x20] sm:$0xff]
        %v2886 = vld [vmem:[%s11 + $0x28] sm:$0xff]
        %v2887 = vld [vmem:[%s11 + $0x30] sm:$0xff]
        %v2888 = vld [vmem:[%s11 + $0x38] sm:$0xff]
        %v2889 = vld [vmem:[%s11 + $0x40] sm:$0xff]
        %v2890 = vld [vmem:[%s11 + $0x48] sm:$0xff]
        %v2891 = vld [vmem:[%s11 + $0x50] sm:$0xff]
        %v2892 = vld [vmem:[%s11 + $0x58] sm:$0xff]
        %v2893 = vld [vmem:[%s11 + $0x60] sm:$0xff]
        %v2894 = vld [vmem:[%s11 + $0x68] sm:$0xff]
        %v2895 = vld [vmem:[%s11 + $0x70] sm:$0xff]
        %v2896 = vld [vmem:[%s11 + $0x78] sm:$0xff]
        %v2897 = vld [vmem:[%s12] sm:$0x1]
        %2898 = vmatprep.subr.mxu0 0.0
        %2899 = vmatpush1.msra.mxu0 %v2881
        %2900 = vmatprep.subr.mxu0 0.0
        %2901 = vmatpush1.msra.mxu0 %v2882
        %2902 = vmatprep.subr.mxu0 0.0
        %2903 = vmatpush1.msra.mxu0 %v2883
        %2904 = vmatprep.subr.mxu0 0.0
        %2905 = vmatpush1.msra.mxu0 %v2884
        %2906 = vmatprep.subr.mxu0 0.0
        %2907 = vmatpush1.msra.mxu0 %v2885
        %2908 = vmatprep.subr.mxu0 0.0
        %2909 = vmatpush1.msra.mxu0 %v2886
        %2910 = vmatprep.subr.mxu0 0.0
        %2911 = vmatpush1.msra.mxu0 %v2887
        %2912 = vmatprep.subr.mxu0 0.0
        %2913 = vmatpush1.msra.mxu0 %v2888
        %2914 = vmatprep.subr.mxu0 0.0
        %2915 = vmatpush1.msra.mxu0 %v2889
        %2916 = vmatprep.subr.mxu0 0.0
        %2917 = vmatpush1.msra.mxu0 %v2890
        %2918 = vmatprep.subr.mxu0 0.0
        %2919 = vmatpush1.msra.mxu0 %v2891
        %2920 = vmatprep.subr.mxu0 0.0
        %2921 = vmatpush1.msra.mxu0 %v2892
        %2922 = vmatprep.subr.mxu0 0.0
        %2923 = vmatpush1.msra.mxu0 %v2893
        %2924 = vmatprep.subr.mxu0 0.0
        %2925 = vmatpush1.msra.mxu0 %v2894
        %2926 = vmatprep.subr.mxu0 0.0
        %2927 = vmatpush1.msra.mxu0 %v2895
        %2928 = vmatprep.subr.mxu0 0.0
        %2929 = vmatpush1.msra.mxu0 %v2896
        %2930 = vmatprep.subr.mxu0 0.0
        %2931 = vmatpush1.msra.mxu0 0.0
        %2932 = vmatprep.subr.mxu0 0.0
        %2933 = vmatpush1.msra.mxu0 0.0
        %2934 = vmatprep.subr.mxu0 0.0
        %2935 = vmatpush1.msra.mxu0 0.0
        %2936 = vmatprep.subr.mxu0 0.0
        %2937 = vmatpush1.msra.mxu0 0.0
        %2938 = vmatprep.subr.mxu0 0.0
        %2939 = vmatpush1.msra.mxu0 0.0
        %2940 = vmatprep.subr.mxu0 0.0
        %2941 = vmatpush1.msra.mxu0 0.0
        %2942 = vmatprep.subr.mxu0 0.0
        %2943 = vmatpush1.msra.mxu0 0.0
        %2944 = vmatprep.subr.mxu0 0.0
        %2945 = vmatpush1.msra.mxu0 0.0
        %2946 = vmatprep.subr.mxu0 0.0
        %2947 = vmatpush1.msra.mxu0 0.0
        %2948 = vmatprep.subr.mxu0 0.0
        %2949 = vmatpush1.msra.mxu0 0.0
        %2950 = vmatprep.subr.mxu0 0.0
        %2951 = vmatpush1.msra.mxu0 0.0
        %2952 = vmatprep.subr.mxu0 0.0
        %2953 = vmatpush1.msra.mxu0 0.0
        %2954 = vmatprep.subr.mxu0 0.0
        %2955 = vmatpush1.msra.mxu0 0.0
        %2956 = vmatprep.subr.mxu0 0.0
        %2957 = vmatpush1.msra.mxu0 0.0
        %2958 = vmatprep.subr.mxu0 0.0
        %2959 = vmatpush1.msra.mxu0 0.0
        %2960 = vmatprep.subr.mxu0 0.0
        %2961 = vmatpush1.msra.mxu0 0.0
        %2962 = vmatprep.mubr.f32.mxu0 0.0
        %2963 = vmatmul.mubr.f32.gmra.mrb[0].mxu0 %v2880
        %v2964 = vpop.f32.mrb[0].mxu0
        %v2965 = vadd.f32 %v2897, %v2964
        %v2966 = vpop.f32.mrb[0].mxu0
        %2967 = vdwg.mxu0
        %v2968 = vmax.f32 %v2965, 0.0
        %v2969 = vld [vmem:[%s13] sm:$0xff]
        %v2970 = vld [vmem:[%s13 + $0x8] sm:$0xff]
        %v2971 = vld [vmem:[%s13 + $0x10] sm:$0xff]
        %v2972 = vld [vmem:[%s13 + $0x18] sm:$0xff]
        %v2973 = vld [vmem:[%s13 + $0x20] sm:$0xff]
        %v2974 = vld [vmem:[%s13 + $0x28] sm:$0xff]
        %v2975 = vld [vmem:[%s13 + $0x30] sm:$0xff]
        %v2976 = vld [vmem:[%s13 + $0x38] sm:$0xff]
        %v2977 = vld [vmem:[%s13 + $0x40] sm:$0xff]
        %v2978 = vld [vmem:[%s13 + $0x48] sm:$0xff]
        %v2979 = vld [vmem:[%s13 + $0x50] sm:$0xff]
        %v2980 = vld [vmem:[%s13 + $0x58] sm:$0xff]
        %v2981 = vld [vmem:[%s13 + $0x60] sm:$0xff]
        %v2982 = vld [vmem:[%s13 + $0x68] sm:$0xff]
        %v2983 = vld [vmem:[%s13 + $0x70] sm:$0xff]
        %v2984 = vld [vmem:[%s13 + $0x78] sm:$0xff]
        %v2985 = vld [vmem:[%s14] sm:$0x1]
        %2986 = vmatprep.subr.mxu0 0.0
        %2987 = vmatpush1.msra.mxu0 %v2969
        %2988 = vmatprep.subr.mxu0 0.0
        %2989 = vmatpush1.msra.mxu0 %v2970
        %2990 = vmatprep.subr.mxu0 0.0
        %2991 = vmatpush1.msra.mxu0 %v2971
        %2992 = vmatprep.subr.mxu0 0.0
        %2993 = vmatpush1.msra.mxu0 %v2972
        %2994 = vmatprep.subr.mxu0 0.0
        %2995 = vmatpush1.msra.mxu0 %v2973
        %2996 = vmatprep.subr.mxu0 0.0
        %2997 = vmatpush1.msra.mxu0 %v2974
        %2998 = vmatprep.subr.mxu0 0.0
        %2999 = vmatpush1.msra.mxu0 %v2975
        %3000 = vmatprep.subr.mxu0 0.0
        %3001 = vmatpush1.msra.mxu0 %v2976
        %3002 = vmatprep.subr.mxu0 0.0
        %3003 = vmatpush1.msra.mxu0 %v2977
        %3004 = vmatprep.subr.mxu0 0.0
        %3005 = vmatpush1.msra.mxu0 %v2978
        %3006 = vmatprep.subr.mxu0 0.0
        %3007 = vmatpush1.msra.mxu0 %v2979
        %3008 = vmatprep.subr.mxu0 0.0
        %3009 = vmatpush1.msra.mxu0 %v2980
        %3010 = vmatprep.subr.mxu0 0.0
        %3011 = vmatpush1.msra.mxu0 %v2981
        %3012 = vmatprep.subr.mxu0 0.0
        %3013 = vmatpush1.msra.mxu0 %v2982
        %3014 = vmatprep.subr.mxu0 0.0
        %3015 = vmatpush1.msra.mxu0 %v2983
        %3016 = vmatprep.subr.mxu0 0.0
        %3017 = vmatpush1.msra.mxu0 %v2984
        %3018 = vmatprep.subr.mxu0 0.0
        %3019 = vmatpush1.msra.mxu0 0.0
        %3020 = vmatprep.subr.mxu0 0.0
        %3021 = vmatpush1.msra.mxu0 0.0
        %3022 = vmatprep.subr.mxu0 0.0
        %3023 = vmatpush1.msra.mxu0 0.0
        %3024 = vmatprep.subr.mxu0 0.0
        %3025 = vmatpush1.msra.mxu0 0.0
        %3026 = vmatprep.subr.mxu0 0.0
        %3027 = vmatpush1.msra.mxu0 0.0
        %3028 = vmatprep.subr.mxu0 0.0
        %3029 = vmatpush1.msra.mxu0 0.0
        %3030 = vmatprep.subr.mxu0 0.0
        %3031 = vmatpush1.msra.mxu0 0.0
        %3032 = vmatprep.subr.mxu0 0.0
        %3033 = vmatpush1.msra.mxu0 0.0
        %3034 = vmatprep.subr.mxu0 0.0
        %3035 = vmatpush1.msra.mxu0 0.0
        %3036 = vmatprep.subr.mxu0 0.0
        %3037 = vmatpush1.msra.mxu0 0.0
        %3038 = vmatprep.subr.mxu0 0.0
        %3039 = vmatpush1.msra.mxu0 0.0
        %3040 = vmatprep.subr.mxu0 0.0
        %3041 = vmatpush1.msra.mxu0 0.0
        %3042 = vmatprep.subr.mxu0 0.0
        %3043 = vmatpush1.msra.mxu0 0.0
        %3044 = vmatprep.subr.mxu0 0.0
        %3045 = vmatpush1.msra.mxu0 0.0
        %3046 = vmatprep.subr.mxu0 0.0
        %3047 = vmatpush1.msra.mxu0 0.0
        %3048 = vmatprep.subr.mxu0 0.0
        %3049 = vmatpush1.msra.mxu0 0.0
        %3050 = vmatprep.mubr.f32.mxu0 0.0
        %3051 = vmatmul.mubr.f32.gmra.mrb[0].mxu0 %v2968
        %v3052 = vpop.f32.mrb[0].mxu0
        %v3053 = vadd.f32 %v2985, %v3052
        %v3054 = vpop.f32.mrb[0].mxu0
        %3055 = vdwg.mxu0
        %vm3056 = vcmask 1040384
        %v3057 = vsel %vm3056, %v3053, -inf
        %3058 = vmax.xlane.f32.xlu0 %v3057
        %v3059 = vpop.xlane.xlu0 %3058
        %v3060 = vsub.f32 %v3053, %v3059
        %v3061 = vmul.f32 %v3060, 1.442695
        %v3062 = vpow.pop %v3061
        %v3063 = vsel %vm3056, %v3062, 0.0
        %3064 = vadd.xlane.f32.xlu0 %v3063
        %v3065 = vpop.xlane.xlu0 %3064
        %v3066 = vlog2.pop %v3065
        %v3067 = vmul.f32 %v3066, 0.6931472
        %v3068 = vsub.f32 %v3060, %v3067
        %3069 = vst [vmem:[%s486] sm:$0x1] %v3068
        %s3070 = sand.u32 %s357, 1
        %s3071 = scalar_lea.sflag [#allocation5], %s3070
        %s3072 = sand.u32 %s357, 1
        %s3073 = scalar_lea.vmem [#allocation4], %s3072
        // Predicated region
        $region81: #{cifarnet_forward.1} parent=79 // pred_check
          %p3074 = pneg %p367
        $region82: #{cifarnet_forward.1} parent=79 // pred_check_branch
          %3076 = sbr.rel (%p3074) target = $region84
        $region83: #{cifarnet_forward.1} parent=79 // pred_region
          %s3078 = ssub.s32 16, 16
          %3079 = vsyncadd %s3071, %s3078
          %s3080 = smul.addr %s29, 16
          %s3081 = scalar_lea.hbm %s15, %s3080
          %s3083 = sshll.u32 %s3073, 4
          %s3084 = int_to_ptr.vmem [resolvable:$true] %s3083
          %3086 = dma.vmem_to_hbm [thread:$0]  %s3084, 16, %s3081, %s3071
        $region84: #{cifarnet_forward.1} parent=79 // pred_fallthru
          _
      $region80: #{cifarnet_forward.1} parent=5 // pred_fallthru
        _
      %p3087 = scmp.le.s32.totalorder 2, %s24
      // Predicated region
      $region85: #{cifarnet_forward.1} parent=5 // pred_check
        %p3088 = pneg %p3087
      $region86: #{cifarnet_forward.1} parent=5 // pred_check_branch
        %3090 = sbr.rel (%p3088) target = $region88
      $region87: #{cifarnet_forward.1} parent=5 // pred_region
        %s3091 = ssub.s32 %s24, 2
        // Predicated region
        $region89: #{cifarnet_forward.1} parent=87 // pred_check
          %p3092 = pneg %p373
        $region90: #{cifarnet_forward.1} parent=87 // pred_check_branch
          %3094 = sbr.rel (%p3092) target = $region92
        $region91: #{cifarnet_forward.1} parent=87 // pred_region
          %s3095 = sand.u32 %s358, 1
          %s3096 = scalar_lea.sflag [#allocation5], %s3095
          %s3097 = sand.u32 %s358, 1
          %s3098 = scalar_lea.vmem [#allocation4], %s3097
          %3099 = dma.done %s3096, 16
        $region92: #{cifarnet_forward.1} parent=87 // pred_fallthru
          _
      $region88: #{cifarnet_forward.1} parent=5 // pred_fallthru
        _
    $region6: #{cifarnet_forward.1} parent=1 // loop_footer
      %s28 = sadd.s32 1, %s24
    $region7: #{cifarnet_forward.1} parent=1 // loop_footer_branch
      %23 = sbr.rel target = $region3
    $region8: #{cifarnet_forward.1} parent=1 // loop_exit
      _
    %3100 = vsyncpa [#allocation5], 1
    %s3101 = scalar_lea.sflag [#allocation5], 1
    %3102 = vsyncpa %s3101, 1

</llo_original>
